<compile_context>
chip_gen: v5e
topology: v5e:2x2
jax: 0.10.0
libtpu: 0.0.40
codegen_flags: <defaults>
</compile_context>

<pallas_src>
import math
from functools import partial

import jax
import jax.numpy as jnp
from jax.experimental import pallas as pl
from jax.experimental.pallas import tpu as pltpu


def _layer_norm(x, g, b, eps=1e-5):
    mu = jnp.mean(x, axis=-1, keepdims=True)
    var = jnp.mean((x - mu) ** 2, axis=-1, keepdims=True)
    return (x - mu) * jax.lax.rsqrt(var + eps) * g + b


def _round_up(n, m):
    return ((n + m - 1) // m) * m


# ----------------------------- Pallas kernel --------------------------------

def _encoder_kernel(x_ref,
                    wqkv_ref, bqkv_ref, wo_ref, bo_ref,
                    ln1g_ref, ln1b_ref,
                    w1_ref, b1_ref, w2_ref, b2_ref,
                    ln2g_ref, ln2b_ref,
                    rows_mod_ref, seg_dh_ref, seg_hd_ref,
                    m1w_ref, m1b_ref, m2w_ref, m2b_ref, m3w_ref, m3b_ref,
                    out_ref,
                    h_ref, kv_ref,
                    *, batch, num_heads, cls_rows, stage_pad):
    layer = pl.program_id(0)
    n_layers = pl.num_programs(0)
    T, D = h_ref.shape                       # T is already padded to 8 rows
    hd = D // num_heads
    scale = 1.0 / math.sqrt(hd)
    bf16 = jnp.bfloat16

    @pl.when(layer == 0)
    def _init():
        h_ref[...] = x_ref[...]
        kv_ref[...] = jnp.zeros_like(kv_ref)     # zero the shift-padding rows

    h = h_ref[...]                               # (T, D) f32

    # ---- fused QKV projection (bf16 operands, f32 accumulate) ----
    qkv = jnp.dot(h.astype(bf16), wqkv_ref[0],
                  preferred_element_type=jnp.float32) + bqkv_ref[0]   # (T, 3D)
    q = qkv[:, :D] * scale                       # fold 1/sqrt(hd) into q

    # ---- block-diagonal attention over groups of `batch` consecutive rows --
    # Stage K and V with `stage_pad` rows of headroom on both sides so that a
    # row shifted by a static offset is a plain VMEM load (no (T,T) mask, no
    # gathers).  For offset o, neighbor_o(x)[t] = x[block_start(t)+(t%B+o)%B];
    # enumerating o = 0..B-1 visits every row of t's block exactly once, and
    # softmax + weighted sum are invariant to that per-row rotation.
    # ONE sublane-aligned (T, 2D) store (stage_pad is a multiple of 8).
    kv_ref[pl.ds(stage_pad, T), :] = qkv[:, D:3 * D]

    seg_dh = seg_dh_ref[...]                     # (D, H) bf16: lane -> head
    seg_hd = seg_hd_ref[...]                     # (H, D) bf16

    def k_at(delta):                             # delta static in (-batch, batch)
        return kv_ref[pl.ds(stage_pad + delta, T), 0:D]

    def v_at(delta):
        return kv_ref[pl.ds(stage_pad + delta, T), D:2 * D]

    def block_sel(o):
        # precomputed (t % batch) constant; only one compare per offset here
        return rows_mod_ref[...] < (batch - o)

    # ---- pass 1: per-head scores for each offset (only narrow (T,H) kept) --
    scores = []
    for o in range(batch):                       # static unroll, B offsets
        if o == 0:
            k_o = k_at(0)
        else:
            sel = block_sel(o)
            k_o = jnp.where(sel, k_at(o), k_at(o - batch))
        # per-head scores for ALL heads at once: (T, D) x (D, H) segment sum
        scores.append(jnp.dot((q * k_o).astype(bf16), seg_dh,
                              preferred_element_type=jnp.float32))    # (T, H)

    m = scores[0]
    for s in scores[1:]:
        m = jnp.maximum(m, s)

    # ---- pass 2: unnormalized V accumulation, V re-read from staged VMEM ---
    den = jnp.zeros_like(m)
    attn = jnp.zeros((T, D), jnp.float32)
    for o in range(batch):
        e = jnp.exp(scores[o] - m)               # (T, H)
        den = den + e
        if o == 0:
            v_o = v_at(0)
        else:
            sel = block_sel(o)
            v_o = jnp.where(sel, v_at(o), v_at(o - batch))
        # broadcast per-head exp weights to their hd lanes via (T,H) x (H,D)
        p_full = jnp.dot(e.astype(bf16), seg_hd,
                         preferred_element_type=jnp.float32)          # (T, D)
        attn = attn + p_full * v_o

    # single normalization at the end (EUP reciprocal, off the critical path)
    recip = pl.reciprocal(den, approx=True)                           # (T, H)
    attn = attn * jnp.dot(recip.astype(bf16), seg_hd,
                          preferred_element_type=jnp.float32)

    # ---- single output projection + residual + LayerNorm ----
    attn = jnp.dot(attn.astype(bf16), wo_ref[0],
                   preferred_element_type=jnp.float32) + bo_ref[0]
    h = _layer_norm(h + attn, ln1g_ref[0], ln1b_ref[0])

    # ---- feed-forward + residual + LayerNorm ----
    ff = jnp.dot(h.astype(bf16), w1_ref[0],
                 preferred_element_type=jnp.float32) + b1_ref[0]
    ff = jnp.maximum(ff, 0.0)
    ff = jnp.dot(ff.astype(bf16), w2_ref[0],
                 preferred_element_type=jnp.float32) + b2_ref[0]
    h = _layer_norm(h + ff, ln2g_ref[0], ln2b_ref[0])
    h_ref[...] = h

    # ---- class-token MLP head (lane-dense, padded to 128 columns) ----
    @pl.when(layer == n_layers - 1)
    def _head():
        cls = h[0:cls_rows, :].astype(bf16)      # rows t = 0..B-1 are (s=0, b)
        z = jnp.dot(cls, m1w_ref[...],
                    preferred_element_type=jnp.float32) + m1b_ref[...]
        z = jnp.maximum(z, 0.0).astype(bf16)
        z = jnp.dot(z, m2w_ref[...],
                    preferred_element_type=jnp.float32) + m2b_ref[...]
        z = jnp.maximum(z, 0.0).astype(bf16)
        out_ref[...] = jnp.dot(z, m3w_ref[...],
                               preferred_element_type=jnp.float32) + m3b_ref[...]


def _const_spec(a):
    zeros = (0,) * a.ndim
    return pl.BlockSpec(a.shape, lambda l, z=zeros: z)


def _layer_spec(a):
    blk = (1,) + a.shape[1:]
    tail = (0,) * (a.ndim - 1)
    return pl.BlockSpec(blk, lambda l, t=tail: (l,) + t)


def _encoder_head_pallas(x2d, per_layer, constants, *, batch, num_heads,
                         num_layers, cls_rows, out_pad):
    T_pad, D = x2d.shape
    stage_pad = _round_up(batch, 8)              # sublane-aligned staging base
    T_ext = stage_pad + T_pad + stage_pad        # headroom on both sides

    in_specs = ([_const_spec(x2d)]
                + [_layer_spec(a) for a in per_layer]
                + [_const_spec(a) for a in constants])

    kernel = partial(_encoder_kernel, batch=batch, num_heads=num_heads,
                     cls_rows=cls_rows, stage_pad=stage_pad)
    # NOTE: whole working set (bf16 per-layer weights, double-buffered, plus
    # the (T_pad, D) activations and (T_ext, 2D) staging) is far below the
    # 32 MiB scoped-VMEM default on all generations; vmem_limit untouched.
    return pl.pallas_call(
        kernel,
        out_shape=jax.ShapeDtypeStruct((cls_rows, out_pad), jnp.float32),
        grid_spec=pltpu.PrefetchScalarGridSpec(
            num_scalar_prefetch=0,
            grid=(num_layers,),
            in_specs=in_specs,
            out_specs=pl.BlockSpec((cls_rows, out_pad), lambda l: (0, 0)),
            scratch_shapes=[
                pltpu.VMEM((T_pad, D), jnp.float32),        # hidden state
                pltpu.VMEM((T_ext, 2 * D), jnp.float32),    # staged K/V
            ]),
        compiler_params=pltpu.CompilerParams(
            dimension_semantics=("arbitrary",)),
    )(x2d, *per_layer, *constants)


# ----------------------------- parameters -----------------------------------

def init_params(key, *, latent_dim, latent_length, hidden_dim, num_heads,
                num_layers, ff_dim, action_length, patch_size):
    D = hidden_dim
    patch_dim = patch_size ** 2
    num_patches = latent_length * latent_dim ** 2 // patch_dim
    S = num_patches + 1
    ks = iter(jax.random.split(key, 64))

    def w(shape, scale=0.05):
        return (scale * jax.random.normal(next(ks), shape)).astype(jnp.float32)

    params = {
        "wp": w((D, patch_dim)),                 # linear_projection (out, in)
        "bp": w((D,), 0.02),
        "cls": jax.random.normal(next(ks), (1, 1, D), jnp.float32),
        "pos": jax.random.normal(next(ks), (1, S, D), jnp.float32),
        "layers": [],
        "mlp": {
            "w1": w((512, D)), "b1": w((512,), 0.02),
            "w2": w((32, 512)), "b2": w((32,), 0.02),
            "w3": w((7 * action_length, 32)), "b3": w((7 * action_length,), 0.02),
        },
    }
    for _ in range(num_layers):
        params["layers"].append({
            "wqkv": w((3 * D, D)), "bqkv": w((3 * D,), 0.02),
            "wo": w((D, D)), "bo": w((D,), 0.02),
            "ln1_g": jnp.ones((D,), jnp.float32),
            "ln1_b": jnp.zeros((D,), jnp.float32),
            "w1": w((ff_dim, D)), "b1": w((ff_dim,), 0.02),
            "w2": w((D, ff_dim)), "b2": w((D,), 0.02),
            "ln2_g": jnp.ones((D,), jnp.float32),
            "ln2_b": jnp.zeros((D,), jnp.float32),
        })
    return params


def build_kernel_params(params, num_heads):
    """One-time host-side repacking (review item 10): stack/transpose weights
    to (in, out), cast MXU weights to bf16, pad the MLP head to lane-dense
    (multiple-of-128) widths.  Called ONCE, outside the forward path."""
    bf16 = jnp.bfloat16
    Ls = params["layers"]
    stk = lambda name: jnp.stack([l[name] for l in Ls], axis=0)

    wqkv = jnp.transpose(stk("wqkv"), (0, 2, 1)).astype(bf16)   # (L, D, 3D)
    bqkv = stk("bqkv")[:, None, :]
    wo = jnp.transpose(stk("wo"), (0, 2, 1)).astype(bf16)       # (L, D, D)
    bo = stk("bo")[:, None, :]
    ln1g, ln1b = stk("ln1_g")[:, None, :], stk("ln1_b")[:, None, :]
    w1 = jnp.transpose(stk("w1"), (0, 2, 1)).astype(bf16)       # (L, D, F)
    b1 = stk("b1")[:, None, :]
    w2 = jnp.transpose(stk("w2"), (0, 2, 1)).astype(bf16)       # (L, F, D)
    b2 = stk("b2")[:, None, :]
    ln2g, ln2b = stk("ln2_g")[:, None, :], stk("ln2_b")[:, None, :]
    per_layer = (wqkv, bqkv, wo, bo, ln1g, ln1b, w1, b1, w2, b2, ln2g, ln2b)

    D = wqkv.shape[1]
    H = num_heads
    hd = D // H
    seg_dh = (jnp.arange(D)[:, None] // hd
              == jnp.arange(H)[None, :]).astype(bf16)           # (D, H)
    seg_hd = jnp.transpose(seg_dh)                              # (H, D)

    m = params["mlp"]
    w1m, b1m = m["w1"].T, m["b1"][None, :]        # (D, 512), (1, 512)
    w2m, b2m = m["w2"].T, m["b2"][None, :]        # (512, 32), (1, 32)
    w3m, b3m = m["w3"].T, m["b3"][None, :]        # (32, A7), (1, A7)
    p1 = _round_up(w1m.shape[1], 128)
    p2 = _round_up(w2m.shape[1], 128)
    p3 = _round_up(w3m.shape[1], 128)
    w1m = jnp.pad(w1m, ((0, 0), (0, p1 - w1m.shape[1])))
    b1m = jnp.pad(b1m, ((0, 0), (0, p1 - b1m.shape[1])))
    w2m = jnp.pad(w2m, ((0, p1 - w2m.shape[0]), (0, p2 - w2m.shape[1])))
    b2m = jnp.pad(b2m, ((0, 0), (0, p2 - b2m.shape[1])))
    w3m = jnp.pad(w3m, ((0, p2 - w3m.shape[0]), (0, p3 - w3m.shape[1])))
    b3m = jnp.pad(b3m, ((0, 0), (0, p3 - b3m.shape[1])))

    constants = (seg_dh, seg_hd,
                 w1m.astype(bf16), b1m, w2m.astype(bf16), b2m,
                 w3m.astype(bf16), b3m)
    # Force materialization once so the forward path never redoes this work.
    per_layer = jax.tree_util.tree_map(jax.block_until_ready,
                                       jax.device_put(per_layer))
    constants = jax.tree_util.tree_map(jax.block_until_ready,
                                       jax.device_put(constants))
    return per_layer, constants, p3


# ----------------------------- forward passes --------------------------------

def _extract_patches(x, p):
    # matches x.unfold(2,p,p).unfold(3,p,p).contiguous().view(B, -1, p*p)
    B, C, H, W = x.shape
    x = x.reshape(B, C, H // p, p, W // p, p)
    x = jnp.transpose(x, (0, 1, 2, 4, 3, 5))
    return x.reshape(B, -1, p * p)


def action_transformer_forward(x, params, packed, *, num_heads, patch_size=1):
    per_layer, constants, out_pad = packed
    B = x.shape[0]
    D = params["wp"].shape[0]
    assert D % num_heads == 0
    patches = _extract_patches(x, patch_size)                    # (B, P, p^2)
    emb = patches @ params["wp"].T + params["bp"]                # patch proj
    cls = jnp.broadcast_to(params["cls"], (B, 1, D))
    tok = jnp.concatenate([cls, emb], axis=1) + params["pos"]    # (B, S, D)
    S = tok.shape[1]
    x2d = jnp.transpose(tok, (1, 0, 2)).reshape(S * B, D)        # t = s*B + b
    T = S * B
    T_pad = _round_up(T, 8)                                      # dense sublanes
    x2d = jnp.pad(x2d, ((0, T_pad - T), (0, 0))).astype(jnp.float32)

    # precomputed t % batch constant (review item 6): no iota/mod in-kernel
    rows_mod = jnp.broadcast_to(
        (jnp.arange(T_pad, dtype=jnp.int32) % B)[:, None], (T_pad, D))

    L = per_layer[0].shape[0]
    cls_rows = max(8, _round_up(B, 8))
    assert cls_rows <= T_pad
    out_dim = params["mlp"]["w3"].shape[0]
    out = _encoder_head_pallas(x2d, per_layer, (rows_mod,) + constants,
                               batch=B, num_heads=num_heads, num_layers=L,
                               cls_rows=cls_rows, out_pad=out_pad)
    return out[:B, :out_dim]


def reference_forward(x, params, *, num_heads, patch_size=1):
    # pure-JAX reference of the exact PyTorch semantics (batch_first=False:
    # attention mixes across dim 0 of the (B, S, D) tensor).
    B = x.shape[0]
    D = params["wp"].shape[0]
    patches = _extract_patches(x, patch_size)
    emb = patches @ params["wp"].T + params["bp"]
    cls = jnp.broadcast_to(params["cls"], (B, 1, D))
    h = jnp.concatenate([cls, emb], axis=1) + params["pos"]      # (B, S, D)
    hd = D // num_heads
    scale = 1.0 / math.sqrt(hd)
    for lyr in params["layers"]:
        qkv = h @ lyr["wqkv"].T + lyr["bqkv"]
        q, k, v = jnp.split(qkv, 3, axis=-1)
        q = q.reshape(B, -1, num_heads, hd)
        k = k.reshape(B, -1, num_heads, hd)
        v = v.reshape(B, -1, num_heads, hd)
        sc = jnp.einsum("ashd,bshd->shab", q, k) * scale
        p = jax.nn.softmax(sc, axis=-1)
        o = jnp.einsum("shab,bshd->ashd", p, v).reshape(B, -1, D)
        o = o @ lyr["wo"].T + lyr["bo"]
        h = _layer_norm(h + o, lyr["ln1_g"], lyr["ln1_b"])
        ff = jax.nn.relu(h @ lyr["w1"].T + lyr["b1"]) @ lyr["w2"].T + lyr["b2"]
        h = _layer_norm(h + ff, lyr["ln2_g"], lyr["ln2_b"])
    cls_out = h[:, 0, :]
    m = params["mlp"]
    z = jax.nn.relu(cls_out @ m["w1"].T + m["b1"])
    z = jax.nn.relu(z @ m["w2"].T + m["b2"])
    return z @ m["w3"].T + m["b3"]


# --------------------------------- main --------------------------------------

if __name__ == "__main__":
    key = jax.random.PRNGKey(0)

    # small, lane-friendly config consistent with the module
    latent_dim, latent_length = 4, 2          # -> 32 patches (+1 class token)
    hidden_dim, num_heads, num_layers = 128, 4, 2
    ff_dim, action_length, patch_size = 256, 1, 1
    batch = 2

    pkey, xkey = jax.random.split(key)
    params = init_params(pkey, latent_dim=latent_dim, latent_length=latent_length,
                         hidden_dim=hidden_dim, num_heads=num_heads,
                         num_layers=num_layers, ff_dim=ff_dim,
                         action_length=action_length, patch_size=patch_size)
    x = jax.random.normal(xkey, (batch, latent_length, latent_dim, latent_dim),
                          jnp.float32)

    # weight repacking hoisted out of the forward path (done exactly once)
    packed = build_kernel_params(params, num_heads)

    out = action_transformer_forward(x, params, packed, num_heads=num_heads,
                                     patch_size=patch_size)
    out = jax.block_until_ready(out)

    ref = reference_forward(x, params, num_heads=num_heads, patch_size=patch_size)
    assert out.shape == (batch, 7 * action_length)
    assert bool(jnp.all(jnp.isfinite(out)))
    # NOTE: bf16 MXU operands + approx reciprocal drift from the f32 reference;
    # 5e-2 tolerance documents that intentional precision trade-off.
    assert jnp.allclose(out, ref, atol=5e-2, rtol=5e-2)
    print("KERNEL_OK")
</pallas_src>

<mosaic_0001>
module attributes {stable_mosaic.version = 11 : i64} {
  func.func @_encoder_kernel(%arg0: i32, %arg1: memref<72x128xf32, #tpu.memory_space<vmem>>, %arg2: memref<1x128x384xbf16, #tpu.memory_space<vmem>>, %arg3: memref<1x1x384xf32, #tpu.memory_space<vmem>>, %arg4: memref<1x128x128xbf16, #tpu.memory_space<vmem>>, %arg5: memref<1x1x128xf32, #tpu.memory_space<vmem>>, %arg6: memref<1x1x128xf32, #tpu.memory_space<vmem>>, %arg7: memref<1x1x128xf32, #tpu.memory_space<vmem>>, %arg8: memref<1x128x256xbf16, #tpu.memory_space<vmem>>, %arg9: memref<1x1x256xf32, #tpu.memory_space<vmem>>, %arg10: memref<1x256x128xbf16, #tpu.memory_space<vmem>>, %arg11: memref<1x1x128xf32, #tpu.memory_space<vmem>>, %arg12: memref<1x1x128xf32, #tpu.memory_space<vmem>>, %arg13: memref<1x1x128xf32, #tpu.memory_space<vmem>>, %arg14: memref<72x128xi32, #tpu.memory_space<vmem>>, %arg15: memref<128x4xbf16, #tpu.memory_space<vmem>>, %arg16: memref<4x128xbf16, #tpu.memory_space<vmem>>, %arg17: memref<128x512xbf16, #tpu.memory_space<vmem>>, %arg18: memref<1x512xf32, #tpu.memory_space<vmem>>, %arg19: memref<512x128xbf16, #tpu.memory_space<vmem>>, %arg20: memref<1x128xf32, #tpu.memory_space<vmem>>, %arg21: memref<128x128xbf16, #tpu.memory_space<vmem>>, %arg22: memref<1x128xf32, #tpu.memory_space<vmem>>, %arg23: memref<8x128xf32, #tpu.memory_space<vmem>>, %arg24: memref<72x128xf32, #tpu.memory_space<vmem>>, %arg25: memref<88x256xf32, #tpu.memory_space<vmem>>) attributes {dimension_semantics = [#tpu.dimension_semantics<arbitrary>], iteration_bounds = array<i64: 2>, scalar_prefetch = 0 : i64, scratch_operands = 2 : i64, tpu.core_type = #tpu.core_type<tc>, window_params = [{pipeline_mode = #tpu.pipeline_mode<synchronous>, transform_indices = @transform_0, window_bounds = array<i64: 72, 128>}, {transform_indices = @transform_1, window_bounds = array<i64: 1, 128, 384>}, {transform_indices = @transform_2, window_bounds = array<i64: 1, 1, 384>}, {transform_indices = @transform_3, window_bounds = array<i64: 1, 128, 128>}, {transform_indices = @transform_4, window_bounds = array<i64: 1, 1, 128>}, {transform_indices = @transform_5, window_bounds = array<i64: 1, 1, 128>}, {transform_indices = @transform_6, window_bounds = array<i64: 1, 1, 128>}, {transform_indices = @transform_7, window_bounds = array<i64: 1, 128, 256>}, {transform_indices = @transform_8, window_bounds = array<i64: 1, 1, 256>}, {transform_indices = @transform_9, window_bounds = array<i64: 1, 256, 128>}, {transform_indices = @transform_10, window_bounds = array<i64: 1, 1, 128>}, {transform_indices = @transform_11, window_bounds = array<i64: 1, 1, 128>}, {transform_indices = @transform_12, window_bounds = array<i64: 1, 1, 128>}, {pipeline_mode = #tpu.pipeline_mode<synchronous>, transform_indices = @transform_13, window_bounds = array<i64: 72, 128>}, {pipeline_mode = #tpu.pipeline_mode<synchronous>, transform_indices = @transform_14, window_bounds = array<i64: 128, 4>}, {pipeline_mode = #tpu.pipeline_mode<synchronous>, transform_indices = @transform_15, window_bounds = array<i64: 4, 128>}, {pipeline_mode = #tpu.pipeline_mode<synchronous>, transform_indices = @transform_16, window_bounds = array<i64: 128, 512>}, {pipeline_mode = #tpu.pipeline_mode<synchronous>, transform_indices = @transform_17, window_bounds = array<i64: 1, 512>}, {pipeline_mode = #tpu.pipeline_mode<synchronous>, transform_indices = @transform_18, window_bounds = array<i64: 512, 128>}, {pipeline_mode = #tpu.pipeline_mode<synchronous>, transform_indices = @transform_19, window_bounds = array<i64: 1, 128>}, {pipeline_mode = #tpu.pipeline_mode<synchronous>, transform_indices = @transform_20, window_bounds = array<i64: 128, 128>}, {pipeline_mode = #tpu.pipeline_mode<synchronous>, transform_indices = @transform_21, window_bounds = array<i64: 1, 128>}, {pipeline_mode = #tpu.pipeline_mode<synchronous>, transform_indices = @transform_22, window_bounds = array<i64: 8, 128>}]} {
    %c0_i32 = arith.constant 0 : i32
    %0 = arith.cmpi eq, %arg0, %c0_i32 : i32
    %1 = arith.extui %0 : i1 to i32
    %c0_i32_0 = arith.constant 0 : i32
    %2 = arith.cmpi ne, %1, %c0_i32_0 : i32
    scf.if %2 {
      %c0_83 = arith.constant 0 : index
      %c0_84 = arith.constant 0 : index
      %144 = vector.load %arg1[%c0_83, %c0_84] : memref<72x128xf32, #tpu.memory_space<vmem>>, vector<72x128xf32>
      %c0_85 = arith.constant 0 : index
      %c0_86 = arith.constant 0 : index
      %145 = vector.load %arg24[%c0_85, %c0_86] : memref<72x128xf32, #tpu.memory_space<vmem>>, vector<72x128xf32>
      tpu.vector_store %arg24[%c0_85, %c0_86], %144 {strides = array<i32>} : memref<72x128xf32, #tpu.memory_space<vmem>>, vector<72x128xf32>,
      %cst_87 = arith.constant 0.000000e+00 : f32
      %146 = vector.broadcast %cst_87 : f32 to vector<88x256xf32>
      %c0_88 = arith.constant 0 : index
      %c0_89 = arith.constant 0 : index
      %147 = vector.load %arg25[%c0_88, %c0_89] : memref<88x256xf32, #tpu.memory_space<vmem>>, vector<88x256xf32>
      tpu.vector_store %arg25[%c0_88, %c0_89], %146 {strides = array<i32>} : memref<88x256xf32, #tpu.memory_space<vmem>>, vector<88x256xf32>,
    } else {
    }
    %c0 = arith.constant 0 : index
    %c0_1 = arith.constant 0 : index
    %3 = vector.load %arg24[%c0, %c0_1] : memref<72x128xf32, #tpu.memory_space<vmem>>, vector<72x128xf32>
    %4 = arith.truncf %3 : vector<72x128xf32> to vector<72x128xbf16>
    %c0_2 = arith.constant 0 : index
    %c0_3 = arith.constant 0 : index
    %c0_4 = arith.constant 0 : index
    %5 = vector.load %arg2[%c0_2, %c0_3, %c0_4] : memref<1x128x384xbf16, #tpu.memory_space<vmem>>, vector<1x128x384xbf16>
    %6 = vector.shape_cast %5 : vector<1x128x384xbf16> to vector<128x384xbf16>
    %cst = arith.constant dense<0.000000e+00> : vector<72x384xf32>
    %7 = tpu.matmul %4, %6, %cst {dimension_numbers = #tpu.dot_dimension_numbers<[1], [0], [0], [1], [0, 0, 1, 1], [], []>} : vector<72x128xbf16>, vector<128x384xbf16>, vector<72x384xf32> -> vector<72x384xf32>
    %c0_5 = arith.constant 0 : index
    %c0_6 = arith.constant 0 : index
    %c0_7 = arith.constant 0 : index
    %8 = vector.load %arg3[%c0_5, %c0_6, %c0_7] : memref<1x1x384xf32, #tpu.memory_space<vmem>>, vector<1x1x384xf32>
    %9 = vector.shape_cast %8 : vector<1x1x384xf32> to vector<1x384xf32>
    %10 = vector.broadcast %9 : vector<1x384xf32> to vector<72x384xf32>
    %11 = arith.addf %7, %10 : vector<72x384xf32>
    %12 = vector.extract_strided_slice %11 {offsets = [0, 0], sizes = [72, 128], strides = [1, 1]} : vector<72x384xf32> to vector<72x128xf32>
    %cst_8 = arith.constant 0.176776692 : f32
    %13 = vector.broadcast %cst_8 : f32 to vector<72x128xf32>
    %14 = arith.mulf %12, %13 : vector<72x128xf32>
    %15 = vector.extract_strided_slice %11 {offsets = [0, 128], sizes = [72, 256], strides = [1, 1]} : vector<72x384xf32> to vector<72x256xf32>
    %c8 = arith.constant 8 : index
    %c0_9 = arith.constant 0 : index
    %16 = vector.load %arg25[%c8, %c0_9] : memref<88x256xf32, #tpu.memory_space<vmem>>, vector<72x256xf32>
    tpu.vector_store %arg25[%c8, %c0_9], %15 {strides = array<i32>} : memref<88x256xf32, #tpu.memory_space<vmem>>, vector<72x256xf32>,
    %c0_10 = arith.constant 0 : index
    %c0_11 = arith.constant 0 : index
    %17 = vector.load %arg15[%c0_10, %c0_11] : memref<128x4xbf16, #tpu.memory_space<vmem>>, vector<128x4xbf16>
    %c0_12 = arith.constant 0 : index
    %c0_13 = arith.constant 0 : index
    %18 = vector.load %arg16[%c0_12, %c0_13] : memref<4x128xbf16, #tpu.memory_space<vmem>>, vector<4x128xbf16>
    %c8_14 = arith.constant 8 : index
    %c0_15 = arith.constant 0 : index
    %19 = vector.load %arg25[%c8_14, %c0_15] : memref<88x256xf32, #tpu.memory_space<vmem>>, vector<72x128xf32>
    %20 = arith.mulf %14, %19 : vector<72x128xf32>
    %21 = arith.truncf %20 : vector<72x128xf32> to vector<72x128xbf16>
    %cst_16 = arith.constant dense<0.000000e+00> : vector<72x4xf32>
    %22 = tpu.matmul %21, %17, %cst_16 {dimension_numbers = #tpu.dot_dimension_numbers<[1], [0], [0], [1], [0, 0, 1, 1], [], []>} : vector<72x128xbf16>, vector<128x4xbf16>, vector<72x4xf32> -> vector<72x4xf32>
    %c0_17 = arith.constant 0 : index
    %c0_18 = arith.constant 0 : index
    %23 = vector.load %arg14[%c0_17, %c0_18] : memref<72x128xi32, #tpu.memory_space<vmem>>, vector<72x128xi32>
    %c1_i32 = arith.constant 1 : i32
    %24 = vector.broadcast %c1_i32 : i32 to vector<72x128xi32>
    %25 = arith.cmpi slt, %23, %24 : vector<72x128xi32>
    %c9 = arith.constant 9 : index
    %c0_19 = arith.constant 0 : index
    %26 = vector.load %arg25[%c9, %c0_19] : memref<88x256xf32, #tpu.memory_space<vmem>>, vector<72x128xf32>
    %c7 = arith.constant 7 : index
    %c0_20 = arith.constant 0 : index
    %27 = vector.load %arg25[%c7, %c0_20] : memref<88x256xf32, #tpu.memory_space<vmem>>, vector<72x128xf32>
    %28 = arith.select %25, %26, %27 : vector<72x128xi1>, vector<72x128xf32>
    %29 = arith.mulf %14, %28 : vector<72x128xf32>
    %30 = arith.truncf %29 : vector<72x128xf32> to vector<72x128xbf16>
    %cst_21 = arith.constant dense<0.000000e+00> : vector<72x4xf32>
    %31 = tpu.matmul %30, %17, %cst_21 {dimension_numbers = #tpu.dot_dimension_numbers<[1], [0], [0], [1], [0, 0, 1, 1], [], []>} : vector<72x128xbf16>, vector<128x4xbf16>, vector<72x4xf32> -> vector<72x4xf32>
    %32 = arith.maximumf %22, %31 : vector<72x4xf32>
    %cst_22 = arith.constant 0.000000e+00 : f32
    %33 = vector.broadcast %cst_22 : f32 to vector<72x4xf32>
    %cst_23 = arith.constant 0.000000e+00 : f32
    %34 = vector.broadcast %cst_23 : f32 to vector<72x128xf32>
    %35 = arith.subf %22, %32 : vector<72x4xf32>
    %36 = math.exp %35 : vector<72x4xf32>
    %37 = arith.addf %33, %36 : vector<72x4xf32>
    %c8_24 = arith.constant 8 : index
    %c128 = arith.constant 128 : index
    %38 = vector.load %arg25[%c8_24, %c128] : memref<88x256xf32, #tpu.memory_space<vmem>>, vector<72x128xf32>
    %39 = arith.truncf %36 : vector<72x4xf32> to vector<72x4xbf16>
    %cst_25 = arith.constant dense<0.000000e+00> : vector<72x128xf32>
    %40 = tpu.matmul %39, %18, %cst_25 {dimension_numbers = #tpu.dot_dimension_numbers<[1], [0], [0], [1], [0, 0, 1, 1], [], []>} : vector<72x4xbf16>, vector<4x128xbf16>, vector<72x128xf32> -> vector<72x128xf32>
    %41 = arith.mulf %40, %38 : vector<72x128xf32>
    %42 = arith.addf %34, %41 : vector<72x128xf32>
    %43 = arith.subf %31, %32 : vector<72x4xf32>
    %44 = math.exp %43 : vector<72x4xf32>
    %45 = arith.addf %37, %44 : vector<72x4xf32>
    %c0_26 = arith.constant 0 : index
    %c0_27 = arith.constant 0 : index
    %46 = vector.load %arg14[%c0_26, %c0_27] : memref<72x128xi32, #tpu.memory_space<vmem>>, vector<72x128xi32>
    %c1_i32_28 = arith.constant 1 : i32
    %47 = vector.broadcast %c1_i32_28 : i32 to vector<72x128xi32>
    %48 = arith.cmpi slt, %46, %47 : vector<72x128xi32>
    %c9_29 = arith.constant 9 : index
    %c128_30 = arith.constant 128 : index
    %49 = vector.load %arg25[%c9_29, %c128_30] : memref<88x256xf32, #tpu.memory_space<vmem>>, vector<72x128xf32>
    %c7_31 = arith.constant 7 : index
    %c128_32 = arith.constant 128 : index
    %50 = vector.load %arg25[%c7_31, %c128_32] : memref<88x256xf32, #tpu.memory_space<vmem>>, vector<72x128xf32>
    %51 = arith.select %48, %49, %50 : vector<72x128xi1>, vector<72x128xf32>
    %52 = arith.truncf %44 : vector<72x4xf32> to vector<72x4xbf16>
    %cst_33 = arith.constant dense<0.000000e+00> : vector<72x128xf32>
    %53 = tpu.matmul %52, %18, %cst_33 {dimension_numbers = #tpu.dot_dimension_numbers<[1], [0], [0], [1], [0, 0, 1, 1], [], []>} : vector<72x4xbf16>, vector<4x128xbf16>, vector<72x128xf32> -> vector<72x128xf32>
    %54 = arith.mulf %53, %51 : vector<72x128xf32>
    %55 = arith.addf %42, %54 : vector<72x128xf32>
    %56 = tpu.reciprocal %45 {approx = true} : vector<72x4xf32> -> vector<72x4xf32>
    %57 = arith.truncf %56 : vector<72x4xf32> to vector<72x4xbf16>
    %cst_34 = arith.constant dense<0.000000e+00> : vector<72x128xf32>
    %58 = tpu.matmul %57, %18, %cst_34 {dimension_numbers = #tpu.dot_dimension_numbers<[1], [0], [0], [1], [0, 0, 1, 1], [], []>} : vector<72x4xbf16>, vector<4x128xbf16>, vector<72x128xf32> -> vector<72x128xf32>
    %59 = arith.mulf %55, %58 : vector<72x128xf32>
    %60 = arith.truncf %59 : vector<72x128xf32> to vector<72x128xbf16>
    %c0_35 = arith.constant 0 : index
    %c0_36 = arith.constant 0 : index
    %c0_37 = arith.constant 0 : index
    %61 = vector.load %arg4[%c0_35, %c0_36, %c0_37] : memref<1x128x128xbf16, #tpu.memory_space<vmem>>, vector<1x128x128xbf16>
    %62 = vector.shape_cast %61 : vector<1x128x128xbf16> to vector<128x128xbf16>
    %cst_38 = arith.constant dense<0.000000e+00> : vector<72x128xf32>
    %63 = tpu.matmul %60, %62, %cst_38 {dimension_numbers = #tpu.dot_dimension_numbers<[1], [0], [0], [1], [0, 0, 1, 1], [], []>} : vector<72x128xbf16>, vector<128x128xbf16>, vector<72x128xf32> -> vector<72x128xf32>
    %c0_39 = arith.constant 0 : index
    %c0_40 = arith.constant 0 : index
    %c0_41 = arith.constant 0 : index
    %64 = vector.load %arg5[%c0_39, %c0_40, %c0_41] : memref<1x1x128xf32, #tpu.memory_space<vmem>>, vector<1x1x128xf32>
    %65 = vector.shape_cast %64 : vector<1x1x128xf32> to vector<1x128xf32>
    %66 = vector.broadcast %65 : vector<1x128xf32> to vector<72x128xf32>
    %67 = arith.addf %63, %66 : vector<72x128xf32>
    %68 = arith.addf %3, %67 : vector<72x128xf32>
    %c0_42 = arith.constant 0 : index
    %c0_43 = arith.constant 0 : index
    %c0_44 = arith.constant 0 : index
    %69 = vector.load %arg6[%c0_42, %c0_43, %c0_44] : memref<1x1x128xf32, #tpu.memory_space<vmem>>, vector<1x1x128xf32>
    %70 = vector.shape_cast %69 : vector<1x1x128xf32> to vector<1x128xf32>
    %c0_45 = arith.constant 0 : index
    %c0_46 = arith.constant 0 : index
    %c0_47 = arith.constant 0 : index
    %71 = vector.load %arg7[%c0_45, %c0_46, %c0_47] : memref<1x1x128xf32, #tpu.memory_space<vmem>>, vector<1x1x128xf32>
    %72 = vector.shape_cast %71 : vector<1x1x128xf32> to vector<1x128xf32>
    %cst_48 = arith.constant dense<0.000000e+00> : vector<72xf32>
    %73 = vector.multi_reduction <add>, %68, %cst_48 [1] : vector<72x128xf32> to vector<72xf32>
    %74 = vector.shape_cast %73 : vector<72xf32> to vector<72x1xf32>
    %cst_49 = arith.constant 1.280000e+02 : f32
    %75 = vector.broadcast %cst_49 : f32 to vector<72x1xf32>
    %76 = arith.divf %74, %75 : vector<72x1xf32>
    %77 = vector.broadcast %76 : vector<72x1xf32> to vector<72x128xf32>
    %78 = arith.subf %68, %77 : vector<72x128xf32>
    %79 = arith.mulf %78, %78 : vector<72x128xf32>
    %cst_50 = arith.constant dense<0.000000e+00> : vector<72xf32>
    %80 = vector.multi_reduction <add>, %79, %cst_50 [1] : vector<72x128xf32> to vector<72xf32>
    %81 = vector.shape_cast %80 : vector<72xf32> to vector<72x1xf32>
    %cst_51 = arith.constant 1.280000e+02 : f32
    %82 = vector.broadcast %cst_51 : f32 to vector<72x1xf32>
    %83 = arith.divf %81, %82 : vector<72x1xf32>
    %84 = vector.broadcast %76 : vector<72x1xf32> to vector<72x128xf32>
    %85 = arith.subf %68, %84 : vector<72x128xf32>
    %cst_52 = arith.constant 9.99999974E-6 : f32
    %86 = vector.broadcast %cst_52 : f32 to vector<72x1xf32>
    %87 = arith.addf %83, %86 : vector<72x1xf32>
    %88 = math.rsqrt %87 : vector<72x1xf32>
    %89 = vector.broadcast %88 : vector<72x1xf32> to vector<72x128xf32>
    %90 = arith.mulf %85, %89 : vector<72x128xf32>
    %91 = vector.broadcast %70 : vector<1x128xf32> to vector<72x128xf32>
    %92 = arith.mulf %90, %91 : vector<72x128xf32>
    %93 = vector.broadcast %72 : vector<1x128xf32> to vector<72x128xf32>
    %94 = arith.addf %92, %93 : vector<72x128xf32>
    %95 = arith.truncf %94 : vector<72x128xf32> to vector<72x128xbf16>
    %c0_53 = arith.constant 0 : index
    %c0_54 = arith.constant 0 : index
    %c0_55 = arith.constant 0 : index
    %96 = vector.load %arg8[%c0_53, %c0_54, %c0_55] : memref<1x128x256xbf16, #tpu.memory_space<vmem>>, vector<1x128x256xbf16>
    %97 = vector.shape_cast %96 : vector<1x128x256xbf16> to vector<128x256xbf16>
    %cst_56 = arith.constant dense<0.000000e+00> : vector<72x256xf32>
    %98 = tpu.matmul %95, %97, %cst_56 {dimension_numbers = #tpu.dot_dimension_numbers<[1], [0], [0], [1], [0, 0, 1, 1], [], []>} : vector<72x128xbf16>, vector<128x256xbf16>, vector<72x256xf32> -> vector<72x256xf32>
    %c0_57 = arith.constant 0 : index
    %c0_58 = arith.constant 0 : index
    %c0_59 = arith.constant 0 : index
    %99 = vector.load %arg9[%c0_57, %c0_58, %c0_59] : memref<1x1x256xf32, #tpu.memory_space<vmem>>, vector<1x1x256xf32>
    %100 = vector.shape_cast %99 : vector<1x1x256xf32> to vector<1x256xf32>
    %101 = vector.broadcast %100 : vector<1x256xf32> to vector<72x256xf32>
    %102 = arith.addf %98, %101 : vector<72x256xf32>
    %cst_60 = arith.constant 0.000000e+00 : f32
    %103 = vector.broadcast %cst_60 : f32 to vector<72x256xf32>
    %104 = arith.maximumf %102, %103 : vector<72x256xf32>
    %105 = arith.truncf %104 : vector<72x256xf32> to vector<72x256xbf16>
    %c0_61 = arith.constant 0 : index
    %c0_62 = arith.constant 0 : index
    %c0_63 = arith.constant 0 : index
    %106 = vector.load %arg10[%c0_61, %c0_62, %c0_63] : memref<1x256x128xbf16, #tpu.memory_space<vmem>>, vector<1x256x128xbf16>
    %107 = vector.shape_cast %106 : vector<1x256x128xbf16> to vector<256x128xbf16>
    %cst_64 = arith.constant dense<0.000000e+00> : vector<72x128xf32>
    %108 = tpu.matmul %105, %107, %cst_64 {dimension_numbers = #tpu.dot_dimension_numbers<[1], [0], [0], [1], [0, 0, 1, 1], [], []>} : vector<72x256xbf16>, vector<256x128xbf16>, vector<72x128xf32> -> vector<72x128xf32>
    %c0_65 = arith.constant 0 : index
    %c0_66 = arith.constant 0 : index
    %c0_67 = arith.constant 0 : index
    %109 = vector.load %arg11[%c0_65, %c0_66, %c0_67] : memref<1x1x128xf32, #tpu.memory_space<vmem>>, vector<1x1x128xf32>
    %110 = vector.shape_cast %109 : vector<1x1x128xf32> to vector<1x128xf32>
    %111 = vector.broadcast %110 : vector<1x128xf32> to vector<72x128xf32>
    %112 = arith.addf %108, %111 : vector<72x128xf32>
    %113 = arith.addf %94, %112 : vector<72x128xf32>
    %c0_68 = arith.constant 0 : index
    %c0_69 = arith.constant 0 : index
    %c0_70 = arith.constant 0 : index
    %114 = vector.load %arg12[%c0_68, %c0_69, %c0_70] : memref<1x1x128xf32, #tpu.memory_space<vmem>>, vector<1x1x128xf32>
    %115 = vector.shape_cast %114 : vector<1x1x128xf32> to vector<1x128xf32>
    %c0_71 = arith.constant 0 : index
    %c0_72 = arith.constant 0 : index
    %c0_73 = arith.constant 0 : index
    %116 = vector.load %arg13[%c0_71, %c0_72, %c0_73] : memref<1x1x128xf32, #tpu.memory_space<vmem>>, vector<1x1x128xf32>
    %117 = vector.shape_cast %116 : vector<1x1x128xf32> to vector<1x128xf32>
    %cst_74 = arith.constant dense<0.000000e+00> : vector<72xf32>
    %118 = vector.multi_reduction <add>, %113, %cst_74 [1] : vector<72x128xf32> to vector<72xf32>
    %119 = vector.shape_cast %118 : vector<72xf32> to vector<72x1xf32>
    %cst_75 = arith.constant 1.280000e+02 : f32
    %120 = vector.broadcast %cst_75 : f32 to vector<72x1xf32>
    %121 = arith.divf %119, %120 : vector<72x1xf32>
    %122 = vector.broadcast %121 : vector<72x1xf32> to vector<72x128xf32>
    %123 = arith.subf %113, %122 : vector<72x128xf32>
    %124 = arith.mulf %123, %123 : vector<72x128xf32>
    %cst_76 = arith.constant dense<0.000000e+00> : vector<72xf32>
    %125 = vector.multi_reduction <add>, %124, %cst_76 [1] : vector<72x128xf32> to vector<72xf32>
    %126 = vector.shape_cast %125 : vector<72xf32> to vector<72x1xf32>
    %cst_77 = arith.constant 1.280000e+02 : f32
    %127 = vector.broadcast %cst_77 : f32 to vector<72x1xf32>
    %128 = arith.divf %126, %127 : vector<72x1xf32>
    %129 = vector.broadcast %121 : vector<72x1xf32> to vector<72x128xf32>
    %130 = arith.subf %113, %129 : vector<72x128xf32>
    %cst_78 = arith.constant 9.99999974E-6 : f32
    %131 = vector.broadcast %cst_78 : f32 to vector<72x1xf32>
    %132 = arith.addf %128, %131 : vector<72x1xf32>
    %133 = math.rsqrt %132 : vector<72x1xf32>
    %134 = vector.broadcast %133 : vector<72x1xf32> to vector<72x128xf32>
    %135 = arith.mulf %130, %134 : vector<72x128xf32>
    %136 = vector.broadcast %115 : vector<1x128xf32> to vector<72x128xf32>
    %137 = arith.mulf %135, %136 : vector<72x128xf32>
    %138 = vector.broadcast %117 : vector<1x128xf32> to vector<72x128xf32>
    %139 = arith.addf %137, %138 : vector<72x128xf32>
    %c0_79 = arith.constant 0 : index
    %c0_80 = arith.constant 0 : index
    %140 = vector.load %arg24[%c0_79, %c0_80] : memref<72x128xf32, #tpu.memory_space<vmem>>, vector<72x128xf32>
    tpu.vector_store %arg24[%c0_79, %c0_80], %139 {strides = array<i32>} : memref<72x128xf32, #tpu.memory_space<vmem>>, vector<72x128xf32>,
    %c1_i32_81 = arith.constant 1 : i32
    %141 = arith.cmpi eq, %arg0, %c1_i32_81 : i32
    %142 = arith.extui %141 : i1 to i32
    %c0_i32_82 = arith.constant 0 : i32
    %143 = arith.cmpi ne, %142, %c0_i32_82 : i32
    scf.if %143 {
      %144 = vector.extract_strided_slice %139 {offsets = [0, 0], sizes = [8, 128], strides = [1, 1]} : vector<72x128xf32> to vector<8x128xf32>
      %145 = arith.truncf %144 : vector<8x128xf32> to vector<8x128xbf16>
      %c0_83 = arith.constant 0 : index
      %c0_84 = arith.constant 0 : index
      %146 = vector.load %arg17[%c0_83, %c0_84] : memref<128x512xbf16, #tpu.memory_space<vmem>>, vector<128x512xbf16>
      %cst_85 = arith.constant dense<0.000000e+00> : vector<8x512xf32>
      %147 = tpu.matmul %145, %146, %cst_85 {dimension_numbers = #tpu.dot_dimension_numbers<[1], [0], [0], [1], [0, 0, 1, 1], [], []>} : vector<8x128xbf16>, vector<128x512xbf16>, vector<8x512xf32> -> vector<8x512xf32>
      %c0_86 = arith.constant 0 : index
      %c0_87 = arith.constant 0 : index
      %148 = vector.load %arg18[%c0_86, %c0_87] : memref<1x512xf32, #tpu.memory_space<vmem>>, vector<1x512xf32>
      %149 = vector.broadcast %148 : vector<1x512xf32> to vector<8x512xf32>
      %150 = arith.addf %147, %149 : vector<8x512xf32>
      %cst_88 = arith.constant 0.000000e+00 : f32
      %151 = vector.broadcast %cst_88 : f32 to vector<8x512xf32>
      %152 = arith.maximumf %150, %151 : vector<8x512xf32>
      %153 = arith.truncf %152 : vector<8x512xf32> to vector<8x512xbf16>
      %c0_89 = arith.constant 0 : index
      %c0_90 = arith.constant 0 : index
      %154 = vector.load %arg19[%c0_89, %c0_90] : memref<512x128xbf16, #tpu.memory_space<vmem>>, vector<512x128xbf16>
      %cst_91 = arith.constant dense<0.000000e+00> : vector<8x128xf32>
      %155 = tpu.matmul %153, %154, %cst_91 {dimension_numbers = #tpu.dot_dimension_numbers<[1], [0], [0], [1], [0, 0, 1, 1], [], []>} : vector<8x512xbf16>, vector<512x128xbf16>, vector<8x128xf32> -> vector<8x128xf32>
      %c0_92 = arith.constant 0 : index
      %c0_93 = arith.constant 0 : index
      %156 = vector.load %arg20[%c0_92, %c0_93] : memref<1x128xf32, #tpu.memory_space<vmem>>, vector<1x128xf32>
      %157 = vector.broadcast %156 : vector<1x128xf32> to vector<8x128xf32>
      %158 = arith.addf %155, %157 : vector<8x128xf32>
      %cst_94 = arith.constant 0.000000e+00 : f32
      %159 = vector.broadcast %cst_94 : f32 to vector<8x128xf32>
      %160 = arith.maximumf %158, %159 : vector<8x128xf32>
      %161 = arith.truncf %160 : vector<8x128xf32> to vector<8x128xbf16>
      %c0_95 = arith.constant 0 : index
      %c0_96 = arith.constant 0 : index
      %162 = vector.load %arg21[%c0_95, %c0_96] : memref<128x128xbf16, #tpu.memory_space<vmem>>, vector<128x128xbf16>
      %cst_97 = arith.constant dense<0.000000e+00> : vector<8x128xf32>
      %163 = tpu.matmul %161, %162, %cst_97 {dimension_numbers = #tpu.dot_dimension_numbers<[1], [0], [0], [1], [0, 0, 1, 1], [], []>} : vector<8x128xbf16>, vector<128x128xbf16>, vector<8x128xf32> -> vector<8x128xf32>
      %c0_98 = arith.constant 0 : index
      %c0_99 = arith.constant 0 : index
      %164 = vector.load %arg22[%c0_98, %c0_99] : memref<1x128xf32, #tpu.memory_space<vmem>>, vector<1x128xf32>
      %165 = vector.broadcast %164 : vector<1x128xf32> to vector<8x128xf32>
      %166 = arith.addf %163, %165 : vector<8x128xf32>
      %c0_100 = arith.constant 0 : index
      %c0_101 = arith.constant 0 : index
      %167 = vector.load %arg23[%c0_100, %c0_101] : memref<8x128xf32, #tpu.memory_space<vmem>>, vector<8x128xf32>
      tpu.vector_store %arg23[%c0_100, %c0_101], %166 {strides = array<i32>} : memref<8x128xf32, #tpu.memory_space<vmem>>, vector<8x128xf32>,
    } else {
    }
    return
  }
  func.func @transform_0(%arg0: i32) -> (i32, i32) {
    %c0_i32 = arith.constant 0 : i32
    %c0_i32_0 = arith.constant 0 : i32
    %c0_i32_1 = arith.constant 0 : i32
    return %c0_i32, %c0_i32_0 : i32, i32
  }
  func.func @transform_1(%arg0: i32) -> (i32, i32, i32) {
    %c0_i32 = arith.constant 0 : i32
    %c0_i32_0 = arith.constant 0 : i32
    %c0_i32_1 = arith.constant 0 : i32
    return %arg0, %c0_i32, %c0_i32_0 : i32, i32, i32
  }
  func.func @transform_2(%arg0: i32) -> (i32, i32, i32) {
    %c0_i32 = arith.constant 0 : i32
    %c0_i32_0 = arith.constant 0 : i32
    %c0_i32_1 = arith.constant 0 : i32
    return %arg0, %c0_i32, %c0_i32_0 : i32, i32, i32
  }
  func.func @transform_3(%arg0: i32) -> (i32, i32, i32) {
    %c0_i32 = arith.constant 0 : i32
    %c0_i32_0 = arith.constant 0 : i32
    %c0_i32_1 = arith.constant 0 : i32
    return %arg0, %c0_i32, %c0_i32_0 : i32, i32, i32
  }
  func.func @transform_4(%arg0: i32) -> (i32, i32, i32) {
    %c0_i32 = arith.constant 0 : i32
    %c0_i32_0 = arith.constant 0 : i32
    %c0_i32_1 = arith.constant 0 : i32
    return %arg0, %c0_i32, %c0_i32_0 : i32, i32, i32
  }
  func.func @transform_5(%arg0: i32) -> (i32, i32, i32) {
    %c0_i32 = arith.constant 0 : i32
    %c0_i32_0 = arith.constant 0 : i32
    %c0_i32_1 = arith.constant 0 : i32
    return %arg0, %c0_i32, %c0_i32_0 : i32, i32, i32
  }
  func.func @transform_6(%arg0: i32) -> (i32, i32, i32) {
    %c0_i32 = arith.constant 0 : i32
    %c0_i32_0 = arith.constant 0 : i32
    %c0_i32_1 = arith.constant 0 : i32
    return %arg0, %c0_i32, %c0_i32_0 : i32, i32, i32
  }
  func.func @transform_7(%arg0: i32) -> (i32, i32, i32) {
    %c0_i32 = arith.constant 0 : i32
    %c0_i32_0 = arith.constant 0 : i32
    %c0_i32_1 = arith.constant 0 : i32
    return %arg0, %c0_i32, %c0_i32_0 : i32, i32, i32
  }
  func.func @transform_8(%arg0: i32) -> (i32, i32, i32) {
    %c0_i32 = arith.constant 0 : i32
    %c0_i32_0 = arith.constant 0 : i32
    %c0_i32_1 = arith.constant 0 : i32
    return %arg0, %c0_i32, %c0_i32_0 : i32, i32, i32
  }
  func.func @transform_9(%arg0: i32) -> (i32, i32, i32) {
    %c0_i32 = arith.constant 0 : i32
    %c0_i32_0 = arith.constant 0 : i32
    %c0_i32_1 = arith.constant 0 : i32
    return %arg0, %c0_i32, %c0_i32_0 : i32, i32, i32
  }
  func.func @transform_10(%arg0: i32) -> (i32, i32, i32) {
    %c0_i32 = arith.constant 0 : i32
    %c0_i32_0 = arith.constant 0 : i32
    %c0_i32_1 = arith.constant 0 : i32
    return %arg0, %c0_i32, %c0_i32_0 : i32, i32, i32
  }
  func.func @transform_11(%arg0: i32) -> (i32, i32, i32) {
    %c0_i32 = arith.constant 0 : i32
    %c0_i32_0 = arith.constant 0 : i32
    %c0_i32_1 = arith.constant 0 : i32
    return %arg0, %c0_i32, %c0_i32_0 : i32, i32, i32
  }
  func.func @transform_12(%arg0: i32) -> (i32, i32, i32) {
    %c0_i32 = arith.constant 0 : i32
    %c0_i32_0 = arith.constant 0 : i32
    %c0_i32_1 = arith.constant 0 : i32
    return %arg0, %c0_i32, %c0_i32_0 : i32, i32, i32
  }
  func.func @transform_13(%arg0: i32) -> (i32, i32) {
    %c0_i32 = arith.constant 0 : i32
    %c0_i32_0 = arith.constant 0 : i32
    %c0_i32_1 = arith.constant 0 : i32
    return %c0_i32, %c0_i32_0 : i32, i32
  }
  func.func @transform_14(%arg0: i32) -> (i32, i32) {
    %c0_i32 = arith.constant 0 : i32
    %c0_i32_0 = arith.constant 0 : i32
    %c0_i32_1 = arith.constant 0 : i32
    return %c0_i32, %c0_i32_0 : i32, i32
  }
  func.func @transform_15(%arg0: i32) -> (i32, i32) {
    %c0_i32 = arith.constant 0 : i32
    %c0_i32_0 = arith.constant 0 : i32
    %c0_i32_1 = arith.constant 0 : i32
    return %c0_i32, %c0_i32_0 : i32, i32
  }
  func.func @transform_16(%arg0: i32) -> (i32, i32) {
    %c0_i32 = arith.constant 0 : i32
    %c0_i32_0 = arith.constant 0 : i32
    %c0_i32_1 = arith.constant 0 : i32
    return %c0_i32, %c0_i32_0 : i32, i32
  }
  func.func @transform_17(%arg0: i32) -> (i32, i32) {
    %c0_i32 = arith.constant 0 : i32
    %c0_i32_0 = arith.constant 0 : i32
    %c0_i32_1 = arith.constant 0 : i32
    return %c0_i32, %c0_i32_0 : i32, i32
  }
  func.func @transform_18(%arg0: i32) -> (i32, i32) {
    %c0_i32 = arith.constant 0 : i32
    %c0_i32_0 = arith.constant 0 : i32
    %c0_i32_1 = arith.constant 0 : i32
    return %c0_i32, %c0_i32_0 : i32, i32
  }
  func.func @transform_19(%arg0: i32) -> (i32, i32) {
    %c0_i32 = arith.constant 0 : i32
    %c0_i32_0 = arith.constant 0 : i32
    %c0_i32_1 = arith.constant 0 : i32
    return %c0_i32, %c0_i32_0 : i32, i32
  }
  func.func @transform_20(%arg0: i32) -> (i32, i32) {
    %c0_i32 = arith.constant 0 : i32
    %c0_i32_0 = arith.constant 0 : i32
    %c0_i32_1 = arith.constant 0 : i32
    return %c0_i32, %c0_i32_0 : i32, i32
  }
  func.func @transform_21(%arg0: i32) -> (i32, i32) {
    %c0_i32 = arith.constant 0 : i32
    %c0_i32_0 = arith.constant 0 : i32
    %c0_i32_1 = arith.constant 0 : i32
    return %c0_i32, %c0_i32_0 : i32, i32
  }
  func.func @transform_22(%arg0: i32) -> (i32, i32) {
    %c0_i32 = arith.constant 0 : i32
    %c0_i32_0 = arith.constant 0 : i32
    %c0_i32_1 = arith.constant 0 : i32
    return %c0_i32, %c0_i32_0 : i32, i32
  }
}

</mosaic_0001>

<llo_original>
// kernel: tpu_custom_call.1
$region0: #{tpu_custom_call.1}
  #allocation0 [shape = 'u32[]', space=smem, size = 0x4, offset = 0x4, fixed_abs, tag = 'smem constant byte address 0x4 - core index']
  #allocation1 [shape = 'u32[72,128]{1,0:T(1,128)}', space=vmem, size = 0x9000, scoped, tag = 'internal scratch']
  #allocation2 [shape = 'f32[72,128]{1,0:T(8,128)}', space=vmem, size = 0x9000, scoped, tag = 'scratch operand']
  #allocation3 [shape = 'f32[88,256]{1,0:T(8,128)}', space=vmem, size = 0x16000, scoped, tag = 'scratch operand']
  %s0 = inlined_call_operand.hbm [shape: f32[72,128], index: 0, kind: input, shape index: {}]
  %s1 = inlined_call_operand.hbm [shape: bf16[2,128,384], index: 1, kind: input, shape index: {}]
  %s2 = inlined_call_operand.hbm [shape: f32[2,1,384], index: 2, kind: input, shape index: {}]
  %s3 = inlined_call_operand.hbm [shape: bf16[2,128,128], index: 3, kind: input, shape index: {}]
  %s4 = inlined_call_operand.vmem [shape: f32[2,1,128], index: 4, kind: input, shape index: {}]
  %s5 = inlined_call_operand.hbm [shape: f32[2,1,128], index: 5, kind: input, shape index: {}]
  %s6 = inlined_call_operand.hbm [shape: f32[2,1,128], index: 6, kind: input, shape index: {}]
  %s7 = inlined_call_operand.hbm [shape: bf16[2,128,256], index: 7, kind: input, shape index: {}]
  %s8 = inlined_call_operand.vmem [shape: f32[2,1,256], index: 8, kind: input, shape index: {}]
  %s9 = inlined_call_operand.hbm [shape: bf16[2,256,128], index: 9, kind: input, shape index: {}]
  %s10 = inlined_call_operand.hbm [shape: f32[2,1,128], index: 10, kind: input, shape index: {}]
  %s11 = inlined_call_operand.hbm [shape: f32[2,1,128], index: 11, kind: input, shape index: {}]
  %s12 = inlined_call_operand.hbm [shape: f32[2,1,128], index: 12, kind: input, shape index: {}]
  %s13 = inlined_call_operand.hbm [shape: s32[72,128], index: 13, kind: input, shape index: {}]
  %s14 = inlined_call_operand.vmem [shape: bf16[128,4], index: 14, kind: input, shape index: {}]
  %s15 = inlined_call_operand.vmem [shape: bf16[4,128], index: 15, kind: input, shape index: {}]
  %s16 = inlined_call_operand.hbm [shape: bf16[128,512], index: 16, kind: input, shape index: {}]
  %s17 = inlined_call_operand.vmem [shape: f32[1,512], index: 17, kind: input, shape index: {}]
  %s18 = inlined_call_operand.hbm [shape: bf16[512,128], index: 18, kind: input, shape index: {}]
  %s19 = inlined_call_operand.vmem [shape: f32[1,128], index: 19, kind: input, shape index: {}]
  %s20 = inlined_call_operand.vmem [shape: bf16[128,128], index: 20, kind: input, shape index: {}]
  %s21 = inlined_call_operand.vmem [shape: f32[1,128], index: 21, kind: input, shape index: {}]
  %s22 = inlined_call_operand.hbm [shape: f32[8,128], index: 22, kind: output, shape index: {}]
  %s23 = sld [smem:[#allocation0]]
  $region185: #{tpu_custom_call.1} parent=0
    _
  %s25 = ssub.s32 1, %s23
  %s26 = scalar_select 0, %s25, %s23
  $region1: #{tpu_custom_call.1} parent=0
    #allocation4 [shape = 'u8[36864]{0}', space=vmem, size = 0x9000, scoped, tag = 'input window, operand 0, single buffered']
    #allocation5 [shape = 's32[2]{0}', space=sflag, size = 0x8, scoped, tag = 'scoped memory for tpu_custom_call.1']
    #allocation6 [shape = 's32[2]{0}', space=sflag, size = 0x8, scoped, tag = 'scoped memory for tpu_custom_call.1']
    #allocation7 [shape = 'u8[196608]{0}', space=vmem, size = 0x30000, scoped, tag = 'input window, operand 1']
    #allocation8 [shape = 's32[2]{0}', space=sflag, size = 0x8, scoped, tag = 'scoped memory for tpu_custom_call.1']
    #allocation9 [shape = 'u8[3072]{0}', space=vmem, size = 0xc00, scoped, tag = 'input window, operand 2']
    #allocation10 [shape = 'u8[65536]{0}', space=vmem, size = 0x10000, scoped, tag = 'input window, operand 3']
    #allocation11 [shape = 's32[2]{0}', space=sflag, size = 0x8, scoped, tag = 'scoped memory for tpu_custom_call.1']
    #allocation12 [shape = 'u8[1024]{0}', space=vmem, size = 0x400, scoped, tag = 'input window, operand 5']
    #allocation13 [shape = 'u8[1024]{0}', space=vmem, size = 0x400, scoped, tag = 'input window, operand 6']
    #allocation14 [shape = 's32[2]{0}', space=sflag, size = 0x8, scoped, tag = 'scoped memory for tpu_custom_call.1']
    #allocation15 [shape = 'u8[131072]{0}', space=vmem, size = 0x20000, scoped, tag = 'input window, operand 7']
    #allocation16 [shape = 'u8[131072]{0}', space=vmem, size = 0x20000, scoped, tag = 'input window, operand 9']
    #allocation17 [shape = 's32[2]{0}', space=sflag, size = 0x8, scoped, tag = 'scoped memory for tpu_custom_call.1']
    #allocation18 [shape = 'u8[1024]{0}', space=vmem, size = 0x400, scoped, tag = 'input window, operand 10']
    #allocation19 [shape = 'u8[1024]{0}', space=vmem, size = 0x400, scoped, tag = 'input window, operand 11']
    #allocation20 [shape = 's32[2]{0}', space=sflag, size = 0x8, scoped, tag = 'scoped memory for tpu_custom_call.1']
    #allocation21 [shape = 'u8[1024]{0}', space=vmem, size = 0x400, scoped, tag = 'input window, operand 12']
    #allocation22 [shape = 'u8[36864]{0}', space=vmem, size = 0x9000, scoped, tag = 'input window, operand 13, single buffered']
    #allocation23 [shape = 's32[1]{0}', space=sflag, size = 0x4, scoped, tag = 'scoped memory for tpu_custom_call.1']
    #allocation24 [shape = 'u8[131072]{0}', space=vmem, size = 0x20000, scoped, tag = 'input window, operand 16, single buffered']
    #allocation25 [shape = 'u8[131072]{0}', space=vmem, size = 0x20000, scoped, tag = 'input window, operand 18, single buffered']
    #allocation26 [shape = 's32[1]{0}', space=sflag, size = 0x4, scoped, tag = 'scoped memory for tpu_custom_call.1']
    #allocation27 [shape = 'u8[4096]{0}', space=vmem, size = 0x1000, scoped, tag = 'output window, operand 0, single buffered']
    %27 = vsyncpa [#allocation5], 0
    %28 = vsyncpa [#allocation8], 0
    %s29 = scalar_lea.sflag [#allocation8], 1
    %30 = vsyncpa %s29, 0
    %31 = vsyncpa [#allocation11], 0
    %s32 = scalar_lea.sflag [#allocation11], 1
    %33 = vsyncpa %s32, 0
    %34 = vsyncpa [#allocation14], 0
    %s35 = scalar_lea.sflag [#allocation14], 1
    %36 = vsyncpa %s35, 0
    %37 = vsyncpa [#allocation17], 0
    %s38 = scalar_lea.sflag [#allocation17], 1
    %39 = vsyncpa %s38, 0
    %40 = vsyncpa [#allocation20], 0
    %s41 = scalar_lea.sflag [#allocation20], 1
    %42 = vsyncpa %s41, 0
    %43 = vsyncpa [#allocation23], 0
    %44 = vsyncpa [#allocation26], 0
    %45 = vsyncpa [#allocation6], 0
    loop: start=0, step=1, limit=4
    $region2: #{tpu_custom_call.1} parent=1 // loop_pre_header
      _
    $region3: #{tpu_custom_call.1} parent=1 // loop_header
      %s47 = sphi 0, %s51
      %p48 = scmp.ge.s32.totalorder %s47, 4
      %s55 = sphi 0, %s55
      %s57 = sphi 0, %s55
      %s58 = sphi 0, %s57
      %s72 = sphi 0, %s58
      %s78 = sphi 0, %s80
      %s81 = sphi 0, %s78
      %s82 = sphi 0, %s81
      %s98 = sphi 0, %s82
      %s104 = sphi 0, %s106
      %s107 = sphi 0, %s104
      %s108 = sphi 0, %s107
      %s124 = sphi 0, %s108
      %s130 = sphi 0, %s132
      %s133 = sphi 0, %s130
      %s134 = sphi 0, %s133
      %s150 = sphi 0, %s134
      %s156 = sphi 0, %s158
      %s159 = sphi 0, %s156
      %s160 = sphi 0, %s159
      %s176 = sphi 0, %s160
      %s182 = sphi 0, %s184
      %s185 = sphi 0, %s182
      %s186 = sphi 0, %s185
      %s202 = sphi 0, %s186
      %s208 = sphi 0, %s210
      %s211 = sphi 0, %s208
      %s212 = sphi 0, %s211
      %s228 = sphi 0, %s212
      %s234 = sphi 0, %s236
      %s237 = sphi 0, %s234
      %s238 = sphi 0, %s237
      %s254 = sphi 0, %s238
      %s260 = sphi 0, %s262
      %s263 = sphi 0, %s260
      %s264 = sphi 0, %s263
      %s280 = sphi 0, %s264
      %s286 = sphi 0, %s288
      %s289 = sphi 0, %s286
      %s290 = sphi 0, %s289
      %s306 = sphi 0, %s290
      %s312 = sphi 0, %s314
      %s315 = sphi 0, %s312
      %s316 = sphi 0, %s315
      %s332 = sphi 0, %s316
      %s338 = sphi 0, %s340
      %s341 = sphi 0, %s338
      %s342 = sphi 0, %s341
      %s358 = sphi 0, %s342
      %s364 = sphi 0, %s366
      %s367 = sphi 0, %s364
      %s368 = sphi 0, %s367
      %s384 = sphi 0, %s368
      %s388 = sphi 0, %s388
      %s390 = sphi 0, %s388
      %s391 = sphi 0, %s390
      %s405 = sphi 0, %s391
      %s409 = sphi 0, %s409
      %s411 = sphi 0, %s409
      %s412 = sphi 0, %s411
      %s426 = sphi 0, %s412
      %s430 = sphi 0, %s430
      %s432 = sphi 0, %s430
      %s433 = sphi 0, %s432
      %s447 = sphi 0, %s433
      %s451 = sphi 0, %s451
      %s453 = sphi 0, %s451
      %s454 = sphi 0, %s453
      %s468 = sphi 0, %s454
      %s472 = sphi 0, %s472
      %s474 = sphi 0, %s472
      %s475 = sphi 0, %s474
      %s489 = sphi 0, %s475
      %s493 = sphi 0, %s493
      %s495 = sphi 0, %s493
      %s496 = sphi 0, %s495
      %s510 = sphi 0, %s496
      %s514 = sphi 0, %s514
      %s516 = sphi 0, %s514
      %s517 = sphi 0, %s516
      %s531 = sphi 0, %s517
      %s535 = sphi 0, %s535
      %s537 = sphi 0, %s535
      %s538 = sphi 0, %s537
      %s552 = sphi 0, %s538
      %s556 = sphi 0, %s556
      %s558 = sphi 0, %s556
      %s559 = sphi 0, %s558
      %s573 = sphi 0, %s559
      %s577 = sphi 0, %s577
      %s579 = sphi 0, %s577
      %s580 = sphi 0, %s579
      %s594 = sphi 0, %s580
    $region4: #{tpu_custom_call.1} parent=1 // loop_header_branch
      %50 = sbr.rel (%p48) target = $region8
    $region5: #{tpu_custom_call.1} parent=1 // loop_body
      %s52 = ssub.s32 %s47, 1
      %s53 = ssub.s32 %s47, 2
      %s54 = sadd.s32 %s47, 1
      %s56 = sadd.s32 %s55, 1
      %p59 = scmp.eq.s32.totalorder %s47, 1
      %p60 = scmp.ne.s32.totalorder %s55, %s57
      %p61 = scmp.eq.s32.totalorder %s47, 0
      %p62 = por %p60, %p61
      %p63 = scmp.ne.s32.totalorder %s55, %s57
      %p64 = scmp.eq.s32.totalorder %s52, 1
      %p65 = por %p63, %p64
      %p66 = scmp.ne.s32.totalorder %s57, %s58
      %p67 = scmp.eq.s32.totalorder %s52, 0
      %p68 = por %p66, %p67
      %p69 = scmp.ne.s32.totalorder %s57, %s58
      %p70 = scmp.eq.s32.totalorder %s53, 1
      %p71 = por %p69, %p70
      %p73 = scmp.ne.s32.totalorder %s58, %s72
      %p74 = scmp.eq.s32.totalorder %s53, 0
      %p75 = por %p73, %p74
      %s76 = ssub.s32 %s47, %s54
      %p77 = scmp.eq.s32.totalorder %s76, 0
      %s79 = sadd.s32 %s78, 1
      %s80 = scalar_select %p77, %s78, %s79
      %p83 = pneg %p77
      %p84 = scmp.eq.s32.totalorder %s47, 1
      %p85 = por %p83, %p84
      %p86 = scmp.ne.s32.totalorder %s78, %s81
      %p87 = scmp.eq.s32.totalorder %s47, 0
      %p88 = por %p86, %p87
      %p89 = scmp.ne.s32.totalorder %s78, %s81
      %p90 = scmp.eq.s32.totalorder %s52, 1
      %p91 = por %p89, %p90
      %p92 = scmp.ne.s32.totalorder %s81, %s82
      %p93 = scmp.eq.s32.totalorder %s52, 0
      %p94 = por %p92, %p93
      %p95 = scmp.ne.s32.totalorder %s81, %s82
      %p96 = scmp.eq.s32.totalorder %s53, 1
      %p97 = por %p95, %p96
      %p99 = scmp.ne.s32.totalorder %s82, %s98
      %p100 = scmp.eq.s32.totalorder %s53, 0
      %p101 = por %p99, %p100
      %s102 = ssub.s32 %s47, %s54
      %p103 = scmp.eq.s32.totalorder %s102, 0
      %s105 = sadd.s32 %s104, 1
      %s106 = scalar_select %p103, %s104, %s105
      %p109 = pneg %p103
      %p110 = scmp.eq.s32.totalorder %s47, 1
      %p111 = por %p109, %p110
      %p112 = scmp.ne.s32.totalorder %s104, %s107
      %p113 = scmp.eq.s32.totalorder %s47, 0
      %p114 = por %p112, %p113
      %p115 = scmp.ne.s32.totalorder %s104, %s107
      %p116 = scmp.eq.s32.totalorder %s52, 1
      %p117 = por %p115, %p116
      %p118 = scmp.ne.s32.totalorder %s107, %s108
      %p119 = scmp.eq.s32.totalorder %s52, 0
      %p120 = por %p118, %p119
      %p121 = scmp.ne.s32.totalorder %s107, %s108
      %p122 = scmp.eq.s32.totalorder %s53, 1
      %p123 = por %p121, %p122
      %p125 = scmp.ne.s32.totalorder %s108, %s124
      %p126 = scmp.eq.s32.totalorder %s53, 0
      %p127 = por %p125, %p126
      %s128 = ssub.s32 %s47, %s54
      %p129 = scmp.eq.s32.totalorder %s128, 0
      %s131 = sadd.s32 %s130, 1
      %s132 = scalar_select %p129, %s130, %s131
      %p135 = pneg %p129
      %p136 = scmp.eq.s32.totalorder %s47, 1
      %p137 = por %p135, %p136
      %p138 = scmp.ne.s32.totalorder %s130, %s133
      %p139 = scmp.eq.s32.totalorder %s47, 0
      %p140 = por %p138, %p139
      %p141 = scmp.ne.s32.totalorder %s130, %s133
      %p142 = scmp.eq.s32.totalorder %s52, 1
      %p143 = por %p141, %p142
      %p144 = scmp.ne.s32.totalorder %s133, %s134
      %p145 = scmp.eq.s32.totalorder %s52, 0
      %p146 = por %p144, %p145
      %p147 = scmp.ne.s32.totalorder %s133, %s134
      %p148 = scmp.eq.s32.totalorder %s53, 1
      %p149 = por %p147, %p148
      %p151 = scmp.ne.s32.totalorder %s134, %s150
      %p152 = scmp.eq.s32.totalorder %s53, 0
      %p153 = por %p151, %p152
      %s154 = ssub.s32 %s47, %s54
      %p155 = scmp.eq.s32.totalorder %s154, 0
      %s157 = sadd.s32 %s156, 1
      %s158 = scalar_select %p155, %s156, %s157
      %p161 = pneg %p155
      %p162 = scmp.eq.s32.totalorder %s47, 1
      %p163 = por %p161, %p162
      %p164 = scmp.ne.s32.totalorder %s156, %s159
      %p165 = scmp.eq.s32.totalorder %s47, 0
      %p166 = por %p164, %p165
      %p167 = scmp.ne.s32.totalorder %s156, %s159
      %p168 = scmp.eq.s32.totalorder %s52, 1
      %p169 = por %p167, %p168
      %p170 = scmp.ne.s32.totalorder %s159, %s160
      %p171 = scmp.eq.s32.totalorder %s52, 0
      %p172 = por %p170, %p171
      %p173 = scmp.ne.s32.totalorder %s159, %s160
      %p174 = scmp.eq.s32.totalorder %s53, 1
      %p175 = por %p173, %p174
      %p177 = scmp.ne.s32.totalorder %s160, %s176
      %p178 = scmp.eq.s32.totalorder %s53, 0
      %p179 = por %p177, %p178
      %s180 = ssub.s32 %s47, %s54
      %p181 = scmp.eq.s32.totalorder %s180, 0
      %s183 = sadd.s32 %s182, 1
      %s184 = scalar_select %p181, %s182, %s183
      %p187 = pneg %p181
      %p188 = scmp.eq.s32.totalorder %s47, 1
      %p189 = por %p187, %p188
      %p190 = scmp.ne.s32.totalorder %s182, %s185
      %p191 = scmp.eq.s32.totalorder %s47, 0
      %p192 = por %p190, %p191
      %p193 = scmp.ne.s32.totalorder %s182, %s185
      %p194 = scmp.eq.s32.totalorder %s52, 1
      %p195 = por %p193, %p194
      %p196 = scmp.ne.s32.totalorder %s185, %s186
      %p197 = scmp.eq.s32.totalorder %s52, 0
      %p198 = por %p196, %p197
      %p199 = scmp.ne.s32.totalorder %s185, %s186
      %p200 = scmp.eq.s32.totalorder %s53, 1
      %p201 = por %p199, %p200
      %p203 = scmp.ne.s32.totalorder %s186, %s202
      %p204 = scmp.eq.s32.totalorder %s53, 0
      %p205 = por %p203, %p204
      %s206 = ssub.s32 %s47, %s54
      %p207 = scmp.eq.s32.totalorder %s206, 0
      %s209 = sadd.s32 %s208, 1
      %s210 = scalar_select %p207, %s208, %s209
      %p213 = pneg %p207
      %p214 = scmp.eq.s32.totalorder %s47, 1
      %p215 = por %p213, %p214
      %p216 = scmp.ne.s32.totalorder %s208, %s211
      %p217 = scmp.eq.s32.totalorder %s47, 0
      %p218 = por %p216, %p217
      %p219 = scmp.ne.s32.totalorder %s208, %s211
      %p220 = scmp.eq.s32.totalorder %s52, 1
      %p221 = por %p219, %p220
      %p222 = scmp.ne.s32.totalorder %s211, %s212
      %p223 = scmp.eq.s32.totalorder %s52, 0
      %p224 = por %p222, %p223
      %p225 = scmp.ne.s32.totalorder %s211, %s212
      %p226 = scmp.eq.s32.totalorder %s53, 1
      %p227 = por %p225, %p226
      %p229 = scmp.ne.s32.totalorder %s212, %s228
      %p230 = scmp.eq.s32.totalorder %s53, 0
      %p231 = por %p229, %p230
      %s232 = ssub.s32 %s47, %s54
      %p233 = scmp.eq.s32.totalorder %s232, 0
      %s235 = sadd.s32 %s234, 1
      %s236 = scalar_select %p233, %s234, %s235
      %p239 = pneg %p233
      %p240 = scmp.eq.s32.totalorder %s47, 1
      %p241 = por %p239, %p240
      %p242 = scmp.ne.s32.totalorder %s234, %s237
      %p243 = scmp.eq.s32.totalorder %s47, 0
      %p244 = por %p242, %p243
      %p245 = scmp.ne.s32.totalorder %s234, %s237
      %p246 = scmp.eq.s32.totalorder %s52, 1
      %p247 = por %p245, %p246
      %p248 = scmp.ne.s32.totalorder %s237, %s238
      %p249 = scmp.eq.s32.totalorder %s52, 0
      %p250 = por %p248, %p249
      %p251 = scmp.ne.s32.totalorder %s237, %s238
      %p252 = scmp.eq.s32.totalorder %s53, 1
      %p253 = por %p251, %p252
      %p255 = scmp.ne.s32.totalorder %s238, %s254
      %p256 = scmp.eq.s32.totalorder %s53, 0
      %p257 = por %p255, %p256
      %s258 = ssub.s32 %s47, %s54
      %p259 = scmp.eq.s32.totalorder %s258, 0
      %s261 = sadd.s32 %s260, 1
      %s262 = scalar_select %p259, %s260, %s261
      %p265 = pneg %p259
      %p266 = scmp.eq.s32.totalorder %s47, 1
      %p267 = por %p265, %p266
      %p268 = scmp.ne.s32.totalorder %s260, %s263
      %p269 = scmp.eq.s32.totalorder %s47, 0
      %p270 = por %p268, %p269
      %p271 = scmp.ne.s32.totalorder %s260, %s263
      %p272 = scmp.eq.s32.totalorder %s52, 1
      %p273 = por %p271, %p272
      %p274 = scmp.ne.s32.totalorder %s263, %s264
      %p275 = scmp.eq.s32.totalorder %s52, 0
      %p276 = por %p274, %p275
      %p277 = scmp.ne.s32.totalorder %s263, %s264
      %p278 = scmp.eq.s32.totalorder %s53, 1
      %p279 = por %p277, %p278
      %p281 = scmp.ne.s32.totalorder %s264, %s280
      %p282 = scmp.eq.s32.totalorder %s53, 0
      %p283 = por %p281, %p282
      %s284 = ssub.s32 %s47, %s54
      %p285 = scmp.eq.s32.totalorder %s284, 0
      %s287 = sadd.s32 %s286, 1
      %s288 = scalar_select %p285, %s286, %s287
      %p291 = pneg %p285
      %p292 = scmp.eq.s32.totalorder %s47, 1
      %p293 = por %p291, %p292
      %p294 = scmp.ne.s32.totalorder %s286, %s289
      %p295 = scmp.eq.s32.totalorder %s47, 0
      %p296 = por %p294, %p295
      %p297 = scmp.ne.s32.totalorder %s286, %s289
      %p298 = scmp.eq.s32.totalorder %s52, 1
      %p299 = por %p297, %p298
      %p300 = scmp.ne.s32.totalorder %s289, %s290
      %p301 = scmp.eq.s32.totalorder %s52, 0
      %p302 = por %p300, %p301
      %p303 = scmp.ne.s32.totalorder %s289, %s290
      %p304 = scmp.eq.s32.totalorder %s53, 1
      %p305 = por %p303, %p304
      %p307 = scmp.ne.s32.totalorder %s290, %s306
      %p308 = scmp.eq.s32.totalorder %s53, 0
      %p309 = por %p307, %p308
      %s310 = ssub.s32 %s47, %s54
      %p311 = scmp.eq.s32.totalorder %s310, 0
      %s313 = sadd.s32 %s312, 1
      %s314 = scalar_select %p311, %s312, %s313
      %p317 = pneg %p311
      %p318 = scmp.eq.s32.totalorder %s47, 1
      %p319 = por %p317, %p318
      %p320 = scmp.ne.s32.totalorder %s312, %s315
      %p321 = scmp.eq.s32.totalorder %s47, 0
      %p322 = por %p320, %p321
      %p323 = scmp.ne.s32.totalorder %s312, %s315
      %p324 = scmp.eq.s32.totalorder %s52, 1
      %p325 = por %p323, %p324
      %p326 = scmp.ne.s32.totalorder %s315, %s316
      %p327 = scmp.eq.s32.totalorder %s52, 0
      %p328 = por %p326, %p327
      %p329 = scmp.ne.s32.totalorder %s315, %s316
      %p330 = scmp.eq.s32.totalorder %s53, 1
      %p331 = por %p329, %p330
      %p333 = scmp.ne.s32.totalorder %s316, %s332
      %p334 = scmp.eq.s32.totalorder %s53, 0
      %p335 = por %p333, %p334
      %s336 = ssub.s32 %s47, %s54
      %p337 = scmp.eq.s32.totalorder %s336, 0
      %s339 = sadd.s32 %s338, 1
      %s340 = scalar_select %p337, %s338, %s339
      %p343 = pneg %p337
      %p344 = scmp.eq.s32.totalorder %s47, 1
      %p345 = por %p343, %p344
      %p346 = scmp.ne.s32.totalorder %s338, %s341
      %p347 = scmp.eq.s32.totalorder %s47, 0
      %p348 = por %p346, %p347
      %p349 = scmp.ne.s32.totalorder %s338, %s341
      %p350 = scmp.eq.s32.totalorder %s52, 1
      %p351 = por %p349, %p350
      %p352 = scmp.ne.s32.totalorder %s341, %s342
      %p353 = scmp.eq.s32.totalorder %s52, 0
      %p354 = por %p352, %p353
      %p355 = scmp.ne.s32.totalorder %s341, %s342
      %p356 = scmp.eq.s32.totalorder %s53, 1
      %p357 = por %p355, %p356
      %p359 = scmp.ne.s32.totalorder %s342, %s358
      %p360 = scmp.eq.s32.totalorder %s53, 0
      %p361 = por %p359, %p360
      %s362 = ssub.s32 %s47, %s54
      %p363 = scmp.eq.s32.totalorder %s362, 0
      %s365 = sadd.s32 %s364, 1
      %s366 = scalar_select %p363, %s364, %s365
      %p369 = pneg %p363
      %p370 = scmp.eq.s32.totalorder %s47, 1
      %p371 = por %p369, %p370
      %p372 = scmp.ne.s32.totalorder %s364, %s367
      %p373 = scmp.eq.s32.totalorder %s47, 0
      %p374 = por %p372, %p373
      %p375 = scmp.ne.s32.totalorder %s364, %s367
      %p376 = scmp.eq.s32.totalorder %s52, 1
      %p377 = por %p375, %p376
      %p378 = scmp.ne.s32.totalorder %s367, %s368
      %p379 = scmp.eq.s32.totalorder %s52, 0
      %p380 = por %p378, %p379
      %p381 = scmp.ne.s32.totalorder %s367, %s368
      %p382 = scmp.eq.s32.totalorder %s53, 1
      %p383 = por %p381, %p382
      %p385 = scmp.ne.s32.totalorder %s368, %s384
      %p386 = scmp.eq.s32.totalorder %s53, 0
      %p387 = por %p385, %p386
      %s389 = sadd.s32 %s388, 1
      %p392 = scmp.eq.s32.totalorder %s47, 1
      %p393 = scmp.ne.s32.totalorder %s388, %s390
      %p394 = scmp.eq.s32.totalorder %s47, 0
      %p395 = por %p393, %p394
      %p396 = scmp.ne.s32.totalorder %s388, %s390
      %p397 = scmp.eq.s32.totalorder %s52, 1
      %p398 = por %p396, %p397
      %p399 = scmp.ne.s32.totalorder %s390, %s391
      %p400 = scmp.eq.s32.totalorder %s52, 0
      %p401 = por %p399, %p400
      %p402 = scmp.ne.s32.totalorder %s390, %s391
      %p403 = scmp.eq.s32.totalorder %s53, 1
      %p404 = por %p402, %p403
      %p406 = scmp.ne.s32.totalorder %s391, %s405
      %p407 = scmp.eq.s32.totalorder %s53, 0
      %p408 = por %p406, %p407
      %s410 = sadd.s32 %s409, 1
      %p413 = scmp.eq.s32.totalorder %s47, 1
      %p414 = scmp.ne.s32.totalorder %s409, %s411
      %p415 = scmp.eq.s32.totalorder %s47, 0
      %p416 = por %p414, %p415
      %p417 = scmp.ne.s32.totalorder %s409, %s411
      %p418 = scmp.eq.s32.totalorder %s52, 1
      %p419 = por %p417, %p418
      %p420 = scmp.ne.s32.totalorder %s411, %s412
      %p421 = scmp.eq.s32.totalorder %s52, 0
      %p422 = por %p420, %p421
      %p423 = scmp.ne.s32.totalorder %s411, %s412
      %p424 = scmp.eq.s32.totalorder %s53, 1
      %p425 = por %p423, %p424
      %p427 = scmp.ne.s32.totalorder %s412, %s426
      %p428 = scmp.eq.s32.totalorder %s53, 0
      %p429 = por %p427, %p428
      %s431 = sadd.s32 %s430, 1
      %p434 = scmp.eq.s32.totalorder %s47, 1
      %p435 = scmp.ne.s32.totalorder %s430, %s432
      %p436 = scmp.eq.s32.totalorder %s47, 0
      %p437 = por %p435, %p436
      %p438 = scmp.ne.s32.totalorder %s430, %s432
      %p439 = scmp.eq.s32.totalorder %s52, 1
      %p440 = por %p438, %p439
      %p441 = scmp.ne.s32.totalorder %s432, %s433
      %p442 = scmp.eq.s32.totalorder %s52, 0
      %p443 = por %p441, %p442
      %p444 = scmp.ne.s32.totalorder %s432, %s433
      %p445 = scmp.eq.s32.totalorder %s53, 1
      %p446 = por %p444, %p445
      %p448 = scmp.ne.s32.totalorder %s433, %s447
      %p449 = scmp.eq.s32.totalorder %s53, 0
      %p450 = por %p448, %p449
      %s452 = sadd.s32 %s451, 1
      %p455 = scmp.eq.s32.totalorder %s47, 1
      %p456 = scmp.ne.s32.totalorder %s451, %s453
      %p457 = scmp.eq.s32.totalorder %s47, 0
      %p458 = por %p456, %p457
      %p459 = scmp.ne.s32.totalorder %s451, %s453
      %p460 = scmp.eq.s32.totalorder %s52, 1
      %p461 = por %p459, %p460
      %p462 = scmp.ne.s32.totalorder %s453, %s454
      %p463 = scmp.eq.s32.totalorder %s52, 0
      %p464 = por %p462, %p463
      %p465 = scmp.ne.s32.totalorder %s453, %s454
      %p466 = scmp.eq.s32.totalorder %s53, 1
      %p467 = por %p465, %p466
      %p469 = scmp.ne.s32.totalorder %s454, %s468
      %p470 = scmp.eq.s32.totalorder %s53, 0
      %p471 = por %p469, %p470
      %s473 = sadd.s32 %s472, 1
      %p476 = scmp.eq.s32.totalorder %s47, 1
      %p477 = scmp.ne.s32.totalorder %s472, %s474
      %p478 = scmp.eq.s32.totalorder %s47, 0
      %p479 = por %p477, %p478
      %p480 = scmp.ne.s32.totalorder %s472, %s474
      %p481 = scmp.eq.s32.totalorder %s52, 1
      %p482 = por %p480, %p481
      %p483 = scmp.ne.s32.totalorder %s474, %s475
      %p484 = scmp.eq.s32.totalorder %s52, 0
      %p485 = por %p483, %p484
      %p486 = scmp.ne.s32.totalorder %s474, %s475
      %p487 = scmp.eq.s32.totalorder %s53, 1
      %p488 = por %p486, %p487
      %p490 = scmp.ne.s32.totalorder %s475, %s489
      %p491 = scmp.eq.s32.totalorder %s53, 0
      %p492 = por %p490, %p491
      %s494 = sadd.s32 %s493, 1
      %p497 = scmp.eq.s32.totalorder %s47, 1
      %p498 = scmp.ne.s32.totalorder %s493, %s495
      %p499 = scmp.eq.s32.totalorder %s47, 0
      %p500 = por %p498, %p499
      %p501 = scmp.ne.s32.totalorder %s493, %s495
      %p502 = scmp.eq.s32.totalorder %s52, 1
      %p503 = por %p501, %p502
      %p504 = scmp.ne.s32.totalorder %s495, %s496
      %p505 = scmp.eq.s32.totalorder %s52, 0
      %p506 = por %p504, %p505
      %p507 = scmp.ne.s32.totalorder %s495, %s496
      %p508 = scmp.eq.s32.totalorder %s53, 1
      %p509 = por %p507, %p508
      %p511 = scmp.ne.s32.totalorder %s496, %s510
      %p512 = scmp.eq.s32.totalorder %s53, 0
      %p513 = por %p511, %p512
      %s515 = sadd.s32 %s514, 1
      %p518 = scmp.eq.s32.totalorder %s47, 1
      %p519 = scmp.ne.s32.totalorder %s514, %s516
      %p520 = scmp.eq.s32.totalorder %s47, 0
      %p521 = por %p519, %p520
      %p522 = scmp.ne.s32.totalorder %s514, %s516
      %p523 = scmp.eq.s32.totalorder %s52, 1
      %p524 = por %p522, %p523
      %p525 = scmp.ne.s32.totalorder %s516, %s517
      %p526 = scmp.eq.s32.totalorder %s52, 0
      %p527 = por %p525, %p526
      %p528 = scmp.ne.s32.totalorder %s516, %s517
      %p529 = scmp.eq.s32.totalorder %s53, 1
      %p530 = por %p528, %p529
      %p532 = scmp.ne.s32.totalorder %s517, %s531
      %p533 = scmp.eq.s32.totalorder %s53, 0
      %p534 = por %p532, %p533
      %s536 = sadd.s32 %s535, 1
      %p539 = scmp.eq.s32.totalorder %s47, 1
      %p540 = scmp.ne.s32.totalorder %s535, %s537
      %p541 = scmp.eq.s32.totalorder %s47, 0
      %p542 = por %p540, %p541
      %p543 = scmp.ne.s32.totalorder %s535, %s537
      %p544 = scmp.eq.s32.totalorder %s52, 1
      %p545 = por %p543, %p544
      %p546 = scmp.ne.s32.totalorder %s537, %s538
      %p547 = scmp.eq.s32.totalorder %s52, 0
      %p548 = por %p546, %p547
      %p549 = scmp.ne.s32.totalorder %s537, %s538
      %p550 = scmp.eq.s32.totalorder %s53, 1
      %p551 = por %p549, %p550
      %p553 = scmp.ne.s32.totalorder %s538, %s552
      %p554 = scmp.eq.s32.totalorder %s53, 0
      %p555 = por %p553, %p554
      %s557 = sadd.s32 %s556, 1
      %p560 = scmp.eq.s32.totalorder %s47, 1
      %p561 = scmp.ne.s32.totalorder %s556, %s558
      %p562 = scmp.eq.s32.totalorder %s47, 0
      %p563 = por %p561, %p562
      %p564 = scmp.ne.s32.totalorder %s556, %s558
      %p565 = scmp.eq.s32.totalorder %s52, 1
      %p566 = por %p564, %p565
      %p567 = scmp.ne.s32.totalorder %s558, %s559
      %p568 = scmp.eq.s32.totalorder %s52, 0
      %p569 = por %p567, %p568
      %p570 = scmp.ne.s32.totalorder %s558, %s559
      %p571 = scmp.eq.s32.totalorder %s53, 1
      %p572 = por %p570, %p571
      %p574 = scmp.ne.s32.totalorder %s559, %s573
      %p575 = scmp.eq.s32.totalorder %s53, 0
      %p576 = por %p574, %p575
      %s578 = sadd.s32 %s577, 1
      %p581 = scmp.eq.s32.totalorder %s47, 1
      %p582 = scmp.ne.s32.totalorder %s577, %s579
      %p583 = scmp.eq.s32.totalorder %s47, 0
      %p584 = por %p582, %p583
      %p585 = scmp.ne.s32.totalorder %s577, %s579
      %p586 = scmp.eq.s32.totalorder %s52, 1
      %p587 = por %p585, %p586
      %p588 = scmp.ne.s32.totalorder %s579, %s580
      %p589 = scmp.eq.s32.totalorder %s52, 0
      %p590 = por %p588, %p589
      %p591 = scmp.ne.s32.totalorder %s579, %s580
      %p592 = scmp.eq.s32.totalorder %s53, 1
      %p593 = por %p591, %p592
      %p595 = scmp.ne.s32.totalorder %s580, %s594
      %p596 = scmp.eq.s32.totalorder %s53, 0
      %p597 = por %p595, %p596
      %p598 = scmp.le.s32.totalorder 1, %s47
      %p599 = scmp.lt.s32.totalorder %s47, 3
      %p600 = pnand %p598, %p599
      %p601 = pneg %p600
      // Predicated region
      $region9: #{tpu_custom_call.1} parent=5 // pred_check
        _
      $region10: #{tpu_custom_call.1} parent=5 // pred_check_branch
        %603 = sbr.rel (%p600) target = $region12
      $region11: #{tpu_custom_call.1} parent=5 // pred_region
        %s604 = ssub.s32 %s47, 1
        // Predicated region
        $region13: #{tpu_custom_call.1} parent=11 // pred_check
          %p605 = pneg %p68
        $region14: #{tpu_custom_call.1} parent=11 // pred_check_branch
          %607 = sbr.rel (%p605) target = $region16
        $region15: #{tpu_custom_call.1} parent=11 // pred_region
          %609 = vsyncadd [#allocation5], 0
          %s610 = sshll.u32 %s0, 4
          %s611 = int_to_ptr.hbm [resolvable:$true] %s610
          %s612 = sshll.u32 [#allocation4], 4
          %s613 = int_to_ptr.vmem [resolvable:$true] %s612
          %618 = dma.hbm_to_vmem [thread:$0]  %s611, 1152, %s613, [#allocation5], 128, 128, 8
        $region16: #{tpu_custom_call.1} parent=11 // pred_fallthru
          _
        // Predicated region
        $region17: #{tpu_custom_call.1} parent=11 // pred_check
          %p619 = pneg %p401
        $region18: #{tpu_custom_call.1} parent=11 // pred_check_branch
          %621 = sbr.rel (%p619) target = $region20
        $region19: #{tpu_custom_call.1} parent=11 // pred_region
          %623 = vsyncadd [#allocation23], 0
          %s624 = sshll.u32 %s13, 4
          %s625 = int_to_ptr.hbm [resolvable:$true] %s624
          %s626 = sshll.u32 [#allocation22], 4
          %s627 = int_to_ptr.vmem [resolvable:$true] %s626
          %632 = dma.hbm_to_vmem [thread:$0]  %s625, 1152, %s627, [#allocation23], 128, 128, 8
        $region20: #{tpu_custom_call.1} parent=11 // pred_fallthru
          _
        // Predicated region
        $region21: #{tpu_custom_call.1} parent=11 // pred_check
          %p633 = pneg %p422
        $region22: #{tpu_custom_call.1} parent=11 // pred_check_branch
          %635 = sbr.rel (%p633) target = $region24
        $region23: #{tpu_custom_call.1} parent=11 // pred_region
          _
        $region24: #{tpu_custom_call.1} parent=11 // pred_fallthru
          _
        // Predicated region
        $region25: #{tpu_custom_call.1} parent=11 // pred_check
          %p636 = pneg %p443
        $region26: #{tpu_custom_call.1} parent=11 // pred_check_branch
          %638 = sbr.rel (%p636) target = $region28
        $region27: #{tpu_custom_call.1} parent=11 // pred_region
          _
        $region28: #{tpu_custom_call.1} parent=11 // pred_fallthru
          _
        // Predicated region
        $region29: #{tpu_custom_call.1} parent=11 // pred_check
          %p639 = pneg %p464
        $region30: #{tpu_custom_call.1} parent=11 // pred_check_branch
          %641 = sbr.rel (%p639) target = $region32
        $region31: #{tpu_custom_call.1} parent=11 // pred_region
          %643 = vsyncadd [#allocation23], 0
          %s644 = sshll.u32 %s16, 4
          %s645 = int_to_ptr.hbm [resolvable:$true] %s644
          %s646 = sshll.u32 [#allocation24], 4
          %s647 = int_to_ptr.vmem [resolvable:$true] %s646
          %652 = dma.hbm_to_vmem [thread:$0]  %s645, 4096, %s647, [#allocation23], 256, 256, 16
        $region32: #{tpu_custom_call.1} parent=11 // pred_fallthru
          _
        // Predicated region
        $region33: #{tpu_custom_call.1} parent=11 // pred_check
          %p653 = pneg %p485
        $region34: #{tpu_custom_call.1} parent=11 // pred_check_branch
          %655 = sbr.rel (%p653) target = $region36
        $region35: #{tpu_custom_call.1} parent=11 // pred_region
          _
        $region36: #{tpu_custom_call.1} parent=11 // pred_fallthru
          _
        // Predicated region
        $region37: #{tpu_custom_call.1} parent=11 // pred_check
          %p656 = pneg %p506
        $region38: #{tpu_custom_call.1} parent=11 // pred_check_branch
          %658 = sbr.rel (%p656) target = $region40
        $region39: #{tpu_custom_call.1} parent=11 // pred_region
          %660 = vsyncadd [#allocation26], 0
          %s661 = sshll.u32 %s18, 4
          %s662 = int_to_ptr.hbm [resolvable:$true] %s661
          %s663 = sshll.u32 [#allocation25], 4
          %s664 = int_to_ptr.vmem [resolvable:$true] %s663
          %669 = dma.hbm_to_vmem [thread:$0]  %s662, 4096, %s664, [#allocation26], 64, 64, 4
        $region40: #{tpu_custom_call.1} parent=11 // pred_fallthru
          _
        // Predicated region
        $region41: #{tpu_custom_call.1} parent=11 // pred_check
          %p670 = pneg %p527
        $region42: #{tpu_custom_call.1} parent=11 // pred_check_branch
          %672 = sbr.rel (%p670) target = $region44
        $region43: #{tpu_custom_call.1} parent=11 // pred_region
          _
        $region44: #{tpu_custom_call.1} parent=11 // pred_fallthru
          _
        // Predicated region
        $region45: #{tpu_custom_call.1} parent=11 // pred_check
          %p673 = pneg %p548
        $region46: #{tpu_custom_call.1} parent=11 // pred_check_branch
          %675 = sbr.rel (%p673) target = $region48
        $region47: #{tpu_custom_call.1} parent=11 // pred_region
          _
        $region48: #{tpu_custom_call.1} parent=11 // pred_fallthru
          _
        // Predicated region
        $region49: #{tpu_custom_call.1} parent=11 // pred_check
          %p676 = pneg %p569
        $region50: #{tpu_custom_call.1} parent=11 // pred_check_branch
          %678 = sbr.rel (%p676) target = $region52
        $region51: #{tpu_custom_call.1} parent=11 // pred_region
          _
        $region52: #{tpu_custom_call.1} parent=11 // pred_fallthru
          _
      $region12: #{tpu_custom_call.1} parent=5 // pred_fallthru
        _
      %p679 = scmp.lt.s32.totalorder %s47, 2
      // Predicated region
      $region53: #{tpu_custom_call.1} parent=5 // pred_check
        %p680 = pneg %p679
      $region54: #{tpu_custom_call.1} parent=5 // pred_check_branch
        %682 = sbr.rel (%p680) target = $region56
      $region55: #{tpu_custom_call.1} parent=5 // pred_region
        // Predicated region
        $region57: #{tpu_custom_call.1} parent=55 // pred_check
          %p683 = pneg %p88
        $region58: #{tpu_custom_call.1} parent=55 // pred_check_branch
          %685 = sbr.rel (%p683) target = $region60
        $region59: #{tpu_custom_call.1} parent=55 // pred_region
          %s686 = sand.u32 %s47, 1
          %s687 = scalar_lea.sflag [#allocation8], %s686
          %s688 = sand.u32 %s78, 1
          %s689 = smul.addr %s688, 192
          %s690 = scalar_lea.vmem [#allocation7], %s689
          %692 = vsyncadd %s687, 0
          %s693 = smul.addr %s47, 48
          %s694 = smul.addr %s693, 4
          %s695 = scalar_lea.hbm %s1, %s694
          %s696 = sshll.u32 %s695, 4
          %s697 = int_to_ptr.hbm [resolvable:$true] %s696
          %s698 = sshll.u32 %s690, 4
          %s699 = int_to_ptr.vmem [resolvable:$true] %s698
          %704 = dma.hbm_to_vmem [thread:$0]  %s697, 3072, %s699, %s687, 192, 192, 12
        $region60: #{tpu_custom_call.1} parent=55 // pred_fallthru
          _
        // Predicated region
        $region61: #{tpu_custom_call.1} parent=55 // pred_check
          %p705 = pneg %p114
        $region62: #{tpu_custom_call.1} parent=55 // pred_check_branch
          %707 = sbr.rel (%p705) target = $region64
        $region63: #{tpu_custom_call.1} parent=55 // pred_region
          %s708 = sand.u32 %s47, 1
          %s709 = scalar_lea.sflag [#allocation8], %s708
          %s710 = sand.u32 %s104, 1
          %s711 = smul.addr %s710, 3
          %s712 = scalar_lea.vmem [#allocation9], %s711
          %714 = vsyncadd %s709, 0
          %s715 = smul.addr %s47, 3
          %s716 = scalar_lea.hbm %s2, %s715
          %s718 = sshll.u32 %s716, 4
          %s719 = int_to_ptr.hbm [resolvable:$true] %s718
          %s720 = sshll.u32 %s712, 4
          %s721 = int_to_ptr.vmem [resolvable:$true] %s720
          %723 = dma.hbm_to_vmem [thread:$0]  %s719, 48, %s721, %s709
        $region64: #{tpu_custom_call.1} parent=55 // pred_fallthru
          _
        // Predicated region
        $region65: #{tpu_custom_call.1} parent=55 // pred_check
          %p724 = pneg %p140
        $region66: #{tpu_custom_call.1} parent=55 // pred_check_branch
          %726 = sbr.rel (%p724) target = $region68
        $region67: #{tpu_custom_call.1} parent=55 // pred_region
          %s727 = sand.u32 %s47, 1
          %s728 = scalar_lea.sflag [#allocation11], %s727
          %s729 = sand.u32 %s130, 1
          %s730 = smul.addr %s729, 64
          %s731 = scalar_lea.vmem [#allocation10], %s730
          %733 = vsyncadd %s728, 0
          %s734 = smul.addr %s47, 16
          %s735 = smul.addr %s734, 4
          %s736 = scalar_lea.hbm %s3, %s735
          %s737 = sshll.u32 %s736, 4
          %s738 = int_to_ptr.hbm [resolvable:$true] %s737
          %s739 = sshll.u32 %s731, 4
          %s740 = int_to_ptr.vmem [resolvable:$true] %s739
          %745 = dma.hbm_to_vmem [thread:$0]  %s738, 1024, %s740, %s728, 64, 64, 4
        $region68: #{tpu_custom_call.1} parent=55 // pred_fallthru
          _
        // Predicated region
        $region69: #{tpu_custom_call.1} parent=55 // pred_check
          %p746 = pneg %p166
        $region70: #{tpu_custom_call.1} parent=55 // pred_check_branch
          %748 = sbr.rel (%p746) target = $region72
        $region71: #{tpu_custom_call.1} parent=55 // pred_region
          %p749 = scmp.lt.s32.totalorder %s47, 1
          %s750 = scalar_select %p749, %s47, 1
          %s751 = scalar_lea.vmem %s4, %s750
        $region72: #{tpu_custom_call.1} parent=55 // pred_fallthru
          _
        // Predicated region
        $region73: #{tpu_custom_call.1} parent=55 // pred_check
          %p752 = pneg %p192
        $region74: #{tpu_custom_call.1} parent=55 // pred_check_branch
          %754 = sbr.rel (%p752) target = $region76
        $region75: #{tpu_custom_call.1} parent=55 // pred_region
          %s755 = sand.u32 %s47, 1
          %s756 = scalar_lea.sflag [#allocation11], %s755
          %s757 = sand.u32 %s182, 1
          %s758 = scalar_lea.vmem [#allocation12], %s757
          %760 = vsyncadd %s756, 0
          %s761 = scalar_lea.hbm %s5, %s47
          %s763 = sshll.u32 %s761, 4
          %s764 = int_to_ptr.hbm [resolvable:$true] %s763
          %s765 = sshll.u32 %s758, 4
          %s766 = int_to_ptr.vmem [resolvable:$true] %s765
          %768 = dma.hbm_to_vmem [thread:$0]  %s764, 16, %s766, %s756
        $region76: #{tpu_custom_call.1} parent=55 // pred_fallthru
          _
        // Predicated region
        $region77: #{tpu_custom_call.1} parent=55 // pred_check
          %p769 = pneg %p218
        $region78: #{tpu_custom_call.1} parent=55 // pred_check_branch
          %771 = sbr.rel (%p769) target = $region80
        $region79: #{tpu_custom_call.1} parent=55 // pred_region
          %s772 = sand.u32 %s47, 1
          %s773 = scalar_lea.sflag [#allocation14], %s772
          %s774 = sand.u32 %s208, 1
          %s775 = scalar_lea.vmem [#allocation13], %s774
          %777 = vsyncadd %s773, 0
          %s778 = scalar_lea.hbm %s6, %s47
          %s780 = sshll.u32 %s778, 4
          %s781 = int_to_ptr.hbm [resolvable:$true] %s780
          %s782 = sshll.u32 %s775, 4
          %s783 = int_to_ptr.vmem [resolvable:$true] %s782
          %785 = dma.hbm_to_vmem [thread:$0]  %s781, 16, %s783, %s773
        $region80: #{tpu_custom_call.1} parent=55 // pred_fallthru
          _
        // Predicated region
        $region81: #{tpu_custom_call.1} parent=55 // pred_check
          %p786 = pneg %p244
        $region82: #{tpu_custom_call.1} parent=55 // pred_check_branch
          %788 = sbr.rel (%p786) target = $region84
        $region83: #{tpu_custom_call.1} parent=55 // pred_region
          %s789 = sand.u32 %s47, 1
          %s790 = scalar_lea.sflag [#allocation14], %s789
          %s791 = sand.u32 %s234, 1
          %s792 = smul.addr %s791, 128
          %s793 = scalar_lea.vmem [#allocation15], %s792
          %795 = vsyncadd %s790, 0
          %s796 = smul.addr %s47, 32
          %s797 = smul.addr %s796, 4
          %s798 = scalar_lea.hbm %s7, %s797
          %s799 = sshll.u32 %s798, 4
          %s800 = int_to_ptr.hbm [resolvable:$true] %s799
          %s801 = sshll.u32 %s793, 4
          %s802 = int_to_ptr.vmem [resolvable:$true] %s801
          %807 = dma.hbm_to_vmem [thread:$0]  %s800, 2048, %s802, %s790, 128, 128, 8
        $region84: #{tpu_custom_call.1} parent=55 // pred_fallthru
          _
        // Predicated region
        $region85: #{tpu_custom_call.1} parent=55 // pred_check
          %p808 = pneg %p270
        $region86: #{tpu_custom_call.1} parent=55 // pred_check_branch
          %810 = sbr.rel (%p808) target = $region88
        $region87: #{tpu_custom_call.1} parent=55 // pred_region
          %p811 = scmp.lt.s32.totalorder %s47, 1
          %s812 = scalar_select %p811, %s47, 1
          %s813 = smul.addr %s812, 2
          %s814 = scalar_lea.vmem %s8, %s813
        $region88: #{tpu_custom_call.1} parent=55 // pred_fallthru
          _
        // Predicated region
        $region89: #{tpu_custom_call.1} parent=55 // pred_check
          %p815 = pneg %p296
        $region90: #{tpu_custom_call.1} parent=55 // pred_check_branch
          %817 = sbr.rel (%p815) target = $region92
        $region91: #{tpu_custom_call.1} parent=55 // pred_region
          %s818 = sand.u32 %s47, 1
          %s819 = scalar_lea.sflag [#allocation17], %s818
          %s820 = sand.u32 %s286, 1
          %s821 = smul.addr %s820, 128
          %s822 = scalar_lea.vmem [#allocation16], %s821
          %824 = vsyncadd %s819, 0
          %s825 = smul.addr %s47, 32
          %s826 = smul.addr %s825, 4
          %s827 = scalar_lea.hbm %s9, %s826
          %s828 = sshll.u32 %s827, 4
          %s829 = int_to_ptr.hbm [resolvable:$true] %s828
          %s830 = sshll.u32 %s822, 4
          %s831 = int_to_ptr.vmem [resolvable:$true] %s830
          %836 = dma.hbm_to_vmem [thread:$0]  %s829, 2048, %s831, %s819, 64, 64, 4
        $region92: #{tpu_custom_call.1} parent=55 // pred_fallthru
          _
        // Predicated region
        $region93: #{tpu_custom_call.1} parent=55 // pred_check
          %p837 = pneg %p322
        $region94: #{tpu_custom_call.1} parent=55 // pred_check_branch
          %839 = sbr.rel (%p837) target = $region96
        $region95: #{tpu_custom_call.1} parent=55 // pred_region
          %s840 = sand.u32 %s47, 1
          %s841 = scalar_lea.sflag [#allocation17], %s840
          %s842 = sand.u32 %s312, 1
          %s843 = scalar_lea.vmem [#allocation18], %s842
          %845 = vsyncadd %s841, 0
          %s846 = scalar_lea.hbm %s10, %s47
          %s848 = sshll.u32 %s846, 4
          %s849 = int_to_ptr.hbm [resolvable:$true] %s848
          %s850 = sshll.u32 %s843, 4
          %s851 = int_to_ptr.vmem [resolvable:$true] %s850
          %853 = dma.hbm_to_vmem [thread:$0]  %s849, 16, %s851, %s841
        $region96: #{tpu_custom_call.1} parent=55 // pred_fallthru
          _
        // Predicated region
        $region97: #{tpu_custom_call.1} parent=55 // pred_check
          %p854 = pneg %p348
        $region98: #{tpu_custom_call.1} parent=55 // pred_check_branch
          %856 = sbr.rel (%p854) target = $region100
        $region99: #{tpu_custom_call.1} parent=55 // pred_region
          %s857 = sand.u32 %s47, 1
          %s858 = scalar_lea.sflag [#allocation20], %s857
          %s859 = sand.u32 %s338, 1
          %s860 = scalar_lea.vmem [#allocation19], %s859
          %862 = vsyncadd %s858, 0
          %s863 = scalar_lea.hbm %s11, %s47
          %s865 = sshll.u32 %s863, 4
          %s866 = int_to_ptr.hbm [resolvable:$true] %s865
          %s867 = sshll.u32 %s860, 4
          %s868 = int_to_ptr.vmem [resolvable:$true] %s867
          %870 = dma.hbm_to_vmem [thread:$0]  %s866, 16, %s868, %s858
        $region100: #{tpu_custom_call.1} parent=55 // pred_fallthru
          _
        // Predicated region
        $region101: #{tpu_custom_call.1} parent=55 // pred_check
          %p871 = pneg %p374
        $region102: #{tpu_custom_call.1} parent=55 // pred_check_branch
          %873 = sbr.rel (%p871) target = $region104
        $region103: #{tpu_custom_call.1} parent=55 // pred_region
          %s874 = sand.u32 %s47, 1
          %s875 = scalar_lea.sflag [#allocation20], %s874
          %s876 = sand.u32 %s364, 1
          %s877 = scalar_lea.vmem [#allocation21], %s876
          %879 = vsyncadd %s875, 0
          %s880 = scalar_lea.hbm %s12, %s47
          %s882 = sshll.u32 %s880, 4
          %s883 = int_to_ptr.hbm [resolvable:$true] %s882
          %s884 = sshll.u32 %s877, 4
          %s885 = int_to_ptr.vmem [resolvable:$true] %s884
          %887 = dma.hbm_to_vmem [thread:$0]  %s883, 16, %s885, %s875
        $region104: #{tpu_custom_call.1} parent=55 // pred_fallthru
          _
      $region56: #{tpu_custom_call.1} parent=5 // pred_fallthru
        _
      %p888 = scmp.le.s32.totalorder 1, %s47
      %p889 = scmp.lt.s32.totalorder %s47, 3
      %p890 = pnand %p888, %p889
      %p891 = pneg %p890
      // Predicated region
      $region105: #{tpu_custom_call.1} parent=5 // pred_check
        _
      $region106: #{tpu_custom_call.1} parent=5 // pred_check_branch
        %893 = sbr.rel (%p890) target = $region108
      $region107: #{tpu_custom_call.1} parent=5 // pred_region
        %s894 = ssub.s32 %s47, 1
        // Predicated region
        $region109: #{tpu_custom_call.1} parent=107 // pred_check
          %p895 = pneg %p68
        $region110: #{tpu_custom_call.1} parent=107 // pred_check_branch
          %897 = sbr.rel (%p895) target = $region112
        $region111: #{tpu_custom_call.1} parent=107 // pred_region
          %899 = dma.done [#allocation5], 1152
        $region112: #{tpu_custom_call.1} parent=107 // pred_fallthru
          _
        %s900 = sand.u32 %s52, 1
        %s901 = scalar_lea.sflag [#allocation8], %s900
        %s902 = sand.u32 %s81, 1
        %s903 = smul.addr %s902, 192
        %s904 = scalar_lea.vmem [#allocation7], %s903
        // Predicated region
        $region113: #{tpu_custom_call.1} parent=107 // pred_check
          %p905 = pneg %p94
        $region114: #{tpu_custom_call.1} parent=107 // pred_check_branch
          %907 = sbr.rel (%p905) target = $region116
        $region115: #{tpu_custom_call.1} parent=107 // pred_region
          %909 = dma.done %s901, 3072
        $region116: #{tpu_custom_call.1} parent=107 // pred_fallthru
          _
        %s910 = sand.u32 %s52, 1
        %s911 = scalar_lea.sflag [#allocation8], %s910
        %s912 = sand.u32 %s107, 1
        %s913 = smul.addr %s912, 3
        %s914 = scalar_lea.vmem [#allocation9], %s913
        // Predicated region
        $region117: #{tpu_custom_call.1} parent=107 // pred_check
          %p915 = pneg %p120
        $region118: #{tpu_custom_call.1} parent=107 // pred_check_branch
          %917 = sbr.rel (%p915) target = $region120
        $region119: #{tpu_custom_call.1} parent=107 // pred_region
          %919 = dma.done %s911, 48
        $region120: #{tpu_custom_call.1} parent=107 // pred_fallthru
          _
        %s920 = sand.u32 %s52, 1
        %s921 = scalar_lea.sflag [#allocation11], %s920
        %s922 = sand.u32 %s133, 1
        %s923 = smul.addr %s922, 64
        %s924 = scalar_lea.vmem [#allocation10], %s923
        // Predicated region
        $region121: #{tpu_custom_call.1} parent=107 // pred_check
          %p925 = pneg %p146
        $region122: #{tpu_custom_call.1} parent=107 // pred_check_branch
          %927 = sbr.rel (%p925) target = $region124
        $region123: #{tpu_custom_call.1} parent=107 // pred_region
          %929 = dma.done %s921, 1024
        $region124: #{tpu_custom_call.1} parent=107 // pred_fallthru
          _
        %s930 = sand.u32 %s52, 1
        %s931 = scalar_lea.sflag [#allocation11], %s930
        %s932 = sand.u32 %s185, 1
        %s933 = scalar_lea.vmem [#allocation12], %s932
        // Predicated region
        $region125: #{tpu_custom_call.1} parent=107 // pred_check
          %p934 = pneg %p198
        $region126: #{tpu_custom_call.1} parent=107 // pred_check_branch
          %936 = sbr.rel (%p934) target = $region128
        $region127: #{tpu_custom_call.1} parent=107 // pred_region
          %938 = dma.done %s931, 16
        $region128: #{tpu_custom_call.1} parent=107 // pred_fallthru
          _
        %s939 = sand.u32 %s52, 1
        %s940 = scalar_lea.sflag [#allocation14], %s939
        %s941 = sand.u32 %s211, 1
        %s942 = scalar_lea.vmem [#allocation13], %s941
        // Predicated region
        $region129: #{tpu_custom_call.1} parent=107 // pred_check
          %p943 = pneg %p224
        $region130: #{tpu_custom_call.1} parent=107 // pred_check_branch
          %945 = sbr.rel (%p943) target = $region132
        $region131: #{tpu_custom_call.1} parent=107 // pred_region
          %947 = dma.done %s940, 16
        $region132: #{tpu_custom_call.1} parent=107 // pred_fallthru
          _
        %s948 = sand.u32 %s52, 1
        %s949 = scalar_lea.sflag [#allocation14], %s948
        %s950 = sand.u32 %s237, 1
        %s951 = smul.addr %s950, 128
        %s952 = scalar_lea.vmem [#allocation15], %s951
        // Predicated region
        $region133: #{tpu_custom_call.1} parent=107 // pred_check
          %p953 = pneg %p250
        $region134: #{tpu_custom_call.1} parent=107 // pred_check_branch
          %955 = sbr.rel (%p953) target = $region136
        $region135: #{tpu_custom_call.1} parent=107 // pred_region
          %957 = dma.done %s949, 2048
        $region136: #{tpu_custom_call.1} parent=107 // pred_fallthru
          _
        %s958 = sand.u32 %s52, 1
        %s959 = scalar_lea.sflag [#allocation17], %s958
        %s960 = sand.u32 %s289, 1
        %s961 = smul.addr %s960, 128
        %s962 = scalar_lea.vmem [#allocation16], %s961
        // Predicated region
        $region137: #{tpu_custom_call.1} parent=107 // pred_check
          %p963 = pneg %p302
        $region138: #{tpu_custom_call.1} parent=107 // pred_check_branch
          %965 = sbr.rel (%p963) target = $region140
        $region139: #{tpu_custom_call.1} parent=107 // pred_region
          %967 = dma.done %s959, 2048
        $region140: #{tpu_custom_call.1} parent=107 // pred_fallthru
          _
        %s968 = sand.u32 %s52, 1
        %s969 = scalar_lea.sflag [#allocation17], %s968
        %s970 = sand.u32 %s315, 1
        %s971 = scalar_lea.vmem [#allocation18], %s970
        // Predicated region
        $region141: #{tpu_custom_call.1} parent=107 // pred_check
          %p972 = pneg %p328
        $region142: #{tpu_custom_call.1} parent=107 // pred_check_branch
          %974 = sbr.rel (%p972) target = $region144
        $region143: #{tpu_custom_call.1} parent=107 // pred_region
          %976 = dma.done %s969, 16
        $region144: #{tpu_custom_call.1} parent=107 // pred_fallthru
          _
        %s977 = sand.u32 %s52, 1
        %s978 = scalar_lea.sflag [#allocation20], %s977
        %s979 = sand.u32 %s341, 1
        %s980 = scalar_lea.vmem [#allocation19], %s979
        // Predicated region
        $region145: #{tpu_custom_call.1} parent=107 // pred_check
          %p981 = pneg %p354
        $region146: #{tpu_custom_call.1} parent=107 // pred_check_branch
          %983 = sbr.rel (%p981) target = $region148
        $region147: #{tpu_custom_call.1} parent=107 // pred_region
          %985 = dma.done %s978, 16
        $region148: #{tpu_custom_call.1} parent=107 // pred_fallthru
          _
        %s986 = sand.u32 %s52, 1
        %s987 = scalar_lea.sflag [#allocation20], %s986
        %s988 = sand.u32 %s367, 1
        %s989 = scalar_lea.vmem [#allocation21], %s988
        // Predicated region
        $region149: #{tpu_custom_call.1} parent=107 // pred_check
          %p990 = pneg %p380
        $region150: #{tpu_custom_call.1} parent=107 // pred_check_branch
          %992 = sbr.rel (%p990) target = $region152
        $region151: #{tpu_custom_call.1} parent=107 // pred_region
          %994 = dma.done %s987, 16
        $region152: #{tpu_custom_call.1} parent=107 // pred_fallthru
          _
        // Predicated region
        $region153: #{tpu_custom_call.1} parent=107 // pred_check
          %p995 = pneg %p401
        $region154: #{tpu_custom_call.1} parent=107 // pred_check_branch
          %997 = sbr.rel (%p995) target = $region156
        $region155: #{tpu_custom_call.1} parent=107 // pred_region
          %999 = dma.done [#allocation23], 1152
        $region156: #{tpu_custom_call.1} parent=107 // pred_fallthru
          _
        // Predicated region
        $region157: #{tpu_custom_call.1} parent=107 // pred_check
          %p1000 = pneg %p464
        $region158: #{tpu_custom_call.1} parent=107 // pred_check_branch
          %1002 = sbr.rel (%p1000) target = $region160
        $region159: #{tpu_custom_call.1} parent=107 // pred_region
          %1004 = dma.done [#allocation23], 4096
        $region160: #{tpu_custom_call.1} parent=107 // pred_fallthru
          _
        // Predicated region
        $region161: #{tpu_custom_call.1} parent=107 // pred_check
          %p1005 = pneg %p506
        $region162: #{tpu_custom_call.1} parent=107 // pred_check_branch
          %1007 = sbr.rel (%p1005) target = $region164
        $region163: #{tpu_custom_call.1} parent=107 // pred_region
          %1009 = dma.done [#allocation26], 4096
        $region164: #{tpu_custom_call.1} parent=107 // pred_fallthru
          _
        %p1010 = pneg %p68
        %p1011 = pneg %p65
        %s1012 = sand.u32 %s52, 1
        %s1013 = scalar_lea.sflag [#allocation8], %s1012
        %s1014 = sand.u32 %s81, 1
        %s1015 = smul.addr %s1014, 192
        %s1016 = scalar_lea.vmem [#allocation7], %s1015
        %p1017 = pneg %p94
        %p1018 = pneg %p91
        %s1019 = sand.u32 %s52, 1
        %s1020 = scalar_lea.sflag [#allocation8], %s1019
        %s1021 = sand.u32 %s107, 1
        %s1022 = smul.addr %s1021, 3
        %s1023 = scalar_lea.vmem [#allocation9], %s1022
        %p1024 = pneg %p120
        %p1025 = pneg %p117
        %s1026 = sand.u32 %s52, 1
        %s1027 = scalar_lea.sflag [#allocation11], %s1026
        %s1028 = sand.u32 %s133, 1
        %s1029 = smul.addr %s1028, 64
        %s1030 = scalar_lea.vmem [#allocation10], %s1029
        %p1031 = pneg %p146
        %p1032 = pneg %p143
        %p1033 = scmp.lt.s32.totalorder %s52, 1
        %s1034 = scalar_select %p1033, %s52, 1
        %s1035 = scalar_lea.vmem %s4, %s1034
        %p1036 = pneg %p172
        %p1037 = pneg %p169
        %s1038 = sand.u32 %s52, 1
        %s1039 = scalar_lea.sflag [#allocation11], %s1038
        %s1040 = sand.u32 %s185, 1
        %s1041 = scalar_lea.vmem [#allocation12], %s1040
        %p1042 = pneg %p198
        %p1043 = pneg %p195
        %s1044 = sand.u32 %s52, 1
        %s1045 = scalar_lea.sflag [#allocation14], %s1044
        %s1046 = sand.u32 %s211, 1
        %s1047 = scalar_lea.vmem [#allocation13], %s1046
        %p1048 = pneg %p224
        %p1049 = pneg %p221
        %s1050 = sand.u32 %s52, 1
        %s1051 = scalar_lea.sflag [#allocation14], %s1050
        %s1052 = sand.u32 %s237, 1
        %s1053 = smul.addr %s1052, 128
        %s1054 = scalar_lea.vmem [#allocation15], %s1053
        %p1055 = pneg %p250
        %p1056 = pneg %p247
        %p1057 = scmp.lt.s32.totalorder %s52, 1
        %s1058 = scalar_select %p1057, %s52, 1
        %s1059 = smul.addr %s1058, 2
        %s1060 = scalar_lea.vmem %s8, %s1059
        %p1061 = pneg %p276
        %p1062 = pneg %p273
        %s1063 = sand.u32 %s52, 1
        %s1064 = scalar_lea.sflag [#allocation17], %s1063
        %s1065 = sand.u32 %s289, 1
        %s1066 = smul.addr %s1065, 128
        %s1067 = scalar_lea.vmem [#allocation16], %s1066
        %p1068 = pneg %p302
        %p1069 = pneg %p299
        %s1070 = sand.u32 %s52, 1
        %s1071 = scalar_lea.sflag [#allocation17], %s1070
        %s1072 = sand.u32 %s315, 1
        %s1073 = scalar_lea.vmem [#allocation18], %s1072
        %p1074 = pneg %p328
        %p1075 = pneg %p325
        %s1076 = sand.u32 %s52, 1
        %s1077 = scalar_lea.sflag [#allocation20], %s1076
        %s1078 = sand.u32 %s341, 1
        %s1079 = scalar_lea.vmem [#allocation19], %s1078
        %p1080 = pneg %p354
        %p1081 = pneg %p351
        %s1082 = sand.u32 %s52, 1
        %s1083 = scalar_lea.sflag [#allocation20], %s1082
        %s1084 = sand.u32 %s367, 1
        %s1085 = scalar_lea.vmem [#allocation21], %s1084
        %p1086 = pneg %p380
        %p1087 = pneg %p377
        %p1088 = pneg %p401
        %p1089 = pneg %p398
        %p1090 = pneg %p422
        %p1091 = pneg %p419
        %p1092 = pneg %p443
        %p1093 = pneg %p440
        %p1094 = pneg %p464
        %p1095 = pneg %p461
        %p1096 = pneg %p485
        %p1097 = pneg %p482
        %p1098 = pneg %p506
        %p1099 = pneg %p503
        %p1100 = pneg %p527
        %p1101 = pneg %p524
        %p1102 = pneg %p548
        %p1103 = pneg %p545
        %p1104 = pneg %p569
        %p1105 = pneg %p566
        %p1106 = pneg %p590
        %p1107 = pneg %p587
        %p1108 = scmp.lt.s32.totalorder %s52, 1
        %s1109 = scalar_select %p1108, %s52, 1
        %s1110 = scalar_lea.vmem %s4, %s1109
        %p1111 = scmp.lt.s32.totalorder %s52, 1
        %s1112 = scalar_select %p1111, %s52, 1
        %s1113 = smul.addr %s1112, 2
        %s1114 = scalar_lea.vmem %s8, %s1113
        %p1116 = scmp.eq.s32.totalorder %s52, 0
        // Predicated region
        $region165: #{tpu_custom_call.1} parent=107 // pred_check
          %p1117 = pneg %p1116
        $region166: #{tpu_custom_call.1} parent=107 // pred_check_branch
          %1119 = sbr.rel (%p1117) target = $region168
        $region167: #{tpu_custom_call.1} parent=107 // pred_region
          %v1120 = vld [vmem:[#allocation4] sm:$0xff]
          %v1121 = vld [vmem:[#allocation4 + $0x8] sm:$0xff]
          %v1122 = vld [vmem:[#allocation4 + $0x10] sm:$0xff]
          %v1123 = vld [vmem:[#allocation4 + $0x18] sm:$0xff]
          %v1124 = vld [vmem:[#allocation4 + $0x20] sm:$0xff]
          %v1125 = vld [vmem:[#allocation4 + $0x28] sm:$0xff]
          %v1126 = vld [vmem:[#allocation4 + $0x30] sm:$0xff]
          %v1127 = vld [vmem:[#allocation4 + $0x38] sm:$0xff]
          %v1128 = vld [vmem:[#allocation4 + $0x40] sm:$0xff]
          %1129 = vst [vmem:[#allocation2] sm:$0xff] %v1120
          %1130 = vst [vmem:[#allocation2 + $0x8] sm:$0xff] %v1121
          %1131 = vst [vmem:[#allocation2 + $0x10] sm:$0xff] %v1122
          %1132 = vst [vmem:[#allocation2 + $0x18] sm:$0xff] %v1123
          %1133 = vst [vmem:[#allocation2 + $0x20] sm:$0xff] %v1124
          %1134 = vst [vmem:[#allocation2 + $0x28] sm:$0xff] %v1125
          %1135 = vst [vmem:[#allocation2 + $0x30] sm:$0xff] %v1126
          %1136 = vst [vmem:[#allocation2 + $0x38] sm:$0xff] %v1127
          %1137 = vst [vmem:[#allocation2 + $0x40] sm:$0xff] %v1128
          %1138 = vst [vmem:[#allocation3] sm:$0xff] 0.0
          %1139 = vst [vmem:[#allocation3 + $0x8] sm:$0xff] 0.0
          %1140 = vst [vmem:[#allocation3 + $0x10] sm:$0xff] 0.0
          %1141 = vst [vmem:[#allocation3 + $0x18] sm:$0xff] 0.0
          %1142 = vst [vmem:[#allocation3 + $0x20] sm:$0xff] 0.0
          %1143 = vst [vmem:[#allocation3 + $0x28] sm:$0xff] 0.0
          %1144 = vst [vmem:[#allocation3 + $0x30] sm:$0xff] 0.0
          %1145 = vst [vmem:[#allocation3 + $0x38] sm:$0xff] 0.0
          %1146 = vst [vmem:[#allocation3 + $0x40] sm:$0xff] 0.0
          %1147 = vst [vmem:[#allocation3 + $0x48] sm:$0xff] 0.0
          %1148 = vst [vmem:[#allocation3 + $0x50] sm:$0xff] 0.0
          %1149 = vst [vmem:[#allocation3 + $0x58] sm:$0xff] 0.0
          %1150 = vst [vmem:[#allocation3 + $0x60] sm:$0xff] 0.0
          %1151 = vst [vmem:[#allocation3 + $0x68] sm:$0xff] 0.0
          %1152 = vst [vmem:[#allocation3 + $0x70] sm:$0xff] 0.0
          %1153 = vst [vmem:[#allocation3 + $0x78] sm:$0xff] 0.0
          %1154 = vst [vmem:[#allocation3 + $0x80] sm:$0xff] 0.0
          %1155 = vst [vmem:[#allocation3 + $0x88] sm:$0xff] 0.0
          %1156 = vst [vmem:[#allocation3 + $0x90] sm:$0xff] 0.0
          %1157 = vst [vmem:[#allocation3 + $0x98] sm:$0xff] 0.0
          %1158 = vst [vmem:[#allocation3 + $0xa0] sm:$0xff] 0.0
          %1159 = vst [vmem:[#allocation3 + $0xa8] sm:$0xff] 0.0
        $region168: #{tpu_custom_call.1} parent=107 // pred_fallthru
          _
        %v1160 = vld [vmem:[#allocation2] sm:$0xff]
        %v1161 = vld [vmem:[#allocation2 + $0x8] sm:$0xff]
        %v1162 = vld [vmem:[#allocation2 + $0x10] sm:$0xff]
        %v1163 = vld [vmem:[#allocation2 + $0x18] sm:$0xff]
        %v1164 = vld [vmem:[#allocation2 + $0x20] sm:$0xff]
        %v1165 = vld [vmem:[#allocation2 + $0x28] sm:$0xff]
        %v1166 = vld [vmem:[#allocation2 + $0x30] sm:$0xff]
        %v1167 = vld [vmem:[#allocation2 + $0x38] sm:$0xff]
        %v1168 = vld [vmem:[#allocation2 + $0x40] sm:$0xff]
        %v1169 = vpack.c.bf16 %v1161, %v1160
        %v1170 = vpack.c.bf16 %v1163, %v1162
        %v1171 = vpack.c.bf16 %v1165, %v1164
        %v1172 = vpack.c.bf16 %v1167, %v1166
        %v1173 = vpack.c.bf16 %v1168, %v1168
        %v1174 = vld [vmem:[%s904] sm:$0xff]
        %v1175 = vld [vmem:[%s904 + $0x8] sm:$0xf]
        %v1176 = vld [vmem:[%s904 + $0xc] sm:$0xff]
        %v1177 = vld [vmem:[%s904 + $0x14] sm:$0xf]
        %v1178 = vld [vmem:[%s904 + $0x18] sm:$0xff]
        %v1179 = vld [vmem:[%s904 + $0x20] sm:$0xf]
        %v1180 = vld [vmem:[%s904 + $0x24] sm:$0xff]
        %v1181 = vld [vmem:[%s904 + $0x2c] sm:$0xf]
        %v1182 = vld [vmem:[%s904 + $0x30] sm:$0xff]
        %v1183 = vld [vmem:[%s904 + $0x38] sm:$0xf]
        %v1184 = vld [vmem:[%s904 + $0x3c] sm:$0xff]
        %v1185 = vld [vmem:[%s904 + $0x44] sm:$0xf]
        %v1186 = vld [vmem:[%s904 + $0x48] sm:$0xff]
        %v1187 = vld [vmem:[%s904 + $0x50] sm:$0xf]
        %v1188 = vld [vmem:[%s904 + $0x54] sm:$0xff]
        %v1189 = vld [vmem:[%s904 + $0x5c] sm:$0xf]
        %v1190 = vld [vmem:[%s904 + $0x60] sm:$0xff]
        %v1191 = vld [vmem:[%s904 + $0x68] sm:$0xf]
        %v1192 = vld [vmem:[%s904 + $0x6c] sm:$0xff]
        %v1193 = vld [vmem:[%s904 + $0x74] sm:$0xf]
        %v1194 = vld [vmem:[%s904 + $0x78] sm:$0xff]
        %v1195 = vld [vmem:[%s904 + $0x80] sm:$0xf]
        %v1196 = vld [vmem:[%s904 + $0x84] sm:$0xff]
        %v1197 = vld [vmem:[%s904 + $0x8c] sm:$0xf]
        %v1198 = vld [vmem:[%s904 + $0x90] sm:$0xff]
        %v1199 = vld [vmem:[%s904 + $0x98] sm:$0xf]
        %v1200 = vld [vmem:[%s904 + $0x9c] sm:$0xff]
        %v1201 = vld [vmem:[%s904 + $0xa4] sm:$0xf]
        %v1202 = vld [vmem:[%s904 + $0xa8] sm:$0xff]
        %v1203 = vld [vmem:[%s904 + $0xb0] sm:$0xf]
        %v1204 = vld [vmem:[%s904 + $0xb4] sm:$0xff]
        %v1205 = vld [vmem:[%s904 + $0xbc] sm:$0xf]
        %v1206 = vld [vmem:[%s914] sm:$0x7]
        %v1208 = vperm.slane %v1206, 0
        %v1209 = vperm.slane %v1206, 1
        %v1210 = vperm.slane %v1206, 2
        %v1246 = vunpack.c.l.b16 %v1174
        %v1247 = vunpack.c.h.b16 %v1174
        %v1248 = vunpack.c.l.b16 %v1175
        %v1249 = vunpack.c.l.b16 %v1176
        %v1250 = vunpack.c.h.b16 %v1176
        %v1251 = vunpack.c.l.b16 %v1177
        %v1252 = vunpack.c.l.b16 %v1178
        %v1253 = vunpack.c.h.b16 %v1178
        %v1254 = vunpack.c.l.b16 %v1179
        %v1255 = vunpack.c.l.b16 %v1180
        %v1256 = vunpack.c.h.b16 %v1180
        %v1257 = vunpack.c.l.b16 %v1181
        %v1258 = vunpack.c.l.b16 %v1182
        %v1259 = vunpack.c.h.b16 %v1182
        %v1260 = vunpack.c.l.b16 %v1183
        %v1261 = vunpack.c.l.b16 %v1184
        %v1262 = vunpack.c.h.b16 %v1184
        %v1263 = vunpack.c.l.b16 %v1185
        %v1264 = vunpack.c.l.b16 %v1186
        %v1265 = vunpack.c.h.b16 %v1186
        %v1266 = vunpack.c.l.b16 %v1187
        %v1267 = vunpack.c.l.b16 %v1188
        %v1268 = vunpack.c.h.b16 %v1188
        %v1269 = vunpack.c.l.b16 %v1189
        %v1270 = vunpack.c.l.b16 %v1190
        %v1271 = vunpack.c.h.b16 %v1190
        %v1272 = vunpack.c.l.b16 %v1191
        %v1273 = vunpack.c.l.b16 %v1192
        %v1274 = vunpack.c.h.b16 %v1192
        %v1275 = vunpack.c.l.b16 %v1193
        %v1276 = vunpack.c.l.b16 %v1194
        %v1277 = vunpack.c.h.b16 %v1194
        %v1278 = vunpack.c.l.b16 %v1195
        %v1279 = vunpack.c.l.b16 %v1196
        %v1280 = vunpack.c.h.b16 %v1196
        %v1281 = vunpack.c.l.b16 %v1197
        %v1282 = vunpack.c.l.b16 %v1198
        %v1283 = vunpack.c.h.b16 %v1198
        %v1284 = vunpack.c.l.b16 %v1199
        %v1285 = vunpack.c.l.b16 %v1200
        %v1286 = vunpack.c.h.b16 %v1200
        %v1287 = vunpack.c.l.b16 %v1201
        %v1288 = vunpack.c.l.b16 %v1202
        %v1289 = vunpack.c.h.b16 %v1202
        %v1290 = vunpack.c.l.b16 %v1203
        %v1291 = vunpack.c.l.b16 %v1204
        %v1292 = vunpack.c.h.b16 %v1204
        %v1293 = vunpack.c.l.b16 %v1205
        %v1294 = vpack.c.b16 %v1249, %v1246
        %v1295 = vpack.c.b16 %v1250, %v1247
        %v1296 = vpack.c.b16 %v1251, %v1248
        %v1297 = vpack.c.b16 %v1255, %v1252
        %v1298 = vpack.c.b16 %v1256, %v1253
        %v1299 = vpack.c.b16 %v1257, %v1254
        %v1300 = vpack.c.b16 %v1261, %v1258
        %v1301 = vpack.c.b16 %v1262, %v1259
        %v1302 = vpack.c.b16 %v1263, %v1260
        %v1303 = vpack.c.b16 %v1267, %v1264
        %v1304 = vpack.c.b16 %v1268, %v1265
        %v1305 = vpack.c.b16 %v1269, %v1266
        %v1306 = vpack.c.b16 %v1273, %v1270
        %v1307 = vpack.c.b16 %v1274, %v1271
        %v1308 = vpack.c.b16 %v1275, %v1272
        %v1309 = vpack.c.b16 %v1279, %v1276
        %v1310 = vpack.c.b16 %v1280, %v1277
        %v1311 = vpack.c.b16 %v1281, %v1278
        %v1312 = vpack.c.b16 %v1285, %v1282
        %v1313 = vpack.c.b16 %v1286, %v1283
        %v1314 = vpack.c.b16 %v1287, %v1284
        %v1315 = vpack.c.b16 %v1291, %v1288
        %v1316 = vpack.c.b16 %v1292, %v1289
        %v1317 = vpack.c.b16 %v1293, %v1290
        %1342 = vmatpush.bf16.msra.mxu0 %v1315
        %1343 = vmatpush.bf16.msra.mxu0 %v1312
        %1344 = vmatpush.bf16.msra.mxu0 %v1309
        %1345 = vmatpush.bf16.msra.mxu0 %v1306
        %1346 = vmatpush.bf16.msra.mxu0 %v1303
        %1347 = vmatpush.bf16.msra.mxu0 %v1300
        %1348 = vmatpush.bf16.msra.mxu0 %v1297
        %1349 = vmatpush.bf16.msra.mxu0 %v1294
        %1350 = vmatmul.bf16.gmra.mxu0 %v1169
        %v1351 = vpop.f32.mrf.mxu0
        %v1352 = vadd.f32 %v1208, %v1351
        %v1353 = vpop.f32.mrf.mxu0
        %v1354 = vadd.f32 %v1208, %v1353
        %1355 = vmatmul.bf16.gmra.mxu0 %v1170
        %v1356 = vpop.f32.mrf.mxu0
        %v1357 = vadd.f32 %v1208, %v1356
        %v1358 = vpop.f32.mrf.mxu0
        %v1359 = vadd.f32 %v1208, %v1358
        %1360 = vmatmul.bf16.gmra.mxu0 %v1171
        %v1361 = vpop.f32.mrf.mxu0
        %v1362 = vadd.f32 %v1208, %v1361
        %v1363 = vpop.f32.mrf.mxu0
        %v1364 = vadd.f32 %v1208, %v1363
        %1365 = vmatmul.bf16.gmra.mxu0 %v1172
        %v1366 = vpop.f32.mrf.mxu0
        %v1367 = vadd.f32 %v1208, %v1366
        %v1368 = vpop.f32.mrf.mxu0
        %v1369 = vadd.f32 %v1208, %v1368
        %1370 = vmatmul.bf16.gmra.mxu0 %v1173
        %v1371 = vpop.f32.mrf.mxu0
        %v1372 = vadd.f32 %v1208, %v1371
        %v1373 = vpop.f32.mrf.mxu0
        %1374 = vdwg.mxu0
        %1375 = vmatpush.bf16.msra.mxu0 %v1316
        %1376 = vmatpush.bf16.msra.mxu0 %v1313
        %1377 = vmatpush.bf16.msra.mxu0 %v1310
        %1378 = vmatpush.bf16.msra.mxu0 %v1307
        %1379 = vmatpush.bf16.msra.mxu0 %v1304
        %1380 = vmatpush.bf16.msra.mxu0 %v1301
        %1381 = vmatpush.bf16.msra.mxu0 %v1298
        %1382 = vmatpush.bf16.msra.mxu0 %v1295
        %1383 = vmatmul.bf16.gmra.mxu0 %v1169
        %v1384 = vpop.f32.mrf.mxu0
        %v1385 = vadd.f32 %v1209, %v1384
        %v1386 = vpop.f32.mrf.mxu0
        %v1387 = vadd.f32 %v1209, %v1386
        %1388 = vmatmul.bf16.gmra.mxu0 %v1170
        %v1389 = vpop.f32.mrf.mxu0
        %v1390 = vadd.f32 %v1209, %v1389
        %v1391 = vpop.f32.mrf.mxu0
        %v1392 = vadd.f32 %v1209, %v1391
        %1393 = vmatmul.bf16.gmra.mxu0 %v1171
        %v1394 = vpop.f32.mrf.mxu0
        %v1395 = vadd.f32 %v1209, %v1394
        %v1396 = vpop.f32.mrf.mxu0
        %v1397 = vadd.f32 %v1209, %v1396
        %1398 = vmatmul.bf16.gmra.mxu0 %v1172
        %v1399 = vpop.f32.mrf.mxu0
        %v1400 = vadd.f32 %v1209, %v1399
        %v1401 = vpop.f32.mrf.mxu0
        %v1402 = vadd.f32 %v1209, %v1401
        %1403 = vmatmul.bf16.gmra.mxu0 %v1173
        %v1404 = vpop.f32.mrf.mxu0
        %v1405 = vadd.f32 %v1209, %v1404
        %v1406 = vpop.f32.mrf.mxu0
        %1407 = vdwg.mxu0
        %1408 = vmatpush.bf16.msra.mxu0 %v1317
        %1409 = vmatpush.bf16.msra.mxu0 %v1314
        %1410 = vmatpush.bf16.msra.mxu0 %v1311
        %1411 = vmatpush.bf16.msra.mxu0 %v1308
        %1412 = vmatpush.bf16.msra.mxu0 %v1305
        %1413 = vmatpush.bf16.msra.mxu0 %v1302
        %1414 = vmatpush.bf16.msra.mxu0 %v1299
        %1415 = vmatpush.bf16.msra.mxu0 %v1296
        %1416 = vmatmul.bf16.gmra.mxu0 %v1169
        %v1417 = vpop.f32.mrf.mxu0
        %v1418 = vadd.f32 %v1210, %v1417
        %v1419 = vpop.f32.mrf.mxu0
        %v1420 = vadd.f32 %v1210, %v1419
        %1421 = vmatmul.bf16.gmra.mxu0 %v1170
        %v1422 = vpop.f32.mrf.mxu0
        %v1423 = vadd.f32 %v1210, %v1422
        %v1424 = vpop.f32.mrf.mxu0
        %v1425 = vadd.f32 %v1210, %v1424
        %1426 = vmatmul.bf16.gmra.mxu0 %v1171
        %v1427 = vpop.f32.mrf.mxu0
        %v1428 = vadd.f32 %v1210, %v1427
        %v1429 = vpop.f32.mrf.mxu0
        %v1430 = vadd.f32 %v1210, %v1429
        %1431 = vmatmul.bf16.gmra.mxu0 %v1172
        %v1432 = vpop.f32.mrf.mxu0
        %v1433 = vadd.f32 %v1210, %v1432
        %v1434 = vpop.f32.mrf.mxu0
        %v1435 = vadd.f32 %v1210, %v1434
        %1436 = vmatmul.bf16.gmra.mxu0 %v1173
        %v1437 = vpop.f32.mrf.mxu0
        %v1438 = vadd.f32 %v1210, %v1437
        %v1439 = vpop.f32.mrf.mxu0
        %1440 = vdwg.mxu0
        %v1441 = vmul.f32 %v1352, 0.17677669
        %v1442 = vmul.f32 %v1354, 0.17677669
        %v1443 = vmul.f32 %v1357, 0.17677669
        %v1444 = vmul.f32 %v1359, 0.17677669
        %v1445 = vmul.f32 %v1362, 0.17677669
        %v1446 = vmul.f32 %v1364, 0.17677669
        %v1447 = vmul.f32 %v1367, 0.17677669
        %v1448 = vmul.f32 %v1369, 0.17677669
        %v1449 = vmul.f32 %v1372, 0.17677669
        %1450 = vst [vmem:[#allocation3 + $0x10] sm:$0xff] %v1385
        %1451 = vst [vmem:[#allocation3 + $0x18] sm:$0xff] %v1418
        %1452 = vst [vmem:[#allocation3 + $0x20] sm:$0xff] %v1387
        %1453 = vst [vmem:[#allocation3 + $0x28] sm:$0xff] %v1420
        %1454 = vst [vmem:[#allocation3 + $0x30] sm:$0xff] %v1390
        %1455 = vst [vmem:[#allocation3 + $0x38] sm:$0xff] %v1423
        %1456 = vst [vmem:[#allocation3 + $0x40] sm:$0xff] %v1392
        %1457 = vst [vmem:[#allocation3 + $0x48] sm:$0xff] %v1425
        %1458 = vst [vmem:[#allocation3 + $0x50] sm:$0xff] %v1395
        %1459 = vst [vmem:[#allocation3 + $0x58] sm:$0xff] %v1428
        %1460 = vst [vmem:[#allocation3 + $0x60] sm:$0xff] %v1397
        %1461 = vst [vmem:[#allocation3 + $0x68] sm:$0xff] %v1430
        %1462 = vst [vmem:[#allocation3 + $0x70] sm:$0xff] %v1400
        %1463 = vst [vmem:[#allocation3 + $0x78] sm:$0xff] %v1433
        %1464 = vst [vmem:[#allocation3 + $0x80] sm:$0xff] %v1402
        %1465 = vst [vmem:[#allocation3 + $0x88] sm:$0xff] %v1435
        %1466 = vst [vmem:[#allocation3 + $0x90] sm:$0xff] %v1405
        %1467 = vst [vmem:[#allocation3 + $0x98] sm:$0xff] %v1438
        %v1468 = vld [vmem:[%s14] sm:$0xf]
        %v1469 = vld [vmem:[%s14 + $0x4] sm:$0xf]
        %v1470 = vld [vmem:[%s14 + $0x8] sm:$0xf]
        %v1471 = vld [vmem:[%s14 + $0xc] sm:$0xf]
        %v1472 = vld [vmem:[%s14 + $0x10] sm:$0xf]
        %v1473 = vld [vmem:[%s14 + $0x14] sm:$0xf]
        %v1474 = vld [vmem:[%s14 + $0x18] sm:$0xf]
        %v1475 = vld [vmem:[%s14 + $0x1c] sm:$0xf]
        %v1476 = vld [vmem:[%s14 + $0x20] sm:$0xf]
        %v1477 = vld [vmem:[%s14 + $0x24] sm:$0xf]
        %v1478 = vld [vmem:[%s14 + $0x28] sm:$0xf]
        %v1479 = vld [vmem:[%s14 + $0x2c] sm:$0xf]
        %v1480 = vld [vmem:[%s14 + $0x30] sm:$0xf]
        %v1481 = vld [vmem:[%s14 + $0x34] sm:$0xf]
        %v1482 = vld [vmem:[%s14 + $0x38] sm:$0xf]
        %v1483 = vld [vmem:[%s14 + $0x3c] sm:$0xf]
        %v1484 = vld [vmem:[%s15] sm:$0x3]
        %v1485 = vld [vmem:[#allocation3 + $0x10] sm:$0xff]
        %v1486 = vld [vmem:[#allocation3 + $0x20] sm:$0xff]
        %v1487 = vld [vmem:[#allocation3 + $0x30] sm:$0xff]
        %v1488 = vld [vmem:[#allocation3 + $0x40] sm:$0xff]
        %v1489 = vld [vmem:[#allocation3 + $0x50] sm:$0xff]
        %v1490 = vld [vmem:[#allocation3 + $0x60] sm:$0xff]
        %v1491 = vld [vmem:[#allocation3 + $0x70] sm:$0xff]
        %v1492 = vld [vmem:[#allocation3 + $0x80] sm:$0xff]
        %v1493 = vld [vmem:[#allocation3 + $0x90] sm:$0xff]
        %v1494 = vmul.f32 %v1441, %v1485
        %v1495 = vmul.f32 %v1442, %v1486
        %v1496 = vmul.f32 %v1443, %v1487
        %v1497 = vmul.f32 %v1444, %v1488
        %v1498 = vmul.f32 %v1445, %v1489
        %v1499 = vmul.f32 %v1446, %v1490
        %v1500 = vmul.f32 %v1447, %v1491
        %v1501 = vmul.f32 %v1448, %v1492
        %v1502 = vmul.f32 %v1449, %v1493
        %v1503 = vpack.c.bf16 %v1495, %v1494
        %v1504 = vpack.c.bf16 %v1497, %v1496
        %v1505 = vpack.c.bf16 %v1499, %v1498
        %v1506 = vpack.c.bf16 %v1501, %v1500
        %v1507 = vpack.c.bf16 %v1502, %v1502
        %v1524 = vunpack.c.l.b16 %v1468
        %v1525 = vunpack.c.l.b16 %v1469
        %v1526 = vunpack.c.l.b16 %v1470
        %v1527 = vunpack.c.l.b16 %v1471
        %v1528 = vunpack.c.l.b16 %v1472
        %v1529 = vunpack.c.l.b16 %v1473
        %v1530 = vunpack.c.l.b16 %v1474
        %v1531 = vunpack.c.l.b16 %v1475
        %v1532 = vunpack.c.l.b16 %v1476
        %v1533 = vunpack.c.l.b16 %v1477
        %v1534 = vunpack.c.l.b16 %v1478
        %v1535 = vunpack.c.l.b16 %v1479
        %v1536 = vunpack.c.l.b16 %v1480
        %v1537 = vunpack.c.l.b16 %v1481
        %v1538 = vunpack.c.l.b16 %v1482
        %v1539 = vunpack.c.l.b16 %v1483
        %v1540 = vpack.c.b16 %v1525, %v1524
        %v1541 = vpack.c.b16 %v1527, %v1526
        %v1542 = vpack.c.b16 %v1529, %v1528
        %v1543 = vpack.c.b16 %v1531, %v1530
        %v1544 = vpack.c.b16 %v1533, %v1532
        %v1545 = vpack.c.b16 %v1535, %v1534
        %v1546 = vpack.c.b16 %v1537, %v1536
        %v1547 = vpack.c.b16 %v1539, %v1538
        %1556 = vmatpush.bf16.msra.mxu0 %v1547
        %1557 = vmatpush.bf16.msra.mxu0 %v1546
        %1558 = vmatpush.bf16.msra.mxu0 %v1545
        %1559 = vmatpush.bf16.msra.mxu0 %v1544
        %1560 = vmatpush.bf16.msra.mxu0 %v1543
        %1561 = vmatpush.bf16.msra.mxu0 %v1542
        %1562 = vmatpush.bf16.msra.mxu0 %v1541
        %1563 = vmatpush.bf16.msra.mxu0 %v1540
        %1564 = vmatmul.bf16.gmra.mxu0 %v1503
        %v1565 = vpop.f32.mrf.mxu0
        %v1566 = vadd.f32 0.0, %v1565
        %v1567 = vpop.f32.mrf.mxu0
        %v1568 = vadd.f32 0.0, %v1567
        %1569 = vmatmul.bf16.gmra.mxu0 %v1504
        %v1570 = vpop.f32.mrf.mxu0
        %v1571 = vadd.f32 0.0, %v1570
        %v1572 = vpop.f32.mrf.mxu0
        %v1573 = vadd.f32 0.0, %v1572
        %1574 = vmatmul.bf16.gmra.mxu0 %v1505
        %v1575 = vpop.f32.mrf.mxu0
        %v1576 = vadd.f32 0.0, %v1575
        %v1577 = vpop.f32.mrf.mxu0
        %v1578 = vadd.f32 0.0, %v1577
        %1579 = vmatmul.bf16.gmra.mxu0 %v1506
        %v1580 = vpop.f32.mrf.mxu0
        %v1581 = vadd.f32 0.0, %v1580
        %v1582 = vpop.f32.mrf.mxu0
        %v1583 = vadd.f32 0.0, %v1582
        %1584 = vmatmul.bf16.gmra.mxu0 %v1507
        %v1585 = vpop.f32.mrf.mxu0
        %v1586 = vadd.f32 0.0, %v1585
        %v1587 = vpop.f32.mrf.mxu0
        %1588 = vdwg.mxu0
        %v1589 = vld [vmem:[#allocation22] sm:$0xff]
        %v1590 = vld [vmem:[#allocation22 + $0x8] sm:$0xff]
        %v1591 = vld [vmem:[#allocation22 + $0x10] sm:$0xff]
        %v1592 = vld [vmem:[#allocation22 + $0x18] sm:$0xff]
        %v1593 = vld [vmem:[#allocation22 + $0x20] sm:$0xff]
        %v1594 = vld [vmem:[#allocation22 + $0x28] sm:$0xff]
        %v1595 = vld [vmem:[#allocation22 + $0x30] sm:$0xff]
        %v1596 = vld [vmem:[#allocation22 + $0x38] sm:$0xff]
        %v1597 = vld [vmem:[#allocation22 + $0x40] sm:$0xff]
        %vm1598 = vcmp.lt.s32.totalorder %v1589, 1
        %vm1599 = vcmp.lt.s32.totalorder %v1590, 1
        %vm1600 = vcmp.lt.s32.totalorder %v1591, 1
        %vm1601 = vcmp.lt.s32.totalorder %v1592, 1
        %vm1602 = vcmp.lt.s32.totalorder %v1593, 1
        %vm1603 = vcmp.lt.s32.totalorder %v1594, 1
        %vm1604 = vcmp.lt.s32.totalorder %v1595, 1
        %vm1605 = vcmp.lt.s32.totalorder %v1596, 1
        %vm1606 = vcmp.lt.s32.totalorder %v1597, 1
        %v1607 = vld [vmem:[#allocation3 + $0x10] sm:$0xfe]
        %v1608 = vld [vmem:[#allocation3 + $0x20] sm:$0xff]
        %v1609 = vld [vmem:[#allocation3 + $0x30] sm:$0xff]
        %v1610 = vld [vmem:[#allocation3 + $0x40] sm:$0xff]
        %v1611 = vld [vmem:[#allocation3 + $0x50] sm:$0xff]
        %v1612 = vld [vmem:[#allocation3 + $0x60] sm:$0xff]
        %v1613 = vld [vmem:[#allocation3 + $0x70] sm:$0xff]
        %v1614 = vld [vmem:[#allocation3 + $0x80] sm:$0xff]
        %v1615 = vld [vmem:[#allocation3 + $0x90] sm:$0xff]
        %v1616 = vld [vmem:[#allocation3 + $0xa0] sm:$0x1]
        %v1617 = vld [vmem:[#allocation3] sm:$0x80]
        %v1618 = vld [vmem:[#allocation3 + $0x90] sm:$0x7f]
        %vm1629 = vcmask 1046528
        %v1630 = vrot.slane %v1607, 1
        %v1631 = vrot.slane %v1608, 1
        %v1632 = vsel %vm1629, %v1630, %v1631
        %v1633 = vrot.slane %v1609, 1
        %v1634 = vsel %vm1629, %v1631, %v1633
        %v1635 = vrot.slane %v1610, 1
        %v1636 = vsel %vm1629, %v1633, %v1635
        %v1637 = vrot.slane %v1611, 1
        %v1638 = vsel %vm1629, %v1635, %v1637
        %v1639 = vrot.slane %v1612, 1
        %v1640 = vsel %vm1629, %v1637, %v1639
        %v1641 = vrot.slane %v1613, 1
        %v1642 = vsel %vm1629, %v1639, %v1641
        %v1643 = vrot.slane %v1614, 1
        %v1644 = vsel %vm1629, %v1641, %v1643
        %v1645 = vrot.slane %v1615, 1
        %v1646 = vsel %vm1629, %v1643, %v1645
        %v1647 = vrot.slane %v1616, 1
        %v1648 = vsel %vm1629, %v1645, %v1647
        %vm1668 = vcmask 1040384
        %v1669 = vrot.slane %v1617, 7
        %v1670 = vrot.slane %v1485, 7
        %v1671 = vsel %vm1668, %v1669, %v1670
        %v1672 = vrot.slane %v1486, 7
        %v1673 = vsel %vm1668, %v1670, %v1672
        %v1674 = vrot.slane %v1487, 7
        %v1675 = vsel %vm1668, %v1672, %v1674
        %v1676 = vrot.slane %v1488, 7
        %v1677 = vsel %vm1668, %v1674, %v1676
        %v1678 = vrot.slane %v1489, 7
        %v1679 = vsel %vm1668, %v1676, %v1678
        %v1680 = vrot.slane %v1490, 7
        %v1681 = vsel %vm1668, %v1678, %v1680
        %v1682 = vrot.slane %v1491, 7
        %v1683 = vsel %vm1668, %v1680, %v1682
        %v1684 = vrot.slane %v1492, 7
        %v1685 = vsel %vm1668, %v1682, %v1684
        %v1686 = vrot.slane %v1618, 7
        %v1687 = vsel %vm1668, %v1684, %v1686
        %v1697 = vsel %vm1598, %v1632, %v1671
        %v1698 = vsel %vm1599, %v1634, %v1673
        %v1699 = vsel %vm1600, %v1636, %v1675
        %v1700 = vsel %vm1601, %v1638, %v1677
        %v1701 = vsel %vm1602, %v1640, %v1679
        %v1702 = vsel %vm1603, %v1642, %v1681
        %v1703 = vsel %vm1604, %v1644, %v1683
        %v1704 = vsel %vm1605, %v1646, %v1685
        %v1705 = vsel %vm1606, %v1648, %v1687
        %v1706 = vmul.f32 %v1441, %v1697
        %v1707 = vmul.f32 %v1442, %v1698
        %v1708 = vmul.f32 %v1443, %v1699
        %v1709 = vmul.f32 %v1444, %v1700
        %v1710 = vmul.f32 %v1445, %v1701
        %v1711 = vmul.f32 %v1446, %v1702
        %v1712 = vmul.f32 %v1447, %v1703
        %v1713 = vmul.f32 %v1448, %v1704
        %v1714 = vmul.f32 %v1449, %v1705
        %v1715 = vpack.c.bf16 %v1707, %v1706
        %v1716 = vpack.c.bf16 %v1709, %v1708
        %v1717 = vpack.c.bf16 %v1711, %v1710
        %v1718 = vpack.c.bf16 %v1713, %v1712
        %v1719 = vpack.c.bf16 %v1714, %v1714
        %1720 = vmatpush.bf16.msra.mxu0 %v1547
        %1721 = vmatpush.bf16.msra.mxu0 %v1546
        %1722 = vmatpush.bf16.msra.mxu0 %v1545
        %1723 = vmatpush.bf16.msra.mxu0 %v1544
        %1724 = vmatpush.bf16.msra.mxu0 %v1543
        %1725 = vmatpush.bf16.msra.mxu0 %v1542
        %1726 = vmatpush.bf16.msra.mxu0 %v1541
        %1727 = vmatpush.bf16.msra.mxu0 %v1540
        %1728 = vmatmul.bf16.gmra.mxu0 %v1715
        %v1729 = vpop.f32.mrf.mxu0
        %v1730 = vadd.f32 0.0, %v1729
        %v1731 = vpop.f32.mrf.mxu0
        %v1732 = vadd.f32 0.0, %v1731
        %1733 = vmatmul.bf16.gmra.mxu0 %v1716
        %v1734 = vpop.f32.mrf.mxu0
        %v1735 = vadd.f32 0.0, %v1734
        %v1736 = vpop.f32.mrf.mxu0
        %v1737 = vadd.f32 0.0, %v1736
        %1738 = vmatmul.bf16.gmra.mxu0 %v1717
        %v1739 = vpop.f32.mrf.mxu0
        %v1740 = vadd.f32 0.0, %v1739
        %v1741 = vpop.f32.mrf.mxu0
        %v1742 = vadd.f32 0.0, %v1741
        %1743 = vmatmul.bf16.gmra.mxu0 %v1718
        %v1744 = vpop.f32.mrf.mxu0
        %v1745 = vadd.f32 0.0, %v1744
        %v1746 = vpop.f32.mrf.mxu0
        %v1747 = vadd.f32 0.0, %v1746
        %1748 = vmatmul.bf16.gmra.mxu0 %v1719
        %v1749 = vpop.f32.mrf.mxu0
        %v1750 = vadd.f32 0.0, %v1749
        %v1751 = vpop.f32.mrf.mxu0
        %1752 = vdwg.mxu0
        %v1753 = vmax.f32 %v1566, %v1730
        %v1754 = vmax.f32 %v1568, %v1732
        %v1755 = vmax.f32 %v1571, %v1735
        %v1756 = vmax.f32 %v1573, %v1737
        %v1757 = vmax.f32 %v1576, %v1740
        %v1758 = vmax.f32 %v1578, %v1742
        %v1759 = vmax.f32 %v1581, %v1745
        %v1760 = vmax.f32 %v1583, %v1747
        %v1761 = vmax.f32 %v1586, %v1750
        %v1762 = vsub.f32 %v1566, %v1753
        %v1763 = vsub.f32 %v1568, %v1754
        %v1764 = vsub.f32 %v1571, %v1755
        %v1765 = vsub.f32 %v1573, %v1756
        %v1766 = vsub.f32 %v1576, %v1757
        %v1767 = vsub.f32 %v1578, %v1758
        %v1768 = vsub.f32 %v1581, %v1759
        %v1769 = vsub.f32 %v1583, %v1760
        %v1770 = vsub.f32 %v1586, %v1761
        %v1771 = vmul.f32 %v1762, 1.442695
        %v1772 = vpow.pop %v1771
        %v1773 = vmul.f32 %v1763, 1.442695
        %v1774 = vpow.pop %v1773
        %v1775 = vmul.f32 %v1764, 1.442695
        %v1776 = vpow.pop %v1775
        %v1777 = vmul.f32 %v1765, 1.442695
        %v1778 = vpow.pop %v1777
        %v1779 = vmul.f32 %v1766, 1.442695
        %v1780 = vpow.pop %v1779
        %v1781 = vmul.f32 %v1767, 1.442695
        %v1782 = vpow.pop %v1781
        %v1783 = vmul.f32 %v1768, 1.442695
        %v1784 = vpow.pop %v1783
        %v1785 = vmul.f32 %v1769, 1.442695
        %v1786 = vpow.pop %v1785
        %v1787 = vmul.f32 %v1770, 1.442695
        %v1788 = vpow.pop %v1787
        %v1789 = vadd.f32 %v1772, 0.0
        %v1790 = vadd.f32 %v1774, 0.0
        %v1791 = vadd.f32 %v1776, 0.0
        %v1792 = vadd.f32 %v1778, 0.0
        %v1793 = vadd.f32 %v1780, 0.0
        %v1794 = vadd.f32 %v1782, 0.0
        %v1795 = vadd.f32 %v1784, 0.0
        %v1796 = vadd.f32 %v1786, 0.0
        %v1797 = vadd.f32 %v1788, 0.0
        %v1798 = vld [vmem:[#allocation3 + $0x18] sm:$0xff]
        %v1799 = vld [vmem:[#allocation3 + $0x28] sm:$0xff]
        %v1800 = vld [vmem:[#allocation3 + $0x38] sm:$0xff]
        %v1801 = vld [vmem:[#allocation3 + $0x48] sm:$0xff]
        %v1802 = vld [vmem:[#allocation3 + $0x58] sm:$0xff]
        %v1803 = vld [vmem:[#allocation3 + $0x68] sm:$0xff]
        %v1804 = vld [vmem:[#allocation3 + $0x78] sm:$0xff]
        %v1805 = vld [vmem:[#allocation3 + $0x88] sm:$0xff]
        %v1806 = vld [vmem:[#allocation3 + $0x98] sm:$0xff]
        %v1807 = vpack.c.bf16 %v1774, %v1772
        %v1808 = vpack.c.bf16 %v1778, %v1776
        %v1809 = vpack.c.bf16 %v1782, %v1780
        %v1810 = vpack.c.bf16 %v1786, %v1784
        %v1811 = vpack.c.bf16 %v1788, %v1788
        %vm1812 = vcmask 31744
        %v1814 = vsel %vm1812, %v1807, 0
        %v1817 = vsel %vm1812, %v1808, 0
        %v1820 = vsel %vm1812, %v1809, 0
        %v1823 = vsel %vm1812, %v1810, 0
        %v1826 = vsel %vm1812, %v1811, 0
        %vm1828 = vcmask 1041408
        %v1830 = vsel %vm1828, %v1484, 0
        %1832 = vmatpush.bf16.msra.mxu0 0
        %1833 = vmatpush.bf16.msra.mxu0 0
        %1834 = vmatpush.bf16.msra.mxu0 0
        %1835 = vmatpush.bf16.msra.mxu0 0
        %1836 = vmatpush.bf16.msra.mxu0 0
        %1837 = vmatpush.bf16.msra.mxu0 0
        %1838 = vmatpush.bf16.msra.mxu0 0
        %1839 = vmatpush.bf16.msra.mxu0 %v1830
        %1840 = vmatmul.bf16.gmra.mxu0 %v1814
        %v1841 = vpop.f32.mrf.mxu0
        %v1842 = vadd.f32 0.0, %v1841
        %v1843 = vpop.f32.mrf.mxu0
        %v1844 = vadd.f32 0.0, %v1843
        %1845 = vmatmul.bf16.gmra.mxu0 %v1817
        %v1846 = vpop.f32.mrf.mxu0
        %v1847 = vadd.f32 0.0, %v1846
        %v1848 = vpop.f32.mrf.mxu0
        %v1849 = vadd.f32 0.0, %v1848
        %1850 = vmatmul.bf16.gmra.mxu0 %v1820
        %v1851 = vpop.f32.mrf.mxu0
        %v1852 = vadd.f32 0.0, %v1851
        %v1853 = vpop.f32.mrf.mxu0
        %v1854 = vadd.f32 0.0, %v1853
        %1855 = vmatmul.bf16.gmra.mxu0 %v1823
        %v1856 = vpop.f32.mrf.mxu0
        %v1857 = vadd.f32 0.0, %v1856
        %v1858 = vpop.f32.mrf.mxu0
        %v1859 = vadd.f32 0.0, %v1858
        %1860 = vmatmul.bf16.gmra.mxu0 %v1826
        %v1861 = vpop.f32.mrf.mxu0
        %v1862 = vadd.f32 0.0, %v1861
        %v1863 = vpop.f32.mrf.mxu0
        %1864 = vdwg.mxu0
        %v1865 = vmul.f32 %v1842, %v1798
        %v1866 = vmul.f32 %v1844, %v1799
        %v1867 = vmul.f32 %v1847, %v1800
        %v1868 = vmul.f32 %v1849, %v1801
        %v1869 = vmul.f32 %v1852, %v1802
        %v1870 = vmul.f32 %v1854, %v1803
        %v1871 = vmul.f32 %v1857, %v1804
        %v1872 = vmul.f32 %v1859, %v1805
        %v1873 = vmul.f32 %v1862, %v1806
        %v1874 = vadd.f32 %v1865, 0.0
        %v1875 = vadd.f32 %v1866, 0.0
        %v1876 = vadd.f32 %v1867, 0.0
        %v1877 = vadd.f32 %v1868, 0.0
        %v1878 = vadd.f32 %v1869, 0.0
        %v1879 = vadd.f32 %v1870, 0.0
        %v1880 = vadd.f32 %v1871, 0.0
        %v1881 = vadd.f32 %v1872, 0.0
        %v1882 = vadd.f32 %v1873, 0.0
        %v1883 = vsub.f32 %v1730, %v1753
        %v1884 = vsub.f32 %v1732, %v1754
        %v1885 = vsub.f32 %v1735, %v1755
        %v1886 = vsub.f32 %v1737, %v1756
        %v1887 = vsub.f32 %v1740, %v1757
        %v1888 = vsub.f32 %v1742, %v1758
        %v1889 = vsub.f32 %v1745, %v1759
        %v1890 = vsub.f32 %v1747, %v1760
        %v1891 = vsub.f32 %v1750, %v1761
        %v1892 = vmul.f32 %v1883, 1.442695
        %v1893 = vpow.pop %v1892
        %v1894 = vmul.f32 %v1884, 1.442695
        %v1895 = vpow.pop %v1894
        %v1896 = vmul.f32 %v1885, 1.442695
        %v1897 = vpow.pop %v1896
        %v1898 = vmul.f32 %v1886, 1.442695
        %v1899 = vpow.pop %v1898
        %v1900 = vmul.f32 %v1887, 1.442695
        %v1901 = vpow.pop %v1900
        %v1902 = vmul.f32 %v1888, 1.442695
        %v1903 = vpow.pop %v1902
        %v1904 = vmul.f32 %v1889, 1.442695
        %v1905 = vpow.pop %v1904
        %v1906 = vmul.f32 %v1890, 1.442695
        %v1907 = vpow.pop %v1906
        %v1908 = vmul.f32 %v1891, 1.442695
        %v1909 = vpow.pop %v1908
        %v1910 = vadd.f32 %v1789, %v1893
        %v1911 = vadd.f32 %v1790, %v1895
        %v1912 = vadd.f32 %v1791, %v1897
        %v1913 = vadd.f32 %v1792, %v1899
        %v1914 = vadd.f32 %v1793, %v1901
        %v1915 = vadd.f32 %v1794, %v1903
        %v1916 = vadd.f32 %v1795, %v1905
        %v1917 = vadd.f32 %v1796, %v1907
        %v1918 = vadd.f32 %v1797, %v1909
        %v1919 = vld [vmem:[#allocation3 + $0x18] sm:$0xfe]
        %v1920 = vld [vmem:[#allocation3 + $0x28] sm:$0xff]
        %v1921 = vld [vmem:[#allocation3 + $0x38] sm:$0xff]
        %v1922 = vld [vmem:[#allocation3 + $0x48] sm:$0xff]
        %v1923 = vld [vmem:[#allocation3 + $0x58] sm:$0xff]
        %v1924 = vld [vmem:[#allocation3 + $0x68] sm:$0xff]
        %v1925 = vld [vmem:[#allocation3 + $0x78] sm:$0xff]
        %v1926 = vld [vmem:[#allocation3 + $0x88] sm:$0xff]
        %v1927 = vld [vmem:[#allocation3 + $0x98] sm:$0xff]
        %v1928 = vld [vmem:[#allocation3 + $0xa8] sm:$0x1]
        %v1929 = vld [vmem:[#allocation3 + $0x8] sm:$0x80]
        %v1930 = vld [vmem:[#allocation3 + $0x98] sm:$0x7f]
        %v1941 = vrot.slane %v1919, 1
        %v1942 = vrot.slane %v1920, 1
        %v1943 = vsel %vm1629, %v1941, %v1942
        %v1944 = vrot.slane %v1921, 1
        %v1945 = vsel %vm1629, %v1942, %v1944
        %v1946 = vrot.slane %v1922, 1
        %v1947 = vsel %vm1629, %v1944, %v1946
        %v1948 = vrot.slane %v1923, 1
        %v1949 = vsel %vm1629, %v1946, %v1948
        %v1950 = vrot.slane %v1924, 1
        %v1951 = vsel %vm1629, %v1948, %v1950
        %v1952 = vrot.slane %v1925, 1
        %v1953 = vsel %vm1629, %v1950, %v1952
        %v1954 = vrot.slane %v1926, 1
        %v1955 = vsel %vm1629, %v1952, %v1954
        %v1956 = vrot.slane %v1927, 1
        %v1957 = vsel %vm1629, %v1954, %v1956
        %v1958 = vrot.slane %v1928, 1
        %v1959 = vsel %vm1629, %v1956, %v1958
        %v1979 = vrot.slane %v1929, 7
        %v1980 = vrot.slane %v1798, 7
        %v1981 = vsel %vm1668, %v1979, %v1980
        %v1982 = vrot.slane %v1799, 7
        %v1983 = vsel %vm1668, %v1980, %v1982
        %v1984 = vrot.slane %v1800, 7
        %v1985 = vsel %vm1668, %v1982, %v1984
        %v1986 = vrot.slane %v1801, 7
        %v1987 = vsel %vm1668, %v1984, %v1986
        %v1988 = vrot.slane %v1802, 7
        %v1989 = vsel %vm1668, %v1986, %v1988
        %v1990 = vrot.slane %v1803, 7
        %v1991 = vsel %vm1668, %v1988, %v1990
        %v1992 = vrot.slane %v1804, 7
        %v1993 = vsel %vm1668, %v1990, %v1992
        %v1994 = vrot.slane %v1805, 7
        %v1995 = vsel %vm1668, %v1992, %v1994
        %v1996 = vrot.slane %v1930, 7
        %v1997 = vsel %vm1668, %v1994, %v1996
        %v2007 = vsel %vm1598, %v1943, %v1981
        %v2008 = vsel %vm1599, %v1945, %v1983
        %v2009 = vsel %vm1600, %v1947, %v1985
        %v2010 = vsel %vm1601, %v1949, %v1987
        %v2011 = vsel %vm1602, %v1951, %v1989
        %v2012 = vsel %vm1603, %v1953, %v1991
        %v2013 = vsel %vm1604, %v1955, %v1993
        %v2014 = vsel %vm1605, %v1957, %v1995
        %v2015 = vsel %vm1606, %v1959, %v1997
        %v2016 = vpack.c.bf16 %v1895, %v1893
        %v2017 = vpack.c.bf16 %v1899, %v1897
        %v2018 = vpack.c.bf16 %v1903, %v1901
        %v2019 = vpack.c.bf16 %v1907, %v1905
        %v2020 = vpack.c.bf16 %v1909, %v1909
        %v2022 = vsel %vm1812, %v2016, 0
        %v2025 = vsel %vm1812, %v2017, 0
        %v2028 = vsel %vm1812, %v2018, 0
        %v2031 = vsel %vm1812, %v2019, 0
        %v2034 = vsel %vm1812, %v2020, 0
        %2036 = vmatpush.bf16.msra.mxu0 0
        %2037 = vmatpush.bf16.msra.mxu0 0
        %2038 = vmatpush.bf16.msra.mxu0 0
        %2039 = vmatpush.bf16.msra.mxu0 0
        %2040 = vmatpush.bf16.msra.mxu0 0
        %2041 = vmatpush.bf16.msra.mxu0 0
        %2042 = vmatpush.bf16.msra.mxu0 0
        %2043 = vmatpush.bf16.msra.mxu0 %v1830
        %2044 = vmatmul.bf16.gmra.mxu0 %v2022
        %v2045 = vpop.f32.mrf.mxu0
        %v2046 = vadd.f32 0.0, %v2045
        %v2047 = vpop.f32.mrf.mxu0
        %v2048 = vadd.f32 0.0, %v2047
        %2049 = vmatmul.bf16.gmra.mxu0 %v2025
        %v2050 = vpop.f32.mrf.mxu0
        %v2051 = vadd.f32 0.0, %v2050
        %v2052 = vpop.f32.mrf.mxu0
        %v2053 = vadd.f32 0.0, %v2052
        %2054 = vmatmul.bf16.gmra.mxu0 %v2028
        %v2055 = vpop.f32.mrf.mxu0
        %v2056 = vadd.f32 0.0, %v2055
        %v2057 = vpop.f32.mrf.mxu0
        %v2058 = vadd.f32 0.0, %v2057
        %2059 = vmatmul.bf16.gmra.mxu0 %v2031
        %v2060 = vpop.f32.mrf.mxu0
        %v2061 = vadd.f32 0.0, %v2060
        %v2062 = vpop.f32.mrf.mxu0
        %v2063 = vadd.f32 0.0, %v2062
        %2064 = vmatmul.bf16.gmra.mxu0 %v2034
        %v2065 = vpop.f32.mrf.mxu0
        %v2066 = vadd.f32 0.0, %v2065
        %v2067 = vpop.f32.mrf.mxu0
        %2068 = vdwg.mxu0
        %v2069 = vmul.f32 %v2046, %v2007
        %v2070 = vmul.f32 %v2048, %v2008
        %v2071 = vmul.f32 %v2051, %v2009
        %v2072 = vmul.f32 %v2053, %v2010
        %v2073 = vmul.f32 %v2056, %v2011
        %v2074 = vmul.f32 %v2058, %v2012
        %v2075 = vmul.f32 %v2061, %v2013
        %v2076 = vmul.f32 %v2063, %v2014
        %v2077 = vmul.f32 %v2066, %v2015
        %v2078 = vadd.f32 %v1874, %v2069
        %v2079 = vadd.f32 %v1875, %v2070
        %v2080 = vadd.f32 %v1876, %v2071
        %v2081 = vadd.f32 %v1877, %v2072
        %v2082 = vadd.f32 %v1878, %v2073
        %v2083 = vadd.f32 %v1879, %v2074
        %v2084 = vadd.f32 %v1880, %v2075
        %v2085 = vadd.f32 %v1881, %v2076
        %v2086 = vadd.f32 %v1882, %v2077
        %v2087 = vrcp.pop %v1910
        %v2088 = vrcp.pop %v1911
        %v2089 = vrcp.pop %v1912
        %v2090 = vrcp.pop %v1913
        %v2091 = vrcp.pop %v1914
        %v2092 = vrcp.pop %v1915
        %v2093 = vrcp.pop %v1916
        %v2094 = vrcp.pop %v1917
        %v2095 = vrcp.pop %v1918
        %v2096 = vpack.c.bf16 %v2088, %v2087
        %v2097 = vpack.c.bf16 %v2090, %v2089
        %v2098 = vpack.c.bf16 %v2092, %v2091
        %v2099 = vpack.c.bf16 %v2094, %v2093
        %v2100 = vpack.c.bf16 %v2095, %v2095
        %v2102 = vsel %vm1812, %v2096, 0
        %v2105 = vsel %vm1812, %v2097, 0
        %v2108 = vsel %vm1812, %v2098, 0
        %v2111 = vsel %vm1812, %v2099, 0
        %v2114 = vsel %vm1812, %v2100, 0
        %2116 = vmatpush.bf16.msra.mxu0 0
        %2117 = vmatpush.bf16.msra.mxu0 0
        %2118 = vmatpush.bf16.msra.mxu0 0
        %2119 = vmatpush.bf16.msra.mxu0 0
        %2120 = vmatpush.bf16.msra.mxu0 0
        %2121 = vmatpush.bf16.msra.mxu0 0
        %2122 = vmatpush.bf16.msra.mxu0 0
        %2123 = vmatpush.bf16.msra.mxu0 %v1830
        %2124 = vmatmul.bf16.gmra.mxu0 %v2102
        %v2125 = vpop.f32.mrf.mxu0
        %v2126 = vadd.f32 0.0, %v2125
        %v2127 = vpop.f32.mrf.mxu0
        %v2128 = vadd.f32 0.0, %v2127
        %2129 = vmatmul.bf16.gmra.mxu0 %v2105
        %v2130 = vpop.f32.mrf.mxu0
        %v2131 = vadd.f32 0.0, %v2130
        %v2132 = vpop.f32.mrf.mxu0
        %v2133 = vadd.f32 0.0, %v2132
        %2134 = vmatmul.bf16.gmra.mxu0 %v2108
        %v2135 = vpop.f32.mrf.mxu0
        %v2136 = vadd.f32 0.0, %v2135
        %v2137 = vpop.f32.mrf.mxu0
        %v2138 = vadd.f32 0.0, %v2137
        %2139 = vmatmul.bf16.gmra.mxu0 %v2111
        %v2140 = vpop.f32.mrf.mxu0
        %v2141 = vadd.f32 0.0, %v2140
        %v2142 = vpop.f32.mrf.mxu0
        %v2143 = vadd.f32 0.0, %v2142
        %2144 = vmatmul.bf16.gmra.mxu0 %v2114
        %v2145 = vpop.f32.mrf.mxu0
        %v2146 = vadd.f32 0.0, %v2145
        %v2147 = vpop.f32.mrf.mxu0
        %2148 = vdwg.mxu0
        %v2149 = vmul.f32 %v2078, %v2126
        %v2150 = vmul.f32 %v2079, %v2128
        %v2151 = vmul.f32 %v2080, %v2131
        %v2152 = vmul.f32 %v2081, %v2133
        %v2153 = vmul.f32 %v2082, %v2136
        %v2154 = vmul.f32 %v2083, %v2138
        %v2155 = vmul.f32 %v2084, %v2141
        %v2156 = vmul.f32 %v2085, %v2143
        %v2157 = vmul.f32 %v2086, %v2146
        %v2158 = vpack.c.bf16 %v2150, %v2149
        %v2159 = vpack.c.bf16 %v2152, %v2151
        %v2160 = vpack.c.bf16 %v2154, %v2153
        %v2161 = vpack.c.bf16 %v2156, %v2155
        %v2162 = vpack.c.bf16 %v2157, %v2157
        %v2163 = vld [vmem:[%s924] sm:$0xf]
        %v2164 = vld [vmem:[%s924 + $0x4] sm:$0xf]
        %v2165 = vld [vmem:[%s924 + $0x8] sm:$0xf]
        %v2166 = vld [vmem:[%s924 + $0xc] sm:$0xf]
        %v2167 = vld [vmem:[%s924 + $0x10] sm:$0xf]
        %v2168 = vld [vmem:[%s924 + $0x14] sm:$0xf]
        %v2169 = vld [vmem:[%s924 + $0x18] sm:$0xf]
        %v2170 = vld [vmem:[%s924 + $0x1c] sm:$0xf]
        %v2171 = vld [vmem:[%s924 + $0x20] sm:$0xf]
        %v2172 = vld [vmem:[%s924 + $0x24] sm:$0xf]
        %v2173 = vld [vmem:[%s924 + $0x28] sm:$0xf]
        %v2174 = vld [vmem:[%s924 + $0x2c] sm:$0xf]
        %v2175 = vld [vmem:[%s924 + $0x30] sm:$0xf]
        %v2176 = vld [vmem:[%s924 + $0x34] sm:$0xf]
        %v2177 = vld [vmem:[%s924 + $0x38] sm:$0xf]
        %v2178 = vld [vmem:[%s924 + $0x3c] sm:$0xf]
        %v2179 = vld [vmem:[%s1110] sm:$0x1]
        %v2181 = vperm.slane %v2179, 0
        %v2199 = vunpack.c.l.b16 %v2163
        %v2200 = vunpack.c.l.b16 %v2164
        %v2201 = vunpack.c.l.b16 %v2165
        %v2202 = vunpack.c.l.b16 %v2166
        %v2203 = vunpack.c.l.b16 %v2167
        %v2204 = vunpack.c.l.b16 %v2168
        %v2205 = vunpack.c.l.b16 %v2169
        %v2206 = vunpack.c.l.b16 %v2170
        %v2207 = vunpack.c.l.b16 %v2171
        %v2208 = vunpack.c.l.b16 %v2172
        %v2209 = vunpack.c.l.b16 %v2173
        %v2210 = vunpack.c.l.b16 %v2174
        %v2211 = vunpack.c.l.b16 %v2175
        %v2212 = vunpack.c.l.b16 %v2176
        %v2213 = vunpack.c.l.b16 %v2177
        %v2214 = vunpack.c.l.b16 %v2178
        %v2215 = vpack.c.b16 %v2200, %v2199
        %v2216 = vpack.c.b16 %v2202, %v2201
        %v2217 = vpack.c.b16 %v2204, %v2203
        %v2218 = vpack.c.b16 %v2206, %v2205
        %v2219 = vpack.c.b16 %v2208, %v2207
        %v2220 = vpack.c.b16 %v2210, %v2209
        %v2221 = vpack.c.b16 %v2212, %v2211
        %v2222 = vpack.c.b16 %v2214, %v2213
        %2231 = vmatpush.bf16.msra.mxu0 %v2222
        %2232 = vmatpush.bf16.msra.mxu0 %v2221
        %2233 = vmatpush.bf16.msra.mxu0 %v2220
        %2234 = vmatpush.bf16.msra.mxu0 %v2219
        %2235 = vmatpush.bf16.msra.mxu0 %v2218
        %2236 = vmatpush.bf16.msra.mxu0 %v2217
        %2237 = vmatpush.bf16.msra.mxu0 %v2216
        %2238 = vmatpush.bf16.msra.mxu0 %v2215
        %2239 = vmatmul.bf16.gmra.mxu0 %v2158
        %v2240 = vpop.f32.mrf.mxu0
        %v2241 = vadd.f32 %v2181, %v2240
        %v2242 = vpop.f32.mrf.mxu0
        %v2243 = vadd.f32 %v2181, %v2242
        %2244 = vmatmul.bf16.gmra.mxu0 %v2159
        %v2245 = vpop.f32.mrf.mxu0
        %v2246 = vadd.f32 %v2181, %v2245
        %v2247 = vpop.f32.mrf.mxu0
        %v2248 = vadd.f32 %v2181, %v2247
        %2249 = vmatmul.bf16.gmra.mxu0 %v2160
        %v2250 = vpop.f32.mrf.mxu0
        %v2251 = vadd.f32 %v2181, %v2250
        %v2252 = vpop.f32.mrf.mxu0
        %v2253 = vadd.f32 %v2181, %v2252
        %2254 = vmatmul.bf16.gmra.mxu0 %v2161
        %v2255 = vpop.f32.mrf.mxu0
        %v2256 = vadd.f32 %v2181, %v2255
        %v2257 = vpop.f32.mrf.mxu0
        %v2258 = vadd.f32 %v2181, %v2257
        %2259 = vmatmul.bf16.gmra.mxu0 %v2162
        %v2260 = vpop.f32.mrf.mxu0
        %v2261 = vadd.f32 %v2181, %v2260
        %v2262 = vpop.f32.mrf.mxu0
        %2263 = vdwg.mxu0
        %v2264 = vadd.f32 %v1160, %v2241
        %v2265 = vadd.f32 %v1161, %v2243
        %v2266 = vadd.f32 %v1162, %v2246
        %v2267 = vadd.f32 %v1163, %v2248
        %v2268 = vadd.f32 %v1164, %v2251
        %v2269 = vadd.f32 %v1165, %v2253
        %v2270 = vadd.f32 %v1166, %v2256
        %v2271 = vadd.f32 %v1167, %v2258
        %v2272 = vadd.f32 %v1168, %v2261
        %v2273 = vld [vmem:[%s933] sm:$0x1]
        %v2274 = vld [vmem:[%s942] sm:$0x1]
        %2275 = vadd.xlane.f32.xlu0 %v2264
        %v2276 = vpop.xlane.xlu0 %2275
        %2277 = vadd.xlane.f32.xlu0 %v2265
        %v2278 = vpop.xlane.xlu0 %2277
        %2279 = vadd.xlane.f32.xlu0 %v2266
        %v2280 = vpop.xlane.xlu0 %2279
        %2281 = vadd.xlane.f32.xlu0 %v2267
        %v2282 = vpop.xlane.xlu0 %2281
        %2283 = vadd.xlane.f32.xlu0 %v2268
        %v2284 = vpop.xlane.xlu0 %2283
        %2285 = vadd.xlane.f32.xlu0 %v2269
        %v2286 = vpop.xlane.xlu0 %2285
        %2287 = vadd.xlane.f32.xlu0 %v2270
        %v2288 = vpop.xlane.xlu0 %2287
        %2289 = vadd.xlane.f32.xlu0 %v2271
        %v2290 = vpop.xlane.xlu0 %2289
        %2291 = vadd.xlane.f32.xlu0 %v2272
        %v2292 = vpop.xlane.xlu0 %2291
        %v2293 = vrcp.pop 128.0
        %v2294 = vmul.f32 128.0, %v2293
        %v2295 = vsub.f32 1.0, %v2294
        %v2296 = vmul.f32 %v2293, %v2295
        %v2297 = vadd.f32 %v2293, %v2296
        %vm2298 = vweird.f32 %v2293
        %v2299 = vsel %vm2298, %v2293, %v2297
        %v2300 = vmul.f32 %v2276, %v2299
        %v2301 = vmul.f32 %v2278, %v2299
        %v2302 = vmul.f32 %v2280, %v2299
        %v2303 = vmul.f32 %v2282, %v2299
        %v2304 = vmul.f32 %v2284, %v2299
        %v2305 = vmul.f32 %v2286, %v2299
        %v2306 = vmul.f32 %v2288, %v2299
        %v2307 = vmul.f32 %v2290, %v2299
        %v2308 = vmul.f32 %v2292, %v2299
        %v2309 = vsub.f32 %v2264, %v2300
        %v2310 = vsub.f32 %v2265, %v2301
        %v2311 = vsub.f32 %v2266, %v2302
        %v2312 = vsub.f32 %v2267, %v2303
        %v2313 = vsub.f32 %v2268, %v2304
        %v2314 = vsub.f32 %v2269, %v2305
        %v2315 = vsub.f32 %v2270, %v2306
        %v2316 = vsub.f32 %v2271, %v2307
        %v2317 = vsub.f32 %v2272, %v2308
        %v2318 = vmul.f32 %v2309, %v2309
        %v2319 = vmul.f32 %v2310, %v2310
        %v2320 = vmul.f32 %v2311, %v2311
        %v2321 = vmul.f32 %v2312, %v2312
        %v2322 = vmul.f32 %v2313, %v2313
        %v2323 = vmul.f32 %v2314, %v2314
        %v2324 = vmul.f32 %v2315, %v2315
        %v2325 = vmul.f32 %v2316, %v2316
        %v2326 = vmul.f32 %v2317, %v2317
        %2327 = vadd.xlane.f32.xlu0 %v2318
        %v2328 = vpop.xlane.xlu0 %2327
        %2329 = vadd.xlane.f32.xlu0 %v2319
        %v2330 = vpop.xlane.xlu0 %2329
        %2331 = vadd.xlane.f32.xlu0 %v2320
        %v2332 = vpop.xlane.xlu0 %2331
        %2333 = vadd.xlane.f32.xlu0 %v2321
        %v2334 = vpop.xlane.xlu0 %2333
        %2335 = vadd.xlane.f32.xlu0 %v2322
        %v2336 = vpop.xlane.xlu0 %2335
        %2337 = vadd.xlane.f32.xlu0 %v2323
        %v2338 = vpop.xlane.xlu0 %2337
        %2339 = vadd.xlane.f32.xlu0 %v2324
        %v2340 = vpop.xlane.xlu0 %2339
        %2341 = vadd.xlane.f32.xlu0 %v2325
        %v2342 = vpop.xlane.xlu0 %2341
        %2343 = vadd.xlane.f32.xlu0 %v2326
        %v2344 = vpop.xlane.xlu0 %2343
        %v2345 = vmul.f32 %v2328, %v2299
        %v2346 = vmul.f32 %v2330, %v2299
        %v2347 = vmul.f32 %v2332, %v2299
        %v2348 = vmul.f32 %v2334, %v2299
        %v2349 = vmul.f32 %v2336, %v2299
        %v2350 = vmul.f32 %v2338, %v2299
        %v2351 = vmul.f32 %v2340, %v2299
        %v2352 = vmul.f32 %v2342, %v2299
        %v2353 = vmul.f32 %v2344, %v2299
        %v2354 = vadd.f32 %v2345, 1e-05
        %v2355 = vadd.f32 %v2346, 1e-05
        %v2356 = vadd.f32 %v2347, 1e-05
        %v2357 = vadd.f32 %v2348, 1e-05
        %v2358 = vadd.f32 %v2349, 1e-05
        %v2359 = vadd.f32 %v2350, 1e-05
        %v2360 = vadd.f32 %v2351, 1e-05
        %v2361 = vadd.f32 %v2352, 1e-05
        %v2362 = vadd.f32 %v2353, 1e-05
        %v2363 = vrsqrt.pop %v2354
        %v2364 = vmul.f32 %v2363, %v2354
        %v2365 = vmul.f32 %v2364, %v2363
        %v2366 = vmul.f32 0.5, %v2365
        %v2367 = vsub.f32 1.5, %v2366
        %v2368 = vmul.f32 %v2363, %v2367
        %vm2369 = vweird.f32 %v2354
        %vm2370 = vweird.f32 %v2363
        %vm2371 = vmor %vm2369, %vm2370
        %v2372 = vsel %vm2371, %v2363, %v2368
        %v2373 = vrsqrt.pop %v2355
        %v2374 = vmul.f32 %v2373, %v2355
        %v2375 = vmul.f32 %v2374, %v2373
        %v2376 = vmul.f32 0.5, %v2375
        %v2377 = vsub.f32 1.5, %v2376
        %v2378 = vmul.f32 %v2373, %v2377
        %vm2379 = vweird.f32 %v2355
        %vm2380 = vweird.f32 %v2373
        %vm2381 = vmor %vm2379, %vm2380
        %v2382 = vsel %vm2381, %v2373, %v2378
        %v2383 = vrsqrt.pop %v2356
        %v2384 = vmul.f32 %v2383, %v2356
        %v2385 = vmul.f32 %v2384, %v2383
        %v2386 = vmul.f32 0.5, %v2385
        %v2387 = vsub.f32 1.5, %v2386
        %v2388 = vmul.f32 %v2383, %v2387
        %vm2389 = vweird.f32 %v2356
        %vm2390 = vweird.f32 %v2383
        %vm2391 = vmor %vm2389, %vm2390
        %v2392 = vsel %vm2391, %v2383, %v2388
        %v2393 = vrsqrt.pop %v2357
        %v2394 = vmul.f32 %v2393, %v2357
        %v2395 = vmul.f32 %v2394, %v2393
        %v2396 = vmul.f32 0.5, %v2395
        %v2397 = vsub.f32 1.5, %v2396
        %v2398 = vmul.f32 %v2393, %v2397
        %vm2399 = vweird.f32 %v2357
        %vm2400 = vweird.f32 %v2393
        %vm2401 = vmor %vm2399, %vm2400
        %v2402 = vsel %vm2401, %v2393, %v2398
        %v2403 = vrsqrt.pop %v2358
        %v2404 = vmul.f32 %v2403, %v2358
        %v2405 = vmul.f32 %v2404, %v2403
        %v2406 = vmul.f32 0.5, %v2405
        %v2407 = vsub.f32 1.5, %v2406
        %v2408 = vmul.f32 %v2403, %v2407
        %vm2409 = vweird.f32 %v2358
        %vm2410 = vweird.f32 %v2403
        %vm2411 = vmor %vm2409, %vm2410
        %v2412 = vsel %vm2411, %v2403, %v2408
        %v2413 = vrsqrt.pop %v2359
        %v2414 = vmul.f32 %v2413, %v2359
        %v2415 = vmul.f32 %v2414, %v2413
        %v2416 = vmul.f32 0.5, %v2415
        %v2417 = vsub.f32 1.5, %v2416
        %v2418 = vmul.f32 %v2413, %v2417
        %vm2419 = vweird.f32 %v2359
        %vm2420 = vweird.f32 %v2413
        %vm2421 = vmor %vm2419, %vm2420
        %v2422 = vsel %vm2421, %v2413, %v2418
        %v2423 = vrsqrt.pop %v2360
        %v2424 = vmul.f32 %v2423, %v2360
        %v2425 = vmul.f32 %v2424, %v2423
        %v2426 = vmul.f32 0.5, %v2425
        %v2427 = vsub.f32 1.5, %v2426
        %v2428 = vmul.f32 %v2423, %v2427
        %vm2429 = vweird.f32 %v2360
        %vm2430 = vweird.f32 %v2423
        %vm2431 = vmor %vm2429, %vm2430
        %v2432 = vsel %vm2431, %v2423, %v2428
        %v2433 = vrsqrt.pop %v2361
        %v2434 = vmul.f32 %v2433, %v2361
        %v2435 = vmul.f32 %v2434, %v2433
        %v2436 = vmul.f32 0.5, %v2435
        %v2437 = vsub.f32 1.5, %v2436
        %v2438 = vmul.f32 %v2433, %v2437
        %vm2439 = vweird.f32 %v2361
        %vm2440 = vweird.f32 %v2433
        %vm2441 = vmor %vm2439, %vm2440
        %v2442 = vsel %vm2441, %v2433, %v2438
        %v2443 = vrsqrt.pop %v2362
        %v2444 = vmul.f32 %v2443, %v2362
        %v2445 = vmul.f32 %v2444, %v2443
        %v2446 = vmul.f32 0.5, %v2445
        %v2447 = vsub.f32 1.5, %v2446
        %v2448 = vmul.f32 %v2443, %v2447
        %vm2449 = vweird.f32 %v2362
        %vm2450 = vweird.f32 %v2443
        %vm2451 = vmor %vm2449, %vm2450
        %v2452 = vsel %vm2451, %v2443, %v2448
        %v2453 = vmul.f32 %v2309, %v2372
        %v2454 = vmul.f32 %v2310, %v2382
        %v2455 = vmul.f32 %v2311, %v2392
        %v2456 = vmul.f32 %v2312, %v2402
        %v2457 = vmul.f32 %v2313, %v2412
        %v2458 = vmul.f32 %v2314, %v2422
        %v2459 = vmul.f32 %v2315, %v2432
        %v2460 = vmul.f32 %v2316, %v2442
        %v2461 = vmul.f32 %v2317, %v2452
        %v2463 = vperm.slane %v2273, 0
        %v2465 = vmul.f32 %v2453, %v2463
        %v2466 = vmul.f32 %v2454, %v2463
        %v2467 = vmul.f32 %v2455, %v2463
        %v2468 = vmul.f32 %v2456, %v2463
        %v2469 = vmul.f32 %v2457, %v2463
        %v2470 = vmul.f32 %v2458, %v2463
        %v2471 = vmul.f32 %v2459, %v2463
        %v2472 = vmul.f32 %v2460, %v2463
        %v2473 = vmul.f32 %v2461, %v2463
        %v2475 = vperm.slane %v2274, 0
        %v2477 = vadd.f32 %v2465, %v2475
        %v2478 = vadd.f32 %v2466, %v2475
        %v2479 = vadd.f32 %v2467, %v2475
        %v2480 = vadd.f32 %v2468, %v2475
        %v2481 = vadd.f32 %v2469, %v2475
        %v2482 = vadd.f32 %v2470, %v2475
        %v2483 = vadd.f32 %v2471, %v2475
        %v2484 = vadd.f32 %v2472, %v2475
        %v2485 = vadd.f32 %v2473, %v2475
        %v2486 = vpack.c.bf16 %v2478, %v2477
        %v2487 = vpack.c.bf16 %v2480, %v2479
        %v2488 = vpack.c.bf16 %v2482, %v2481
        %v2489 = vpack.c.bf16 %v2484, %v2483
        %v2490 = vpack.c.bf16 %v2485, %v2485
        %v2491 = vld [vmem:[%s952] sm:$0xff]
        %v2492 = vld [vmem:[%s952 + $0x8] sm:$0xff]
        %v2493 = vld [vmem:[%s952 + $0x10] sm:$0xff]
        %v2494 = vld [vmem:[%s952 + $0x18] sm:$0xff]
        %v2495 = vld [vmem:[%s952 + $0x20] sm:$0xff]
        %v2496 = vld [vmem:[%s952 + $0x28] sm:$0xff]
        %v2497 = vld [vmem:[%s952 + $0x30] sm:$0xff]
        %v2498 = vld [vmem:[%s952 + $0x38] sm:$0xff]
        %v2499 = vld [vmem:[%s952 + $0x40] sm:$0xff]
        %v2500 = vld [vmem:[%s952 + $0x48] sm:$0xff]
        %v2501 = vld [vmem:[%s952 + $0x50] sm:$0xff]
        %v2502 = vld [vmem:[%s952 + $0x58] sm:$0xff]
        %v2503 = vld [vmem:[%s952 + $0x60] sm:$0xff]
        %v2504 = vld [vmem:[%s952 + $0x68] sm:$0xff]
        %v2505 = vld [vmem:[%s952 + $0x70] sm:$0xff]
        %v2506 = vld [vmem:[%s952 + $0x78] sm:$0xff]
        %v2507 = vld [vmem:[%s1114] sm:$0x3]
        %v2509 = vperm.slane %v2507, 0
        %v2510 = vperm.slane %v2507, 1
        %v2529 = vunpack.c.l.b16 %v2491
        %v2530 = vunpack.c.h.b16 %v2491
        %v2531 = vunpack.c.l.b16 %v2492
        %v2532 = vunpack.c.h.b16 %v2492
        %v2533 = vunpack.c.l.b16 %v2493
        %v2534 = vunpack.c.h.b16 %v2493
        %v2535 = vunpack.c.l.b16 %v2494
        %v2536 = vunpack.c.h.b16 %v2494
        %v2537 = vunpack.c.l.b16 %v2495
        %v2538 = vunpack.c.h.b16 %v2495
        %v2539 = vunpack.c.l.b16 %v2496
        %v2540 = vunpack.c.h.b16 %v2496
        %v2541 = vunpack.c.l.b16 %v2497
        %v2542 = vunpack.c.h.b16 %v2497
        %v2543 = vunpack.c.l.b16 %v2498
        %v2544 = vunpack.c.h.b16 %v2498
        %v2545 = vunpack.c.l.b16 %v2499
        %v2546 = vunpack.c.h.b16 %v2499
        %v2547 = vunpack.c.l.b16 %v2500
        %v2548 = vunpack.c.h.b16 %v2500
        %v2549 = vunpack.c.l.b16 %v2501
        %v2550 = vunpack.c.h.b16 %v2501
        %v2551 = vunpack.c.l.b16 %v2502
        %v2552 = vunpack.c.h.b16 %v2502
        %v2553 = vunpack.c.l.b16 %v2503
        %v2554 = vunpack.c.h.b16 %v2503
        %v2555 = vunpack.c.l.b16 %v2504
        %v2556 = vunpack.c.h.b16 %v2504
        %v2557 = vunpack.c.l.b16 %v2505
        %v2558 = vunpack.c.h.b16 %v2505
        %v2559 = vunpack.c.l.b16 %v2506
        %v2560 = vunpack.c.h.b16 %v2506
        %v2561 = vpack.c.b16 %v2531, %v2529
        %v2562 = vpack.c.b16 %v2532, %v2530
        %v2563 = vpack.c.b16 %v2535, %v2533
        %v2564 = vpack.c.b16 %v2536, %v2534
        %v2565 = vpack.c.b16 %v2539, %v2537
        %v2566 = vpack.c.b16 %v2540, %v2538
        %v2567 = vpack.c.b16 %v2543, %v2541
        %v2568 = vpack.c.b16 %v2544, %v2542
        %v2569 = vpack.c.b16 %v2547, %v2545
        %v2570 = vpack.c.b16 %v2548, %v2546
        %v2571 = vpack.c.b16 %v2551, %v2549
        %v2572 = vpack.c.b16 %v2552, %v2550
        %v2573 = vpack.c.b16 %v2555, %v2553
        %v2574 = vpack.c.b16 %v2556, %v2554
        %v2575 = vpack.c.b16 %v2559, %v2557
        %v2576 = vpack.c.b16 %v2560, %v2558
        %2593 = vmatpush.bf16.msra.mxu0 %v2575
        %2594 = vmatpush.bf16.msra.mxu0 %v2573
        %2595 = vmatpush.bf16.msra.mxu0 %v2571
        %2596 = vmatpush.bf16.msra.mxu0 %v2569
        %2597 = vmatpush.bf16.msra.mxu0 %v2567
        %2598 = vmatpush.bf16.msra.mxu0 %v2565
        %2599 = vmatpush.bf16.msra.mxu0 %v2563
        %2600 = vmatpush.bf16.msra.mxu0 %v2561
        %2601 = vmatmul.bf16.gmra.mxu0 %v2486
        %v2602 = vpop.f32.mrf.mxu0
        %v2603 = vadd.f32 %v2509, %v2602
        %v2604 = vpop.f32.mrf.mxu0
        %v2605 = vadd.f32 %v2509, %v2604
        %2606 = vmatmul.bf16.gmra.mxu0 %v2487
        %v2607 = vpop.f32.mrf.mxu0
        %v2608 = vadd.f32 %v2509, %v2607
        %v2609 = vpop.f32.mrf.mxu0
        %v2610 = vadd.f32 %v2509, %v2609
        %2611 = vmatmul.bf16.gmra.mxu0 %v2488
        %v2612 = vpop.f32.mrf.mxu0
        %v2613 = vadd.f32 %v2509, %v2612
        %v2614 = vpop.f32.mrf.mxu0
        %v2615 = vadd.f32 %v2509, %v2614
        %2616 = vmatmul.bf16.gmra.mxu0 %v2489
        %v2617 = vpop.f32.mrf.mxu0
        %v2618 = vadd.f32 %v2509, %v2617
        %v2619 = vpop.f32.mrf.mxu0
        %v2620 = vadd.f32 %v2509, %v2619
        %2621 = vmatmul.bf16.gmra.mxu0 %v2490
        %v2622 = vpop.f32.mrf.mxu0
        %v2623 = vadd.f32 %v2509, %v2622
        %v2624 = vpop.f32.mrf.mxu0
        %2625 = vdwg.mxu0
        %2626 = vmatpush.bf16.msra.mxu0 %v2576
        %2627 = vmatpush.bf16.msra.mxu0 %v2574
        %2628 = vmatpush.bf16.msra.mxu0 %v2572
        %2629 = vmatpush.bf16.msra.mxu0 %v2570
        %2630 = vmatpush.bf16.msra.mxu0 %v2568
        %2631 = vmatpush.bf16.msra.mxu0 %v2566
        %2632 = vmatpush.bf16.msra.mxu0 %v2564
        %2633 = vmatpush.bf16.msra.mxu0 %v2562
        %2634 = vmatmul.bf16.gmra.mxu0 %v2486
        %v2635 = vpop.f32.mrf.mxu0
        %v2636 = vadd.f32 %v2510, %v2635
        %v2637 = vpop.f32.mrf.mxu0
        %v2638 = vadd.f32 %v2510, %v2637
        %2639 = vmatmul.bf16.gmra.mxu0 %v2487
        %v2640 = vpop.f32.mrf.mxu0
        %v2641 = vadd.f32 %v2510, %v2640
        %v2642 = vpop.f32.mrf.mxu0
        %v2643 = vadd.f32 %v2510, %v2642
        %2644 = vmatmul.bf16.gmra.mxu0 %v2488
        %v2645 = vpop.f32.mrf.mxu0
        %v2646 = vadd.f32 %v2510, %v2645
        %v2647 = vpop.f32.mrf.mxu0
        %v2648 = vadd.f32 %v2510, %v2647
        %2649 = vmatmul.bf16.gmra.mxu0 %v2489
        %v2650 = vpop.f32.mrf.mxu0
        %v2651 = vadd.f32 %v2510, %v2650
        %v2652 = vpop.f32.mrf.mxu0
        %v2653 = vadd.f32 %v2510, %v2652
        %2654 = vmatmul.bf16.gmra.mxu0 %v2490
        %v2655 = vpop.f32.mrf.mxu0
        %v2656 = vadd.f32 %v2510, %v2655
        %v2657 = vpop.f32.mrf.mxu0
        %2658 = vdwg.mxu0
        %v2659 = vmax.f32 %v2603, 0.0
        %v2660 = vmax.f32 %v2636, 0.0
        %v2661 = vmax.f32 %v2605, 0.0
        %v2662 = vmax.f32 %v2638, 0.0
        %v2663 = vmax.f32 %v2608, 0.0
        %v2664 = vmax.f32 %v2641, 0.0
        %v2665 = vmax.f32 %v2610, 0.0
        %v2666 = vmax.f32 %v2643, 0.0
        %v2667 = vmax.f32 %v2613, 0.0
        %v2668 = vmax.f32 %v2646, 0.0
        %v2669 = vmax.f32 %v2615, 0.0
        %v2670 = vmax.f32 %v2648, 0.0
        %v2671 = vmax.f32 %v2618, 0.0
        %v2672 = vmax.f32 %v2651, 0.0
        %v2673 = vmax.f32 %v2620, 0.0
        %v2674 = vmax.f32 %v2653, 0.0
        %v2675 = vmax.f32 %v2623, 0.0
        %v2676 = vmax.f32 %v2656, 0.0
        %v2677 = vpack.c.bf16 %v2661, %v2659
        %v2678 = vpack.c.bf16 %v2662, %v2660
        %v2679 = vpack.c.bf16 %v2665, %v2663
        %v2680 = vpack.c.bf16 %v2666, %v2664
        %v2681 = vpack.c.bf16 %v2669, %v2667
        %v2682 = vpack.c.bf16 %v2670, %v2668
        %v2683 = vpack.c.bf16 %v2673, %v2671
        %v2684 = vpack.c.bf16 %v2674, %v2672
        %v2685 = vpack.c.bf16 %v2675, %v2675
        %v2686 = vpack.c.bf16 %v2676, %v2676
        %v2687 = vld [vmem:[%s962] sm:$0xf]
        %v2688 = vld [vmem:[%s962 + $0x4] sm:$0xf]
        %v2689 = vld [vmem:[%s962 + $0x8] sm:$0xf]
        %v2690 = vld [vmem:[%s962 + $0xc] sm:$0xf]
        %v2691 = vld [vmem:[%s962 + $0x10] sm:$0xf]
        %v2692 = vld [vmem:[%s962 + $0x14] sm:$0xf]
        %v2693 = vld [vmem:[%s962 + $0x18] sm:$0xf]
        %v2694 = vld [vmem:[%s962 + $0x1c] sm:$0xf]
        %v2695 = vld [vmem:[%s962 + $0x20] sm:$0xf]
        %v2696 = vld [vmem:[%s962 + $0x24] sm:$0xf]
        %v2697 = vld [vmem:[%s962 + $0x28] sm:$0xf]
        %v2698 = vld [vmem:[%s962 + $0x2c] sm:$0xf]
        %v2699 = vld [vmem:[%s962 + $0x30] sm:$0xf]
        %v2700 = vld [vmem:[%s962 + $0x34] sm:$0xf]
        %v2701 = vld [vmem:[%s962 + $0x38] sm:$0xf]
        %v2702 = vld [vmem:[%s962 + $0x3c] sm:$0xf]
        %v2703 = vld [vmem:[%s962 + $0x40] sm:$0xf]
        %v2704 = vld [vmem:[%s962 + $0x44] sm:$0xf]
        %v2705 = vld [vmem:[%s962 + $0x48] sm:$0xf]
        %v2706 = vld [vmem:[%s962 + $0x4c] sm:$0xf]
        %v2707 = vld [vmem:[%s962 + $0x50] sm:$0xf]
        %v2708 = vld [vmem:[%s962 + $0x54] sm:$0xf]
        %v2709 = vld [vmem:[%s962 + $0x58] sm:$0xf]
        %v2710 = vld [vmem:[%s962 + $0x5c] sm:$0xf]
        %v2711 = vld [vmem:[%s962 + $0x60] sm:$0xf]
        %v2712 = vld [vmem:[%s962 + $0x64] sm:$0xf]
        %v2713 = vld [vmem:[%s962 + $0x68] sm:$0xf]
        %v2714 = vld [vmem:[%s962 + $0x6c] sm:$0xf]
        %v2715 = vld [vmem:[%s962 + $0x70] sm:$0xf]
        %v2716 = vld [vmem:[%s962 + $0x74] sm:$0xf]
        %v2717 = vld [vmem:[%s962 + $0x78] sm:$0xf]
        %v2718 = vld [vmem:[%s962 + $0x7c] sm:$0xf]
        %v2719 = vld [vmem:[%s971] sm:$0x1]
        %v2721 = vperm.slane %v2719, 0
        %v2755 = vunpack.c.l.b16 %v2687
        %v2756 = vunpack.c.l.b16 %v2688
        %v2757 = vunpack.c.l.b16 %v2689
        %v2758 = vunpack.c.l.b16 %v2690
        %v2759 = vunpack.c.l.b16 %v2691
        %v2760 = vunpack.c.l.b16 %v2692
        %v2761 = vunpack.c.l.b16 %v2693
        %v2762 = vunpack.c.l.b16 %v2694
        %v2763 = vunpack.c.l.b16 %v2695
        %v2764 = vunpack.c.l.b16 %v2696
        %v2765 = vunpack.c.l.b16 %v2697
        %v2766 = vunpack.c.l.b16 %v2698
        %v2767 = vunpack.c.l.b16 %v2699
        %v2768 = vunpack.c.l.b16 %v2700
        %v2769 = vunpack.c.l.b16 %v2701
        %v2770 = vunpack.c.l.b16 %v2702
        %v2771 = vunpack.c.l.b16 %v2703
        %v2772 = vunpack.c.l.b16 %v2704
        %v2773 = vunpack.c.l.b16 %v2705
        %v2774 = vunpack.c.l.b16 %v2706
        %v2775 = vunpack.c.l.b16 %v2707
        %v2776 = vunpack.c.l.b16 %v2708
        %v2777 = vunpack.c.l.b16 %v2709
        %v2778 = vunpack.c.l.b16 %v2710
        %v2779 = vunpack.c.l.b16 %v2711
        %v2780 = vunpack.c.l.b16 %v2712
        %v2781 = vunpack.c.l.b16 %v2713
        %v2782 = vunpack.c.l.b16 %v2714
        %v2783 = vunpack.c.l.b16 %v2715
        %v2784 = vunpack.c.l.b16 %v2716
        %v2785 = vunpack.c.l.b16 %v2717
        %v2786 = vunpack.c.l.b16 %v2718
        %v2787 = vpack.c.b16 %v2756, %v2755
        %v2788 = vpack.c.b16 %v2758, %v2757
        %v2789 = vpack.c.b16 %v2760, %v2759
        %v2790 = vpack.c.b16 %v2762, %v2761
        %v2791 = vpack.c.b16 %v2764, %v2763
        %v2792 = vpack.c.b16 %v2766, %v2765
        %v2793 = vpack.c.b16 %v2768, %v2767
        %v2794 = vpack.c.b16 %v2770, %v2769
        %v2795 = vpack.c.b16 %v2772, %v2771
        %v2796 = vpack.c.b16 %v2774, %v2773
        %v2797 = vpack.c.b16 %v2776, %v2775
        %v2798 = vpack.c.b16 %v2778, %v2777
        %v2799 = vpack.c.b16 %v2780, %v2779
        %v2800 = vpack.c.b16 %v2782, %v2781
        %v2801 = vpack.c.b16 %v2784, %v2783
        %v2802 = vpack.c.b16 %v2786, %v2785
        %2819 = vmatpush.bf16.msra.mxu0 %v2794
        %2820 = vmatpush.bf16.msra.mxu0 %v2793
        %2821 = vmatpush.bf16.msra.mxu0 %v2792
        %2822 = vmatpush.bf16.msra.mxu0 %v2791
        %2823 = vmatpush.bf16.msra.mxu0 %v2790
        %2824 = vmatpush.bf16.msra.mxu0 %v2789
        %2825 = vmatpush.bf16.msra.mxu0 %v2788
        %2826 = vmatpush.bf16.msra.mxu0 %v2787
        %2827 = vmatmul.bf16.gmra.mxu0 %v2677
        %v2828 = vpop.f32.mrf.mxu0
        %v2829 = vadd.f32 %v2721, %v2828
        %v2830 = vpop.f32.mrf.mxu0
        %v2831 = vadd.f32 %v2721, %v2830
        %2832 = vmatmul.bf16.gmra.mxu0 %v2679
        %v2833 = vpop.f32.mrf.mxu0
        %v2834 = vadd.f32 %v2721, %v2833
        %v2835 = vpop.f32.mrf.mxu0
        %v2836 = vadd.f32 %v2721, %v2835
        %2837 = vmatmul.bf16.gmra.mxu0 %v2681
        %v2838 = vpop.f32.mrf.mxu0
        %v2839 = vadd.f32 %v2721, %v2838
        %v2840 = vpop.f32.mrf.mxu0
        %v2841 = vadd.f32 %v2721, %v2840
        %2842 = vmatmul.bf16.gmra.mxu0 %v2683
        %v2843 = vpop.f32.mrf.mxu0
        %v2844 = vadd.f32 %v2721, %v2843
        %v2845 = vpop.f32.mrf.mxu0
        %v2846 = vadd.f32 %v2721, %v2845
        %2847 = vmatmul.bf16.gmra.mxu0 %v2685
        %v2848 = vpop.f32.mrf.mxu0
        %v2849 = vadd.f32 %v2721, %v2848
        %v2850 = vpop.f32.mrf.mxu0
        %2851 = vdwg.mxu0
        %2852 = vmatpush.bf16.msra.mxu0 %v2802
        %2853 = vmatpush.bf16.msra.mxu0 %v2801
        %2854 = vmatpush.bf16.msra.mxu0 %v2800
        %2855 = vmatpush.bf16.msra.mxu0 %v2799
        %2856 = vmatpush.bf16.msra.mxu0 %v2798
        %2857 = vmatpush.bf16.msra.mxu0 %v2797
        %2858 = vmatpush.bf16.msra.mxu0 %v2796
        %2859 = vmatpush.bf16.msra.mxu0 %v2795
        %2860 = vmatmul.bf16.gmra.mxu0 %v2678
        %v2861 = vpop.f32.mrf.mxu0
        %v2862 = vadd.f32 %v2829, %v2861
        %v2863 = vpop.f32.mrf.mxu0
        %v2864 = vadd.f32 %v2831, %v2863
        %2865 = vmatmul.bf16.gmra.mxu0 %v2680
        %v2866 = vpop.f32.mrf.mxu0
        %v2867 = vadd.f32 %v2834, %v2866
        %v2868 = vpop.f32.mrf.mxu0
        %v2869 = vadd.f32 %v2836, %v2868
        %2870 = vmatmul.bf16.gmra.mxu0 %v2682
        %v2871 = vpop.f32.mrf.mxu0
        %v2872 = vadd.f32 %v2839, %v2871
        %v2873 = vpop.f32.mrf.mxu0
        %v2874 = vadd.f32 %v2841, %v2873
        %2875 = vmatmul.bf16.gmra.mxu0 %v2684
        %v2876 = vpop.f32.mrf.mxu0
        %v2877 = vadd.f32 %v2844, %v2876
        %v2878 = vpop.f32.mrf.mxu0
        %v2879 = vadd.f32 %v2846, %v2878
        %2880 = vmatmul.bf16.gmra.mxu0 %v2686
        %v2881 = vpop.f32.mrf.mxu0
        %v2882 = vadd.f32 %v2849, %v2881
        %v2883 = vpop.f32.mrf.mxu0
        %2884 = vdwg.mxu0
        %v2885 = vadd.f32 %v2477, %v2862
        %v2886 = vadd.f32 %v2478, %v2864
        %v2887 = vadd.f32 %v2479, %v2867
        %v2888 = vadd.f32 %v2480, %v2869
        %v2889 = vadd.f32 %v2481, %v2872
        %v2890 = vadd.f32 %v2482, %v2874
        %v2891 = vadd.f32 %v2483, %v2877
        %v2892 = vadd.f32 %v2484, %v2879
        %v2893 = vadd.f32 %v2485, %v2882
        %v2894 = vld [vmem:[%s980] sm:$0x1]
        %v2895 = vld [vmem:[%s989] sm:$0x1]
        %2896 = vadd.xlane.f32.xlu0 %v2885
        %v2897 = vpop.xlane.xlu0 %2896
        %2898 = vadd.xlane.f32.xlu0 %v2886
        %v2899 = vpop.xlane.xlu0 %2898
        %2900 = vadd.xlane.f32.xlu0 %v2887
        %v2901 = vpop.xlane.xlu0 %2900
        %2902 = vadd.xlane.f32.xlu0 %v2888
        %v2903 = vpop.xlane.xlu0 %2902
        %2904 = vadd.xlane.f32.xlu0 %v2889
        %v2905 = vpop.xlane.xlu0 %2904
        %2906 = vadd.xlane.f32.xlu0 %v2890
        %v2907 = vpop.xlane.xlu0 %2906
        %2908 = vadd.xlane.f32.xlu0 %v2891
        %v2909 = vpop.xlane.xlu0 %2908
        %2910 = vadd.xlane.f32.xlu0 %v2892
        %v2911 = vpop.xlane.xlu0 %2910
        %2912 = vadd.xlane.f32.xlu0 %v2893
        %v2913 = vpop.xlane.xlu0 %2912
        %v2914 = vmul.f32 %v2897, %v2299
        %v2915 = vmul.f32 %v2899, %v2299
        %v2916 = vmul.f32 %v2901, %v2299
        %v2917 = vmul.f32 %v2903, %v2299
        %v2918 = vmul.f32 %v2905, %v2299
        %v2919 = vmul.f32 %v2907, %v2299
        %v2920 = vmul.f32 %v2909, %v2299
        %v2921 = vmul.f32 %v2911, %v2299
        %v2922 = vmul.f32 %v2913, %v2299
        %v2923 = vsub.f32 %v2885, %v2914
        %v2924 = vsub.f32 %v2886, %v2915
        %v2925 = vsub.f32 %v2887, %v2916
        %v2926 = vsub.f32 %v2888, %v2917
        %v2927 = vsub.f32 %v2889, %v2918
        %v2928 = vsub.f32 %v2890, %v2919
        %v2929 = vsub.f32 %v2891, %v2920
        %v2930 = vsub.f32 %v2892, %v2921
        %v2931 = vsub.f32 %v2893, %v2922
        %v2932 = vmul.f32 %v2923, %v2923
        %v2933 = vmul.f32 %v2924, %v2924
        %v2934 = vmul.f32 %v2925, %v2925
        %v2935 = vmul.f32 %v2926, %v2926
        %v2936 = vmul.f32 %v2927, %v2927
        %v2937 = vmul.f32 %v2928, %v2928
        %v2938 = vmul.f32 %v2929, %v2929
        %v2939 = vmul.f32 %v2930, %v2930
        %v2940 = vmul.f32 %v2931, %v2931
        %2941 = vadd.xlane.f32.xlu0 %v2932
        %v2942 = vpop.xlane.xlu0 %2941
        %2943 = vadd.xlane.f32.xlu0 %v2933
        %v2944 = vpop.xlane.xlu0 %2943
        %2945 = vadd.xlane.f32.xlu0 %v2934
        %v2946 = vpop.xlane.xlu0 %2945
        %2947 = vadd.xlane.f32.xlu0 %v2935
        %v2948 = vpop.xlane.xlu0 %2947
        %2949 = vadd.xlane.f32.xlu0 %v2936
        %v2950 = vpop.xlane.xlu0 %2949
        %2951 = vadd.xlane.f32.xlu0 %v2937
        %v2952 = vpop.xlane.xlu0 %2951
        %2953 = vadd.xlane.f32.xlu0 %v2938
        %v2954 = vpop.xlane.xlu0 %2953
        %2955 = vadd.xlane.f32.xlu0 %v2939
        %v2956 = vpop.xlane.xlu0 %2955
        %2957 = vadd.xlane.f32.xlu0 %v2940
        %v2958 = vpop.xlane.xlu0 %2957
        %v2959 = vmul.f32 %v2942, %v2299
        %v2960 = vmul.f32 %v2944, %v2299
        %v2961 = vmul.f32 %v2946, %v2299
        %v2962 = vmul.f32 %v2948, %v2299
        %v2963 = vmul.f32 %v2950, %v2299
        %v2964 = vmul.f32 %v2952, %v2299
        %v2965 = vmul.f32 %v2954, %v2299
        %v2966 = vmul.f32 %v2956, %v2299
        %v2967 = vmul.f32 %v2958, %v2299
        %v2968 = vadd.f32 %v2959, 1e-05
        %v2969 = vadd.f32 %v2960, 1e-05
        %v2970 = vadd.f32 %v2961, 1e-05
        %v2971 = vadd.f32 %v2962, 1e-05
        %v2972 = vadd.f32 %v2963, 1e-05
        %v2973 = vadd.f32 %v2964, 1e-05
        %v2974 = vadd.f32 %v2965, 1e-05
        %v2975 = vadd.f32 %v2966, 1e-05
        %v2976 = vadd.f32 %v2967, 1e-05
        %v2977 = vrsqrt.pop %v2968
        %v2978 = vmul.f32 %v2977, %v2968
        %v2979 = vmul.f32 %v2978, %v2977
        %v2980 = vmul.f32 0.5, %v2979
        %v2981 = vsub.f32 1.5, %v2980
        %v2982 = vmul.f32 %v2977, %v2981
        %vm2983 = vweird.f32 %v2968
        %vm2984 = vweird.f32 %v2977
        %vm2985 = vmor %vm2983, %vm2984
        %v2986 = vsel %vm2985, %v2977, %v2982
        %v2987 = vrsqrt.pop %v2969
        %v2988 = vmul.f32 %v2987, %v2969
        %v2989 = vmul.f32 %v2988, %v2987
        %v2990 = vmul.f32 0.5, %v2989
        %v2991 = vsub.f32 1.5, %v2990
        %v2992 = vmul.f32 %v2987, %v2991
        %vm2993 = vweird.f32 %v2969
        %vm2994 = vweird.f32 %v2987
        %vm2995 = vmor %vm2993, %vm2994
        %v2996 = vsel %vm2995, %v2987, %v2992
        %v2997 = vrsqrt.pop %v2970
        %v2998 = vmul.f32 %v2997, %v2970
        %v2999 = vmul.f32 %v2998, %v2997
        %v3000 = vmul.f32 0.5, %v2999
        %v3001 = vsub.f32 1.5, %v3000
        %v3002 = vmul.f32 %v2997, %v3001
        %vm3003 = vweird.f32 %v2970
        %vm3004 = vweird.f32 %v2997
        %vm3005 = vmor %vm3003, %vm3004
        %v3006 = vsel %vm3005, %v2997, %v3002
        %v3007 = vrsqrt.pop %v2971
        %v3008 = vmul.f32 %v3007, %v2971
        %v3009 = vmul.f32 %v3008, %v3007
        %v3010 = vmul.f32 0.5, %v3009
        %v3011 = vsub.f32 1.5, %v3010
        %v3012 = vmul.f32 %v3007, %v3011
        %vm3013 = vweird.f32 %v2971
        %vm3014 = vweird.f32 %v3007
        %vm3015 = vmor %vm3013, %vm3014
        %v3016 = vsel %vm3015, %v3007, %v3012
        %v3017 = vrsqrt.pop %v2972
        %v3018 = vmul.f32 %v3017, %v2972
        %v3019 = vmul.f32 %v3018, %v3017
        %v3020 = vmul.f32 0.5, %v3019
        %v3021 = vsub.f32 1.5, %v3020
        %v3022 = vmul.f32 %v3017, %v3021
        %vm3023 = vweird.f32 %v2972
        %vm3024 = vweird.f32 %v3017
        %vm3025 = vmor %vm3023, %vm3024
        %v3026 = vsel %vm3025, %v3017, %v3022
        %v3027 = vrsqrt.pop %v2973
        %v3028 = vmul.f32 %v3027, %v2973
        %v3029 = vmul.f32 %v3028, %v3027
        %v3030 = vmul.f32 0.5, %v3029
        %v3031 = vsub.f32 1.5, %v3030
        %v3032 = vmul.f32 %v3027, %v3031
        %vm3033 = vweird.f32 %v2973
        %vm3034 = vweird.f32 %v3027
        %vm3035 = vmor %vm3033, %vm3034
        %v3036 = vsel %vm3035, %v3027, %v3032
        %v3037 = vrsqrt.pop %v2974
        %v3038 = vmul.f32 %v3037, %v2974
        %v3039 = vmul.f32 %v3038, %v3037
        %v3040 = vmul.f32 0.5, %v3039
        %v3041 = vsub.f32 1.5, %v3040
        %v3042 = vmul.f32 %v3037, %v3041
        %vm3043 = vweird.f32 %v2974
        %vm3044 = vweird.f32 %v3037
        %vm3045 = vmor %vm3043, %vm3044
        %v3046 = vsel %vm3045, %v3037, %v3042
        %v3047 = vrsqrt.pop %v2975
        %v3048 = vmul.f32 %v3047, %v2975
        %v3049 = vmul.f32 %v3048, %v3047
        %v3050 = vmul.f32 0.5, %v3049
        %v3051 = vsub.f32 1.5, %v3050
        %v3052 = vmul.f32 %v3047, %v3051
        %vm3053 = vweird.f32 %v2975
        %vm3054 = vweird.f32 %v3047
        %vm3055 = vmor %vm3053, %vm3054
        %v3056 = vsel %vm3055, %v3047, %v3052
        %v3057 = vrsqrt.pop %v2976
        %v3058 = vmul.f32 %v3057, %v2976
        %v3059 = vmul.f32 %v3058, %v3057
        %v3060 = vmul.f32 0.5, %v3059
        %v3061 = vsub.f32 1.5, %v3060
        %v3062 = vmul.f32 %v3057, %v3061
        %vm3063 = vweird.f32 %v2976
        %vm3064 = vweird.f32 %v3057
        %vm3065 = vmor %vm3063, %vm3064
        %v3066 = vsel %vm3065, %v3057, %v3062
        %v3067 = vmul.f32 %v2923, %v2986
        %v3068 = vmul.f32 %v2924, %v2996
        %v3069 = vmul.f32 %v2925, %v3006
        %v3070 = vmul.f32 %v2926, %v3016
        %v3071 = vmul.f32 %v2927, %v3026
        %v3072 = vmul.f32 %v2928, %v3036
        %v3073 = vmul.f32 %v2929, %v3046
        %v3074 = vmul.f32 %v2930, %v3056
        %v3075 = vmul.f32 %v2931, %v3066
        %v3077 = vperm.slane %v2894, 0
        %v3079 = vmul.f32 %v3067, %v3077
        %v3080 = vmul.f32 %v3068, %v3077
        %v3081 = vmul.f32 %v3069, %v3077
        %v3082 = vmul.f32 %v3070, %v3077
        %v3083 = vmul.f32 %v3071, %v3077
        %v3084 = vmul.f32 %v3072, %v3077
        %v3085 = vmul.f32 %v3073, %v3077
        %v3086 = vmul.f32 %v3074, %v3077
        %v3087 = vmul.f32 %v3075, %v3077
        %v3089 = vperm.slane %v2895, 0
        %v3091 = vadd.f32 %v3079, %v3089
        %v3092 = vadd.f32 %v3080, %v3089
        %v3093 = vadd.f32 %v3081, %v3089
        %v3094 = vadd.f32 %v3082, %v3089
        %v3095 = vadd.f32 %v3083, %v3089
        %v3096 = vadd.f32 %v3084, %v3089
        %v3097 = vadd.f32 %v3085, %v3089
        %v3098 = vadd.f32 %v3086, %v3089
        %v3099 = vadd.f32 %v3087, %v3089
        %3100 = vst [vmem:[#allocation2] sm:$0xff] %v3091
        %3101 = vst [vmem:[#allocation2 + $0x8] sm:$0xff] %v3092
        %3102 = vst [vmem:[#allocation2 + $0x10] sm:$0xff] %v3093
        %3103 = vst [vmem:[#allocation2 + $0x18] sm:$0xff] %v3094
        %3104 = vst [vmem:[#allocation2 + $0x20] sm:$0xff] %v3095
        %3105 = vst [vmem:[#allocation2 + $0x28] sm:$0xff] %v3096
        %3106 = vst [vmem:[#allocation2 + $0x30] sm:$0xff] %v3097
        %3107 = vst [vmem:[#allocation2 + $0x38] sm:$0xff] %v3098
        %3108 = vst [vmem:[#allocation2 + $0x40] sm:$0xff] %v3099
        %p3109 = scmp.eq.s32.totalorder %s52, 1
        // Predicated region
        $region169: #{tpu_custom_call.1} parent=107 // pred_check
          %p3110 = pneg %p3109
        $region170: #{tpu_custom_call.1} parent=107 // pred_check_branch
          %3112 = sbr.rel (%p3110) target = $region172
        $region171: #{tpu_custom_call.1} parent=107 // pred_region
          %v3113 = vpack.c.bf16 %v3091, %v3091
          %v3114 = vld [vmem:[#allocation24] sm:$0xff]
          %v3115 = vld [vmem:[#allocation24 + $0x8] sm:$0xff]
          %v3116 = vld [vmem:[#allocation24 + $0x10] sm:$0xff]
          %v3117 = vld [vmem:[#allocation24 + $0x18] sm:$0xff]
          %v3118 = vld [vmem:[#allocation24 + $0x20] sm:$0xff]
          %v3119 = vld [vmem:[#allocation24 + $0x28] sm:$0xff]
          %v3120 = vld [vmem:[#allocation24 + $0x30] sm:$0xff]
          %v3121 = vld [vmem:[#allocation24 + $0x38] sm:$0xff]
          %v3122 = vld [vmem:[#allocation24 + $0x40] sm:$0xff]
          %v3123 = vld [vmem:[#allocation24 + $0x48] sm:$0xff]
          %v3124 = vld [vmem:[#allocation24 + $0x50] sm:$0xff]
          %v3125 = vld [vmem:[#allocation24 + $0x58] sm:$0xff]
          %v3126 = vld [vmem:[#allocation24 + $0x60] sm:$0xff]
          %v3127 = vld [vmem:[#allocation24 + $0x68] sm:$0xff]
          %v3128 = vld [vmem:[#allocation24 + $0x70] sm:$0xff]
          %v3129 = vld [vmem:[#allocation24 + $0x78] sm:$0xff]
          %v3130 = vld [vmem:[#allocation24 + $0x80] sm:$0xff]
          %v3131 = vld [vmem:[#allocation24 + $0x88] sm:$0xff]
          %v3132 = vld [vmem:[#allocation24 + $0x90] sm:$0xff]
          %v3133 = vld [vmem:[#allocation24 + $0x98] sm:$0xff]
          %v3134 = vld [vmem:[#allocation24 + $0xa0] sm:$0xff]
          %v3135 = vld [vmem:[#allocation24 + $0xa8] sm:$0xff]
          %v3136 = vld [vmem:[#allocation24 + $0xb0] sm:$0xff]
          %v3137 = vld [vmem:[#allocation24 + $0xb8] sm:$0xff]
          %v3138 = vld [vmem:[#allocation24 + $0xc0] sm:$0xff]
          %v3139 = vld [vmem:[#allocation24 + $0xc8] sm:$0xff]
          %v3140 = vld [vmem:[#allocation24 + $0xd0] sm:$0xff]
          %v3141 = vld [vmem:[#allocation24 + $0xd8] sm:$0xff]
          %v3142 = vld [vmem:[#allocation24 + $0xe0] sm:$0xff]
          %v3143 = vld [vmem:[#allocation24 + $0xe8] sm:$0xff]
          %v3144 = vld [vmem:[#allocation24 + $0xf0] sm:$0xff]
          %v3145 = vld [vmem:[#allocation24 + $0xf8] sm:$0xff]
          %v3146 = vld [vmem:[%s17] sm:$0xf]
          %v3148 = vperm.slane %v3146, 0
          %v3149 = vperm.slane %v3146, 1
          %v3150 = vperm.slane %v3146, 2
          %v3151 = vperm.slane %v3146, 3
          %v3188 = vunpack.c.l.b16 %v3114
          %v3189 = vunpack.c.h.b16 %v3114
          %v3190 = vunpack.c.l.b16 %v3115
          %v3191 = vunpack.c.h.b16 %v3115
          %v3192 = vunpack.c.l.b16 %v3116
          %v3193 = vunpack.c.h.b16 %v3116
          %v3194 = vunpack.c.l.b16 %v3117
          %v3195 = vunpack.c.h.b16 %v3117
          %v3196 = vunpack.c.l.b16 %v3118
          %v3197 = vunpack.c.h.b16 %v3118
          %v3198 = vunpack.c.l.b16 %v3119
          %v3199 = vunpack.c.h.b16 %v3119
          %v3200 = vunpack.c.l.b16 %v3120
          %v3201 = vunpack.c.h.b16 %v3120
          %v3202 = vunpack.c.l.b16 %v3121
          %v3203 = vunpack.c.h.b16 %v3121
          %v3204 = vunpack.c.l.b16 %v3122
          %v3205 = vunpack.c.h.b16 %v3122
          %v3206 = vunpack.c.l.b16 %v3123
          %v3207 = vunpack.c.h.b16 %v3123
          %v3208 = vunpack.c.l.b16 %v3124
          %v3209 = vunpack.c.h.b16 %v3124
          %v3210 = vunpack.c.l.b16 %v3125
          %v3211 = vunpack.c.h.b16 %v3125
          %v3212 = vunpack.c.l.b16 %v3126
          %v3213 = vunpack.c.h.b16 %v3126
          %v3214 = vunpack.c.l.b16 %v3127
          %v3215 = vunpack.c.h.b16 %v3127
          %v3216 = vunpack.c.l.b16 %v3128
          %v3217 = vunpack.c.h.b16 %v3128
          %v3218 = vunpack.c.l.b16 %v3129
          %v3219 = vunpack.c.h.b16 %v3129
          %v3220 = vunpack.c.l.b16 %v3130
          %v3221 = vunpack.c.h.b16 %v3130
          %v3222 = vunpack.c.l.b16 %v3131
          %v3223 = vunpack.c.h.b16 %v3131
          %v3224 = vunpack.c.l.b16 %v3132
          %v3225 = vunpack.c.h.b16 %v3132
          %v3226 = vunpack.c.l.b16 %v3133
          %v3227 = vunpack.c.h.b16 %v3133
          %v3228 = vunpack.c.l.b16 %v3134
          %v3229 = vunpack.c.h.b16 %v3134
          %v3230 = vunpack.c.l.b16 %v3135
          %v3231 = vunpack.c.h.b16 %v3135
          %v3232 = vunpack.c.l.b16 %v3136
          %v3233 = vunpack.c.h.b16 %v3136
          %v3234 = vunpack.c.l.b16 %v3137
          %v3235 = vunpack.c.h.b16 %v3137
          %v3236 = vunpack.c.l.b16 %v3138
          %v3237 = vunpack.c.h.b16 %v3138
          %v3238 = vunpack.c.l.b16 %v3139
          %v3239 = vunpack.c.h.b16 %v3139
          %v3240 = vunpack.c.l.b16 %v3140
          %v3241 = vunpack.c.h.b16 %v3140
          %v3242 = vunpack.c.l.b16 %v3141
          %v3243 = vunpack.c.h.b16 %v3141
          %v3244 = vunpack.c.l.b16 %v3142
          %v3245 = vunpack.c.h.b16 %v3142
          %v3246 = vunpack.c.l.b16 %v3143
          %v3247 = vunpack.c.h.b16 %v3143
          %v3248 = vunpack.c.l.b16 %v3144
          %v3249 = vunpack.c.h.b16 %v3144
          %v3250 = vunpack.c.l.b16 %v3145
          %v3251 = vunpack.c.h.b16 %v3145
          %v3252 = vpack.c.b16 %v3192, %v3188
          %v3253 = vpack.c.b16 %v3193, %v3189
          %v3254 = vpack.c.b16 %v3194, %v3190
          %v3255 = vpack.c.b16 %v3195, %v3191
          %v3256 = vpack.c.b16 %v3200, %v3196
          %v3257 = vpack.c.b16 %v3201, %v3197
          %v3258 = vpack.c.b16 %v3202, %v3198
          %v3259 = vpack.c.b16 %v3203, %v3199
          %v3260 = vpack.c.b16 %v3208, %v3204
          %v3261 = vpack.c.b16 %v3209, %v3205
          %v3262 = vpack.c.b16 %v3210, %v3206
          %v3263 = vpack.c.b16 %v3211, %v3207
          %v3264 = vpack.c.b16 %v3216, %v3212
          %v3265 = vpack.c.b16 %v3217, %v3213
          %v3266 = vpack.c.b16 %v3218, %v3214
          %v3267 = vpack.c.b16 %v3219, %v3215
          %v3268 = vpack.c.b16 %v3224, %v3220
          %v3269 = vpack.c.b16 %v3225, %v3221
          %v3270 = vpack.c.b16 %v3226, %v3222
          %v3271 = vpack.c.b16 %v3227, %v3223
          %v3272 = vpack.c.b16 %v3232, %v3228
          %v3273 = vpack.c.b16 %v3233, %v3229
          %v3274 = vpack.c.b16 %v3234, %v3230
          %v3275 = vpack.c.b16 %v3235, %v3231
          %v3276 = vpack.c.b16 %v3240, %v3236
          %v3277 = vpack.c.b16 %v3241, %v3237
          %v3278 = vpack.c.b16 %v3242, %v3238
          %v3279 = vpack.c.b16 %v3243, %v3239
          %v3280 = vpack.c.b16 %v3248, %v3244
          %v3281 = vpack.c.b16 %v3249, %v3245
          %v3282 = vpack.c.b16 %v3250, %v3246
          %v3283 = vpack.c.b16 %v3251, %v3247
          %3316 = vmatpush.bf16.msra.mxu0 %v3280
          %3317 = vmatpush.bf16.msra.mxu0 %v3276
          %3318 = vmatpush.bf16.msra.mxu0 %v3272
          %3319 = vmatpush.bf16.msra.mxu0 %v3268
          %3320 = vmatpush.bf16.msra.mxu0 %v3264
          %3321 = vmatpush.bf16.msra.mxu0 %v3260
          %3322 = vmatpush.bf16.msra.mxu0 %v3256
          %3323 = vmatpush.bf16.msra.mxu0 %v3252
          %3324 = vmatmul.bf16.gmra.mxu0 %v3113
          %v3325 = vpop.f32.mrf.mxu0
          %v3326 = vadd.f32 %v3148, %v3325
          %v3327 = vpop.f32.mrf.mxu0
          %3328 = vdwg.mxu0
          %3329 = vmatpush.bf16.msra.mxu0 %v3281
          %3330 = vmatpush.bf16.msra.mxu0 %v3277
          %3331 = vmatpush.bf16.msra.mxu0 %v3273
          %3332 = vmatpush.bf16.msra.mxu0 %v3269
          %3333 = vmatpush.bf16.msra.mxu0 %v3265
          %3334 = vmatpush.bf16.msra.mxu0 %v3261
          %3335 = vmatpush.bf16.msra.mxu0 %v3257
          %3336 = vmatpush.bf16.msra.mxu0 %v3253
          %3337 = vmatmul.bf16.gmra.mxu0 %v3113
          %v3338 = vpop.f32.mrf.mxu0
          %v3339 = vadd.f32 %v3149, %v3338
          %v3340 = vpop.f32.mrf.mxu0
          %3341 = vdwg.mxu0
          %3342 = vmatpush.bf16.msra.mxu0 %v3282
          %3343 = vmatpush.bf16.msra.mxu0 %v3278
          %3344 = vmatpush.bf16.msra.mxu0 %v3274
          %3345 = vmatpush.bf16.msra.mxu0 %v3270
          %3346 = vmatpush.bf16.msra.mxu0 %v3266
          %3347 = vmatpush.bf16.msra.mxu0 %v3262
          %3348 = vmatpush.bf16.msra.mxu0 %v3258
          %3349 = vmatpush.bf16.msra.mxu0 %v3254
          %3350 = vmatmul.bf16.gmra.mxu0 %v3113
          %v3351 = vpop.f32.mrf.mxu0
          %v3352 = vadd.f32 %v3150, %v3351
          %v3353 = vpop.f32.mrf.mxu0
          %3354 = vdwg.mxu0
          %3355 = vmatpush.bf16.msra.mxu0 %v3283
          %3356 = vmatpush.bf16.msra.mxu0 %v3279
          %3357 = vmatpush.bf16.msra.mxu0 %v3275
          %3358 = vmatpush.bf16.msra.mxu0 %v3271
          %3359 = vmatpush.bf16.msra.mxu0 %v3267
          %3360 = vmatpush.bf16.msra.mxu0 %v3263
          %3361 = vmatpush.bf16.msra.mxu0 %v3259
          %3362 = vmatpush.bf16.msra.mxu0 %v3255
          %3363 = vmatmul.bf16.gmra.mxu0 %v3113
          %v3364 = vpop.f32.mrf.mxu0
          %v3365 = vadd.f32 %v3151, %v3364
          %v3366 = vpop.f32.mrf.mxu0
          %3367 = vdwg.mxu0
          %v3368 = vmax.f32 %v3326, 0.0
          %v3369 = vmax.f32 %v3339, 0.0
          %v3370 = vmax.f32 %v3352, 0.0
          %v3371 = vmax.f32 %v3365, 0.0
          %v3372 = vpack.c.bf16 %v3368, %v3368
          %v3373 = vpack.c.bf16 %v3369, %v3369
          %v3374 = vpack.c.bf16 %v3370, %v3370
          %v3375 = vpack.c.bf16 %v3371, %v3371
          %v3376 = vld [vmem:[#allocation25] sm:$0xf]
          %v3377 = vld [vmem:[#allocation25 + $0x4] sm:$0xf]
          %v3378 = vld [vmem:[#allocation25 + $0x8] sm:$0xf]
          %v3379 = vld [vmem:[#allocation25 + $0xc] sm:$0xf]
          %v3380 = vld [vmem:[#allocation25 + $0x10] sm:$0xf]
          %v3381 = vld [vmem:[#allocation25 + $0x14] sm:$0xf]
          %v3382 = vld [vmem:[#allocation25 + $0x18] sm:$0xf]
          %v3383 = vld [vmem:[#allocation25 + $0x1c] sm:$0xf]
          %v3384 = vld [vmem:[#allocation25 + $0x20] sm:$0xf]
          %v3385 = vld [vmem:[#allocation25 + $0x24] sm:$0xf]
          %v3386 = vld [vmem:[#allocation25 + $0x28] sm:$0xf]
          %v3387 = vld [vmem:[#allocation25 + $0x2c] sm:$0xf]
          %v3388 = vld [vmem:[#allocation25 + $0x30] sm:$0xf]
          %v3389 = vld [vmem:[#allocation25 + $0x34] sm:$0xf]
          %v3390 = vld [vmem:[#allocation25 + $0x38] sm:$0xf]
          %v3391 = vld [vmem:[#allocation25 + $0x3c] sm:$0xf]
          %v3392 = vld [vmem:[#allocation25 + $0x40] sm:$0xf]
          %v3393 = vld [vmem:[#allocation25 + $0x44] sm:$0xf]
          %v3394 = vld [vmem:[#allocation25 + $0x48] sm:$0xf]
          %v3395 = vld [vmem:[#allocation25 + $0x4c] sm:$0xf]
          %v3396 = vld [vmem:[#allocation25 + $0x50] sm:$0xf]
          %v3397 = vld [vmem:[#allocation25 + $0x54] sm:$0xf]
          %v3398 = vld [vmem:[#allocation25 + $0x58] sm:$0xf]
          %v3399 = vld [vmem:[#allocation25 + $0x5c] sm:$0xf]
          %v3400 = vld [vmem:[#allocation25 + $0x60] sm:$0xf]
          %v3401 = vld [vmem:[#allocation25 + $0x64] sm:$0xf]
          %v3402 = vld [vmem:[#allocation25 + $0x68] sm:$0xf]
          %v3403 = vld [vmem:[#allocation25 + $0x6c] sm:$0xf]
          %v3404 = vld [vmem:[#allocation25 + $0x70] sm:$0xf]
          %v3405 = vld [vmem:[#allocation25 + $0x74] sm:$0xf]
          %v3406 = vld [vmem:[#allocation25 + $0x78] sm:$0xf]
          %v3407 = vld [vmem:[#allocation25 + $0x7c] sm:$0xf]
          %v3408 = vld [vmem:[#allocation25 + $0x80] sm:$0xf]
          %v3409 = vld [vmem:[#allocation25 + $0x84] sm:$0xf]
          %v3410 = vld [vmem:[#allocation25 + $0x88] sm:$0xf]
          %v3411 = vld [vmem:[#allocation25 + $0x8c] sm:$0xf]
          %v3412 = vld [vmem:[#allocation25 + $0x90] sm:$0xf]
          %v3413 = vld [vmem:[#allocation25 + $0x94] sm:$0xf]
          %v3414 = vld [vmem:[#allocation25 + $0x98] sm:$0xf]
          %v3415 = vld [vmem:[#allocation25 + $0x9c] sm:$0xf]
          %v3416 = vld [vmem:[#allocation25 + $0xa0] sm:$0xf]
          %v3417 = vld [vmem:[#allocation25 + $0xa4] sm:$0xf]
          %v3418 = vld [vmem:[#allocation25 + $0xa8] sm:$0xf]
          %v3419 = vld [vmem:[#allocation25 + $0xac] sm:$0xf]
          %v3420 = vld [vmem:[#allocation25 + $0xb0] sm:$0xf]
          %v3421 = vld [vmem:[#allocation25 + $0xb4] sm:$0xf]
          %v3422 = vld [vmem:[#allocation25 + $0xb8] sm:$0xf]
          %v3423 = vld [vmem:[#allocation25 + $0xbc] sm:$0xf]
          %v3424 = vld [vmem:[#allocation25 + $0xc0] sm:$0xf]
          %v3425 = vld [vmem:[#allocation25 + $0xc4] sm:$0xf]
          %v3426 = vld [vmem:[#allocation25 + $0xc8] sm:$0xf]
          %v3427 = vld [vmem:[#allocation25 + $0xcc] sm:$0xf]
          %v3428 = vld [vmem:[#allocation25 + $0xd0] sm:$0xf]
          %v3429 = vld [vmem:[#allocation25 + $0xd4] sm:$0xf]
          %v3430 = vld [vmem:[#allocation25 + $0xd8] sm:$0xf]
          %v3431 = vld [vmem:[#allocation25 + $0xdc] sm:$0xf]
          %v3432 = vld [vmem:[#allocation25 + $0xe0] sm:$0xf]
          %v3433 = vld [vmem:[#allocation25 + $0xe4] sm:$0xf]
          %v3434 = vld [vmem:[#allocation25 + $0xe8] sm:$0xf]
          %v3435 = vld [vmem:[#allocation25 + $0xec] sm:$0xf]
          %v3436 = vld [vmem:[#allocation25 + $0xf0] sm:$0xf]
          %v3437 = vld [vmem:[#allocation25 + $0xf4] sm:$0xf]
          %v3438 = vld [vmem:[#allocation25 + $0xf8] sm:$0xf]
          %v3439 = vld [vmem:[#allocation25 + $0xfc] sm:$0xf]
          %v3440 = vld [vmem:[%s19] sm:$0x1]
          %v3442 = vperm.slane %v3440, 0
          %v3508 = vunpack.c.l.b16 %v3376
          %v3509 = vunpack.c.l.b16 %v3377
          %v3510 = vunpack.c.l.b16 %v3378
          %v3511 = vunpack.c.l.b16 %v3379
          %v3512 = vunpack.c.l.b16 %v3380
          %v3513 = vunpack.c.l.b16 %v3381
          %v3514 = vunpack.c.l.b16 %v3382
          %v3515 = vunpack.c.l.b16 %v3383
          %v3516 = vunpack.c.l.b16 %v3384
          %v3517 = vunpack.c.l.b16 %v3385
          %v3518 = vunpack.c.l.b16 %v3386
          %v3519 = vunpack.c.l.b16 %v3387
          %v3520 = vunpack.c.l.b16 %v3388
          %v3521 = vunpack.c.l.b16 %v3389
          %v3522 = vunpack.c.l.b16 %v3390
          %v3523 = vunpack.c.l.b16 %v3391
          %v3524 = vunpack.c.l.b16 %v3392
          %v3525 = vunpack.c.l.b16 %v3393
          %v3526 = vunpack.c.l.b16 %v3394
          %v3527 = vunpack.c.l.b16 %v3395
          %v3528 = vunpack.c.l.b16 %v3396
          %v3529 = vunpack.c.l.b16 %v3397
          %v3530 = vunpack.c.l.b16 %v3398
          %v3531 = vunpack.c.l.b16 %v3399
          %v3532 = vunpack.c.l.b16 %v3400
          %v3533 = vunpack.c.l.b16 %v3401
          %v3534 = vunpack.c.l.b16 %v3402
          %v3535 = vunpack.c.l.b16 %v3403
          %v3536 = vunpack.c.l.b16 %v3404
          %v3537 = vunpack.c.l.b16 %v3405
          %v3538 = vunpack.c.l.b16 %v3406
          %v3539 = vunpack.c.l.b16 %v3407
          %v3540 = vunpack.c.l.b16 %v3408
          %v3541 = vunpack.c.l.b16 %v3409
          %v3542 = vunpack.c.l.b16 %v3410
          %v3543 = vunpack.c.l.b16 %v3411
          %v3544 = vunpack.c.l.b16 %v3412
          %v3545 = vunpack.c.l.b16 %v3413
          %v3546 = vunpack.c.l.b16 %v3414
          %v3547 = vunpack.c.l.b16 %v3415
          %v3548 = vunpack.c.l.b16 %v3416
          %v3549 = vunpack.c.l.b16 %v3417
          %v3550 = vunpack.c.l.b16 %v3418
          %v3551 = vunpack.c.l.b16 %v3419
          %v3552 = vunpack.c.l.b16 %v3420
          %v3553 = vunpack.c.l.b16 %v3421
          %v3554 = vunpack.c.l.b16 %v3422
          %v3555 = vunpack.c.l.b16 %v3423
          %v3556 = vunpack.c.l.b16 %v3424
          %v3557 = vunpack.c.l.b16 %v3425
          %v3558 = vunpack.c.l.b16 %v3426
          %v3559 = vunpack.c.l.b16 %v3427
          %v3560 = vunpack.c.l.b16 %v3428
          %v3561 = vunpack.c.l.b16 %v3429
          %v3562 = vunpack.c.l.b16 %v3430
          %v3563 = vunpack.c.l.b16 %v3431
          %v3564 = vunpack.c.l.b16 %v3432
          %v3565 = vunpack.c.l.b16 %v3433
          %v3566 = vunpack.c.l.b16 %v3434
          %v3567 = vunpack.c.l.b16 %v3435
          %v3568 = vunpack.c.l.b16 %v3436
          %v3569 = vunpack.c.l.b16 %v3437
          %v3570 = vunpack.c.l.b16 %v3438
          %v3571 = vunpack.c.l.b16 %v3439
          %v3572 = vpack.c.b16 %v3509, %v3508
          %v3573 = vpack.c.b16 %v3511, %v3510
          %v3574 = vpack.c.b16 %v3513, %v3512
          %v3575 = vpack.c.b16 %v3515, %v3514
          %v3576 = vpack.c.b16 %v3517, %v3516
          %v3577 = vpack.c.b16 %v3519, %v3518
          %v3578 = vpack.c.b16 %v3521, %v3520
          %v3579 = vpack.c.b16 %v3523, %v3522
          %v3580 = vpack.c.b16 %v3525, %v3524
          %v3581 = vpack.c.b16 %v3527, %v3526
          %v3582 = vpack.c.b16 %v3529, %v3528
          %v3583 = vpack.c.b16 %v3531, %v3530
          %v3584 = vpack.c.b16 %v3533, %v3532
          %v3585 = vpack.c.b16 %v3535, %v3534
          %v3586 = vpack.c.b16 %v3537, %v3536
          %v3587 = vpack.c.b16 %v3539, %v3538
          %v3588 = vpack.c.b16 %v3541, %v3540
          %v3589 = vpack.c.b16 %v3543, %v3542
          %v3590 = vpack.c.b16 %v3545, %v3544
          %v3591 = vpack.c.b16 %v3547, %v3546
          %v3592 = vpack.c.b16 %v3549, %v3548
          %v3593 = vpack.c.b16 %v3551, %v3550
          %v3594 = vpack.c.b16 %v3553, %v3552
          %v3595 = vpack.c.b16 %v3555, %v3554
          %v3596 = vpack.c.b16 %v3557, %v3556
          %v3597 = vpack.c.b16 %v3559, %v3558
          %v3598 = vpack.c.b16 %v3561, %v3560
          %v3599 = vpack.c.b16 %v3563, %v3562
          %v3600 = vpack.c.b16 %v3565, %v3564
          %v3601 = vpack.c.b16 %v3567, %v3566
          %v3602 = vpack.c.b16 %v3569, %v3568
          %v3603 = vpack.c.b16 %v3571, %v3570
          %3636 = vmatpush.bf16.msra.mxu0 %v3579
          %3637 = vmatpush.bf16.msra.mxu0 %v3578
          %3638 = vmatpush.bf16.msra.mxu0 %v3577
          %3639 = vmatpush.bf16.msra.mxu0 %v3576
          %3640 = vmatpush.bf16.msra.mxu0 %v3575
          %3641 = vmatpush.bf16.msra.mxu0 %v3574
          %3642 = vmatpush.bf16.msra.mxu0 %v3573
          %3643 = vmatpush.bf16.msra.mxu0 %v3572
          %3644 = vmatmul.bf16.gmra.mxu0 %v3372
          %v3645 = vpop.f32.mrf.mxu0
          %v3646 = vadd.f32 %v3442, %v3645
          %v3647 = vpop.f32.mrf.mxu0
          %3648 = vdwg.mxu0
          %3649 = vmatpush.bf16.msra.mxu0 %v3587
          %3650 = vmatpush.bf16.msra.mxu0 %v3586
          %3651 = vmatpush.bf16.msra.mxu0 %v3585
          %3652 = vmatpush.bf16.msra.mxu0 %v3584
          %3653 = vmatpush.bf16.msra.mxu0 %v3583
          %3654 = vmatpush.bf16.msra.mxu0 %v3582
          %3655 = vmatpush.bf16.msra.mxu0 %v3581
          %3656 = vmatpush.bf16.msra.mxu0 %v3580
          %3657 = vmatmul.bf16.gmra.mxu0 %v3373
          %v3658 = vpop.f32.mrf.mxu0
          %v3659 = vadd.f32 %v3646, %v3658
          %v3660 = vpop.f32.mrf.mxu0
          %3661 = vdwg.mxu0
          %3662 = vmatpush.bf16.msra.mxu0 %v3595
          %3663 = vmatpush.bf16.msra.mxu0 %v3594
          %3664 = vmatpush.bf16.msra.mxu0 %v3593
          %3665 = vmatpush.bf16.msra.mxu0 %v3592
          %3666 = vmatpush.bf16.msra.mxu0 %v3591
          %3667 = vmatpush.bf16.msra.mxu0 %v3590
          %3668 = vmatpush.bf16.msra.mxu0 %v3589
          %3669 = vmatpush.bf16.msra.mxu0 %v3588
          %3670 = vmatmul.bf16.gmra.mxu0 %v3374
          %v3671 = vpop.f32.mrf.mxu0
          %v3672 = vadd.f32 %v3659, %v3671
          %v3673 = vpop.f32.mrf.mxu0
          %3674 = vdwg.mxu0
          %3675 = vmatpush.bf16.msra.mxu0 %v3603
          %3676 = vmatpush.bf16.msra.mxu0 %v3602
          %3677 = vmatpush.bf16.msra.mxu0 %v3601
          %3678 = vmatpush.bf16.msra.mxu0 %v3600
          %3679 = vmatpush.bf16.msra.mxu0 %v3599
          %3680 = vmatpush.bf16.msra.mxu0 %v3598
          %3681 = vmatpush.bf16.msra.mxu0 %v3597
          %3682 = vmatpush.bf16.msra.mxu0 %v3596
          %3683 = vmatmul.bf16.gmra.mxu0 %v3375
          %v3684 = vpop.f32.mrf.mxu0
          %v3685 = vadd.f32 %v3672, %v3684
          %v3686 = vpop.f32.mrf.mxu0
          %3687 = vdwg.mxu0
          %v3688 = vmax.f32 %v3685, 0.0
          %v3689 = vpack.c.bf16 %v3688, %v3688
          %v3690 = vld [vmem:[%s20] sm:$0xf]
          %v3691 = vld [vmem:[%s20 + $0x4] sm:$0xf]
          %v3692 = vld [vmem:[%s20 + $0x8] sm:$0xf]
          %v3693 = vld [vmem:[%s20 + $0xc] sm:$0xf]
          %v3694 = vld [vmem:[%s20 + $0x10] sm:$0xf]
          %v3695 = vld [vmem:[%s20 + $0x14] sm:$0xf]
          %v3696 = vld [vmem:[%s20 + $0x18] sm:$0xf]
          %v3697 = vld [vmem:[%s20 + $0x1c] sm:$0xf]
          %v3698 = vld [vmem:[%s20 + $0x20] sm:$0xf]
          %v3699 = vld [vmem:[%s20 + $0x24] sm:$0xf]
          %v3700 = vld [vmem:[%s20 + $0x28] sm:$0xf]
          %v3701 = vld [vmem:[%s20 + $0x2c] sm:$0xf]
          %v3702 = vld [vmem:[%s20 + $0x30] sm:$0xf]
          %v3703 = vld [vmem:[%s20 + $0x34] sm:$0xf]
          %v3704 = vld [vmem:[%s20 + $0x38] sm:$0xf]
          %v3705 = vld [vmem:[%s20 + $0x3c] sm:$0xf]
          %v3706 = vld [vmem:[%s21] sm:$0x1]
          %v3708 = vperm.slane %v3706, 0
          %v3726 = vunpack.c.l.b16 %v3690
          %v3727 = vunpack.c.l.b16 %v3691
          %v3728 = vunpack.c.l.b16 %v3692
          %v3729 = vunpack.c.l.b16 %v3693
          %v3730 = vunpack.c.l.b16 %v3694
          %v3731 = vunpack.c.l.b16 %v3695
          %v3732 = vunpack.c.l.b16 %v3696
          %v3733 = vunpack.c.l.b16 %v3697
          %v3734 = vunpack.c.l.b16 %v3698
          %v3735 = vunpack.c.l.b16 %v3699
          %v3736 = vunpack.c.l.b16 %v3700
          %v3737 = vunpack.c.l.b16 %v3701
          %v3738 = vunpack.c.l.b16 %v3702
          %v3739 = vunpack.c.l.b16 %v3703
          %v3740 = vunpack.c.l.b16 %v3704
          %v3741 = vunpack.c.l.b16 %v3705
          %v3742 = vpack.c.b16 %v3727, %v3726
          %v3743 = vpack.c.b16 %v3729, %v3728
          %v3744 = vpack.c.b16 %v3731, %v3730
          %v3745 = vpack.c.b16 %v3733, %v3732
          %v3746 = vpack.c.b16 %v3735, %v3734
          %v3747 = vpack.c.b16 %v3737, %v3736
          %v3748 = vpack.c.b16 %v3739, %v3738
          %v3749 = vpack.c.b16 %v3741, %v3740
          %3758 = vmatpush.bf16.msra.mxu0 %v3749
          %3759 = vmatpush.bf16.msra.mxu0 %v3748
          %3760 = vmatpush.bf16.msra.mxu0 %v3747
          %3761 = vmatpush.bf16.msra.mxu0 %v3746
          %3762 = vmatpush.bf16.msra.mxu0 %v3745
          %3763 = vmatpush.bf16.msra.mxu0 %v3744
          %3764 = vmatpush.bf16.msra.mxu0 %v3743
          %3765 = vmatpush.bf16.msra.mxu0 %v3742
          %3766 = vmatmul.bf16.gmra.mxu0 %v3689
          %v3767 = vpop.f32.mrf.mxu0
          %v3768 = vadd.f32 %v3708, %v3767
          %v3769 = vpop.f32.mrf.mxu0
          %3770 = vdwg.mxu0
          %3771 = vst [vmem:[#allocation27] sm:$0xff] %v3768
        $region172: #{tpu_custom_call.1} parent=107 // pred_fallthru
          _
        // Predicated region
        $region173: #{tpu_custom_call.1} parent=107 // pred_check
          %p3772 = pneg %p587
        $region174: #{tpu_custom_call.1} parent=107 // pred_check_branch
          %3774 = sbr.rel (%p3772) target = $region176
        $region175: #{tpu_custom_call.1} parent=107 // pred_region
          %3776 = vsyncadd [#allocation6], 0
          %s3778 = sshll.u32 [#allocation27], 4
          %s3779 = int_to_ptr.vmem [resolvable:$true] %s3778
          %s3780 = sshll.u32 %s22, 4
          %s3781 = int_to_ptr.hbm [resolvable:$true] %s3780
          %3783 = dma.vmem_to_hbm [thread:$0]  %s3779, 128, %s3781, [#allocation6]
        $region176: #{tpu_custom_call.1} parent=107 // pred_fallthru
          _
        // Predicated region
        $region177: #{tpu_custom_call.1} parent=107 // pred_check
          %p3784 = pneg %p587
        $region178: #{tpu_custom_call.1} parent=107 // pred_check_branch
          %3786 = sbr.rel (%p3784) target = $region180
        $region179: #{tpu_custom_call.1} parent=107 // pred_region
          %3788 = dma.done [#allocation6], 128
        $region180: #{tpu_custom_call.1} parent=107 // pred_fallthru
          _
      $region108: #{tpu_custom_call.1} parent=5 // pred_fallthru
        _
      %p3789 = scmp.le.s32.totalorder 2, %s47
      // Predicated region
      $region181: #{tpu_custom_call.1} parent=5 // pred_check
        %p3790 = pneg %p3789
      $region182: #{tpu_custom_call.1} parent=5 // pred_check_branch
        %3792 = sbr.rel (%p3790) target = $region184
      $region183: #{tpu_custom_call.1} parent=5 // pred_region
        %s3793 = ssub.s32 %s47, 2
      $region184: #{tpu_custom_call.1} parent=5 // pred_fallthru
        _
    $region6: #{tpu_custom_call.1} parent=1 // loop_footer
      %s51 = sadd.s32 1, %s47
    $region7: #{tpu_custom_call.1} parent=1 // loop_footer_branch
      %46 = sbr.rel target = $region3
    $region8: #{tpu_custom_call.1} parent=1 // loop_exit
      _
    %3794 = vsyncpa [#allocation5], 1
    %s3795 = scalar_lea.sflag [#allocation5], 1
    %3796 = vsyncpa %s3795, 1
    %3797 = vsyncpa [#allocation8], 1
    %s3798 = scalar_lea.sflag [#allocation8], 1
    %3799 = vsyncpa %s3798, 1
    %3800 = vsyncpa [#allocation11], 1
    %s3801 = scalar_lea.sflag [#allocation11], 1
    %3802 = vsyncpa %s3801, 1
    %3803 = vsyncpa [#allocation14], 1
    %s3804 = scalar_lea.sflag [#allocation14], 1
    %3805 = vsyncpa %s3804, 1
    %3806 = vsyncpa [#allocation17], 1
    %s3807 = scalar_lea.sflag [#allocation17], 1
    %3808 = vsyncpa %s3807, 1
    %3809 = vsyncpa [#allocation20], 1
    %s3810 = scalar_lea.sflag [#allocation20], 1
    %3811 = vsyncpa %s3810, 1
    %3812 = vsyncpa [#allocation23], 1
    %3813 = vsyncpa [#allocation26], 1
    %3814 = vsyncpa [#allocation6], 1
    %s3815 = scalar_lea.sflag [#allocation6], 1
    %3816 = vsyncpa %s3815, 1

</llo_original>
